<compile_context>
chip_gen: v6e
topology: v6e:2x2x1
jax: 0.10.0
libtpu: 0.0.40
codegen_flags: <defaults>
</compile_context>

<pallas_src>
import jax
import jax.numpy as jnp
from jax.experimental import pallas as pl
from jax.experimental.pallas import tpu as pltpu


# ----------------------------------------------------------------------------
# Fused encoder kernel: all L transformer blocks for one batch element.
# ----------------------------------------------------------------------------
def make_encoder_kernel(L, S, E, H, F):
    hd = E // H
    inv_sqrt_e = 1.0 / (float(E) ** 0.5)   # reference scales by sqrt(embed_size)

    def layernorm(y, g, b):
        mu = jnp.mean(y, axis=-1, keepdims=True)
        var = jnp.mean((y - mu) ** 2, axis=-1, keepdims=True)
        return (y - mu) * jax.lax.rsqrt(var + 1e-5) * g + b

    def kernel(x_ref, mask_ref,
               wqkv_ref,   # (L, H, E, 3*hd)  per-head select + fused QKV projection
               wo_ref,     # (L, H, hd, E)    fc_out folded per head
               wf1_ref,    # (L, E, F)        wf1.T
               wf2_ref,    # (L, F, E)        wf2.T
               bf1_ref,    # (L, 1, F)
               vec_ref,    # (L, 6, E): rows = [bo, g1, b1, bf2, g2, b2]
               out_ref):
        x = x_ref[0]                                     # (S, E)
        masked = (mask_ref[0] == 0)[None, :, :]          # (1, S, S), hoisted

        for l in range(L):                               # static unroll: fused layers
            wqkv = wqkv_ref[l]                           # (H, E, 3*hd)
            wo_h = wo_ref[l]                             # (H, hd, E)
            wf1_t = wf1_ref[l]                           # (E, F)
            wf2_t = wf2_ref[l]                           # (F, E)
            bf1 = bf1_ref[l]                             # (1, F)
            vec = vec_ref[l]                             # (6, E)
            bo, g1, b1 = vec[0:1], vec[1:2], vec[2:3]
            bf2, g2, b2 = vec[3:4], vec[4:5], vec[5:6]

            # --- self-attention, head-batched (leading batch dim = H) ---
            xb = jnp.broadcast_to(x[None, :, :], (H, S, E))
            qkv = jnp.einsum('hse,hef->hsf', xb, wqkv,
                             preferred_element_type=jnp.float32)      # (H, S, 3*hd)
            q = qkv[:, :, 0:hd]
            k = qkv[:, :, hd:2 * hd]
            v = qkv[:, :, 2 * hd:3 * hd]

            scores = jnp.einsum('hqd,hkd->hqk', q, k,
                                preferred_element_type=jnp.float32)   # (H, S, S)
            scores = jnp.where(masked, jnp.float32(-1e20), scores)    # masked_fill
            scores = scores * inv_sqrt_e
            scores = scores - jnp.max(scores, axis=-1, keepdims=True) # stable softmax
            p = jnp.exp(scores)
            a = p * pl.reciprocal(jnp.sum(p, axis=-1, keepdims=True), approx=True)

            ctx = jnp.einsum('hqk,hkd->hqd', a, v,
                             preferred_element_type=jnp.float32)      # (H, S, hd)
            attn = jnp.sum(jnp.einsum('hqd,hde->hqe', ctx, wo_h,
                                      preferred_element_type=jnp.float32),
                           axis=0) + bo                               # (S, E)

            # --- residual + LN1, feed-forward, residual + LN2 ---
            x1 = layernorm(attn + x, g1, b1)
            h1 = jnp.maximum(
                jnp.dot(x1, wf1_t, preferred_element_type=jnp.float32) + bf1, 0.0)
            ff = jnp.dot(h1, wf2_t, preferred_element_type=jnp.float32) + bf2
            x = layernorm(ff + x1, g2, b2)

        out_ref[0] = x

    return kernel


# ----------------------------------------------------------------------------
# Host-side weight packing (one-time transposes / stacking over layers).
# ----------------------------------------------------------------------------
def pack_encoder_params(layers, E, H):
    hd = E // H

    def per_layer(p):
        # Fused Q/K/V weight folded with per-head input selection:
        #   qkv[h, s, :] = x[s, h*hd:(h+1)*hd] @ [wq.T | wk.T | wv.T]
        blocks = jnp.concatenate([p['wq'].T, p['wk'].T, p['wv'].T], axis=1)  # (hd, 3hd)
        wqkv = jnp.zeros((H, E, 3 * hd), jnp.float32)
        for h in range(H):
            wqkv = wqkv.at[h, h * hd:(h + 1) * hd, :].set(blocks)
        # fc_out folded per head: sum_h ctx[h] @ wo_h[h]  ==  concat_h(ctx) @ wo.T
        wo_h = p['wo'].reshape(E, H, hd).transpose(1, 2, 0)                  # (H, hd, E)
        vecs = jnp.stack([p['bo'].reshape(-1), p['g1'].reshape(-1),
                          p['b1'].reshape(-1), p['bf2'].reshape(-1),
                          p['g2'].reshape(-1), p['b2'].reshape(-1)], axis=0)  # (6, E)
        return (wqkv, wo_h, p['wf1'].T, p['wf2'].T, p['bf1'].reshape(1, -1), vecs)

    parts = [per_layer(p) for p in layers]
    stack = lambda i: jnp.stack([pt[i] for pt in parts], axis=0)
    return dict(wqkv=stack(0), wo_h=stack(1), wf1_t=stack(2),
                wf2_t=stack(3), bf1=stack(4), vecs=stack(5))


def encoder_pallas(x, mask, w, H):
    N, S, E = x.shape
    L = w['wqkv'].shape[0]
    hd = E // H
    F = w['wf1_t'].shape[-1]
    kernel = make_encoder_kernel(L, S, E, H, F)

    def full_block(shape):
        return pl.BlockSpec(shape, lambda n, _r=len(shape): (0,) * _r)

    return pl.pallas_call(
        kernel,
        out_shape=jax.ShapeDtypeStruct((N, S, E), jnp.float32),
        grid=(N,),
        in_specs=[
            pl.BlockSpec((1, S, E), lambda n: (n, 0, 0)),     # x
            pl.BlockSpec((1, S, S), lambda n: (n, 0, 0)),     # mask
            full_block((L, H, E, 3 * hd)),                    # fused per-head QKV
            full_block((L, H, hd, E)),                        # fc_out per head
            full_block((L, E, F)),                            # wf1.T
            full_block((L, F, E)),                            # wf2.T
            full_block((L, 1, F)),                            # bf1
            full_block((L, 6, E)),                            # packed small vectors
        ],
        out_specs=pl.BlockSpec((1, S, E), lambda n: (n, 0, 0)),
        compiler_params=pltpu.CompilerParams(dimension_semantics=("parallel",)),
    )(x, mask, w['wqkv'], w['wo_h'], w['wf1_t'], w['wf2_t'], w['bf1'], w['vecs'])


# ----------------------------------------------------------------------------
# Encoder wrapper (embedding gather is data-dependent JAX glue).
# ----------------------------------------------------------------------------
def encoder_forward(tokens, mask, enc_params, heads):
    N, S = tokens.shape
    E = enc_params['word_embedding'].shape[1]
    # TODO(synk): token-embedding gather is data-dependent; kept as plain-JAX
    # glue (would need scalar-prefetch DMA gather to fuse into the kernel).
    x = enc_params['word_embedding'][tokens] + \
        enc_params['position_encoding'][jnp.arange(S)][None, :, :]
    # dropout: identity in eval mode
    stacked = pack_encoder_params(enc_params['layers'], E, heads)
    return encoder_pallas(x, mask, stacked, heads)


# ----------------------------------------------------------------------------
# Pure-JAX reference (same math) for a correctness check.
# ----------------------------------------------------------------------------
def _ln_ref(y, g, b):
    mu = jnp.mean(y, axis=-1, keepdims=True)
    var = jnp.mean((y - mu) ** 2, axis=-1, keepdims=True)
    return (y - mu) * jax.lax.rsqrt(var + 1e-5) * g + b


def block_reference(x, mask, p, H):
    N, S, E = x.shape
    hd = E // H
    xh = x.reshape(N, S, H, hd)
    q = jnp.einsum('nshd,kd->nshk', xh, p['wq'])
    k = jnp.einsum('nshd,kd->nshk', xh, p['wk'])
    v = jnp.einsum('nshd,kd->nshk', xh, p['wv'])
    energy = jnp.einsum('nqhd,nkhd->nhqk', q, k)
    energy = jnp.where(mask[:, None, :, :] == 0, -1e20, energy)
    energy = energy / (E ** 0.5)
    energy = energy - jnp.max(energy, axis=-1, keepdims=True)
    pexp = jnp.exp(energy)
    attn = pexp / jnp.sum(pexp, axis=-1, keepdims=True)
    ctx = jnp.einsum('nhqk,nkhd->nqhd', attn, v).reshape(N, S, E)
    attn_out = ctx @ p['wo'].T + p['bo'][0]
    x1 = _ln_ref(attn_out + x, p['g1'][0], p['b1'][0])
    h1 = jnp.maximum(x1 @ p['wf1'].T + p['bf1'][0], 0.0)
    ff = h1 @ p['wf2'].T + p['bf2'][0]
    return _ln_ref(ff + x1, p['g2'][0], p['b2'][0])


def encoder_reference(tokens, mask, enc_params, heads):
    N, S = tokens.shape
    out = enc_params['word_embedding'][tokens] + \
          enc_params['position_encoding'][jnp.arange(S)][None, :, :]
    for layer_params in enc_params['layers']:
        out = block_reference(out, mask, layer_params, heads)
    return out


# ----------------------------------------------------------------------------
# Deterministic parameter construction.
# ----------------------------------------------------------------------------
def init_layer_params(key, E, H, F):
    hd = E // H
    ks = jax.random.split(key, 8)
    s = 0.05
    return dict(
        wq=jax.random.normal(ks[0], (hd, hd), jnp.float32) * s,
        wk=jax.random.normal(ks[1], (hd, hd), jnp.float32) * s,
        wv=jax.random.normal(ks[2], (hd, hd), jnp.float32) * s,
        wo=jax.random.normal(ks[3], (E, E), jnp.float32) * s,
        bo=jax.random.normal(ks[4], (1, E), jnp.float32) * s,
        g1=jnp.ones((1, E), jnp.float32),
        b1=jnp.zeros((1, E), jnp.float32),
        wf1=jax.random.normal(ks[5], (F, E), jnp.float32) * s,
        bf1=jax.random.normal(ks[6], (1, F), jnp.float32) * s,
        wf2=jax.random.normal(ks[7], (E, F), jnp.float32) * s,
        bf2=jnp.zeros((1, E), jnp.float32),
        g2=jnp.ones((1, E), jnp.float32),
        b2=jnp.zeros((1, E), jnp.float32),
    )


if __name__ == "__main__":
    # Encoder hyperparameters (small, consistent with the module's __init__).
    src_vocab_size = 50
    embed_size = 32
    num_layers = 2
    heads = 4
    forward_expansion = 4
    max_length = 16
    N, S = 2, 8
    F = forward_expansion * embed_size

    key = jax.random.PRNGKey(0)
    k_tok, k_we, k_pe, *k_layers = jax.random.split(key, 3 + num_layers)

    tokens = jax.random.randint(k_tok, (N, S), 0, src_vocab_size)
    enc_params = dict(
        word_embedding=jax.random.normal(k_we, (src_vocab_size, embed_size),
                                         jnp.float32) * 0.1,
        position_encoding=jax.random.normal(k_pe, (max_length, embed_size),
                                            jnp.float32) * 0.1,
        layers=[init_layer_params(k, embed_size, heads, F) for k in k_layers],
    )

    # Causal mask, shared over batch: (N, S, S), int32, 0 => masked.
    causal = (jnp.arange(S)[None, :] <= jnp.arange(S)[:, None]).astype(jnp.int32)
    mask = jnp.broadcast_to(causal, (N, S, S))

    out = encoder_forward(tokens, mask, enc_params, heads)
    out = jax.block_until_ready(out)

    ref = encoder_reference(tokens, mask, enc_params, heads)
    assert out.shape == (N, S, embed_size)
    # Tolerance loosened slightly vs. 1e-4 because softmax uses the EUP
    # approximate reciprocal (pl.reciprocal(approx=True)).
    assert jnp.allclose(out, ref, atol=2e-3, rtol=2e-3), "Pallas vs JAX reference mismatch"

    print("KERNEL_OK")
</pallas_src>

<mosaic_0001>
module attributes {stable_mosaic.version = 11 : i64} {
  func.func @kernel(%arg0: i32, %arg1: memref<1x8x32xf32, #tpu.memory_space<vmem>>, %arg2: memref<1x8x8xi32, #tpu.memory_space<vmem>>, %arg3: memref<2x4x32x24xf32, #tpu.memory_space<vmem>>, %arg4: memref<2x4x8x32xf32, #tpu.memory_space<vmem>>, %arg5: memref<2x32x128xf32, #tpu.memory_space<vmem>>, %arg6: memref<2x128x32xf32, #tpu.memory_space<vmem>>, %arg7: memref<2x1x128xf32, #tpu.memory_space<vmem>>, %arg8: memref<2x6x32xf32, #tpu.memory_space<vmem>>, %arg9: memref<1x8x32xf32, #tpu.memory_space<vmem>>) attributes {dimension_semantics = [#tpu.dimension_semantics<parallel>], iteration_bounds = array<i64: 2>, scalar_prefetch = 0 : i64, scratch_operands = 0 : i64, tpu.core_type = #tpu.core_type<tc>, window_params = [{transform_indices = @transform_0, window_bounds = array<i64: 1, 8, 32>}, {transform_indices = @transform_1, window_bounds = array<i64: 1, 8, 8>}, {pipeline_mode = #tpu.pipeline_mode<synchronous>, transform_indices = @transform_2, window_bounds = array<i64: 2, 4, 32, 24>}, {pipeline_mode = #tpu.pipeline_mode<synchronous>, transform_indices = @transform_3, window_bounds = array<i64: 2, 4, 8, 32>}, {pipeline_mode = #tpu.pipeline_mode<synchronous>, transform_indices = @transform_4, window_bounds = array<i64: 2, 32, 128>}, {pipeline_mode = #tpu.pipeline_mode<synchronous>, transform_indices = @transform_5, window_bounds = array<i64: 2, 128, 32>}, {pipeline_mode = #tpu.pipeline_mode<synchronous>, transform_indices = @transform_6, window_bounds = array<i64: 2, 1, 128>}, {pipeline_mode = #tpu.pipeline_mode<synchronous>, transform_indices = @transform_7, window_bounds = array<i64: 2, 6, 32>}, {transform_indices = @transform_8, window_bounds = array<i64: 1, 8, 32>}]} {
    %c0 = arith.constant 0 : index
    %c0_0 = arith.constant 0 : index
    %c0_1 = arith.constant 0 : index
    %0 = vector.load %arg1[%c0, %c0_0, %c0_1] : memref<1x8x32xf32, #tpu.memory_space<vmem>>, vector<1x8x32xf32>
    %1 = vector.shape_cast %0 : vector<1x8x32xf32> to vector<8x32xf32>
    %c0_2 = arith.constant 0 : index
    %c0_3 = arith.constant 0 : index
    %c0_4 = arith.constant 0 : index
    %2 = vector.load %arg2[%c0_2, %c0_3, %c0_4] : memref<1x8x8xi32, #tpu.memory_space<vmem>>, vector<1x8x8xi32>
    %3 = vector.shape_cast %2 : vector<1x8x8xi32> to vector<8x8xi32>
    %c0_i32 = arith.constant 0 : i32
    %4 = vector.broadcast %c0_i32 : i32 to vector<8x8xi32>
    %5 = arith.cmpi eq, %3, %4 : vector<8x8xi32>
    %6 = vector.shape_cast %5 : vector<8x8xi1> to vector<1x8x8xi1>
    %c0_5 = arith.constant 0 : index
    %c0_6 = arith.constant 0 : index
    %c0_7 = arith.constant 0 : index
    %c0_8 = arith.constant 0 : index
    %7 = vector.load %arg3[%c0_5, %c0_6, %c0_7, %c0_8] : memref<2x4x32x24xf32, #tpu.memory_space<vmem>>, vector<1x4x32x24xf32>
    %8 = vector.shape_cast %7 : vector<1x4x32x24xf32> to vector<4x32x24xf32>
    %c0_9 = arith.constant 0 : index
    %c0_10 = arith.constant 0 : index
    %c0_11 = arith.constant 0 : index
    %c0_12 = arith.constant 0 : index
    %9 = vector.load %arg4[%c0_9, %c0_10, %c0_11, %c0_12] : memref<2x4x8x32xf32, #tpu.memory_space<vmem>>, vector<1x4x8x32xf32>
    %10 = vector.shape_cast %9 : vector<1x4x8x32xf32> to vector<4x8x32xf32>
    %c0_13 = arith.constant 0 : index
    %c0_14 = arith.constant 0 : index
    %c0_15 = arith.constant 0 : index
    %11 = vector.load %arg5[%c0_13, %c0_14, %c0_15] : memref<2x32x128xf32, #tpu.memory_space<vmem>>, vector<1x32x128xf32>
    %12 = vector.shape_cast %11 : vector<1x32x128xf32> to vector<32x128xf32>
    %c0_16 = arith.constant 0 : index
    %c0_17 = arith.constant 0 : index
    %c0_18 = arith.constant 0 : index
    %13 = vector.load %arg6[%c0_16, %c0_17, %c0_18] : memref<2x128x32xf32, #tpu.memory_space<vmem>>, vector<1x128x32xf32>
    %14 = vector.shape_cast %13 : vector<1x128x32xf32> to vector<128x32xf32>
    %c0_19 = arith.constant 0 : index
    %c0_20 = arith.constant 0 : index
    %c0_21 = arith.constant 0 : index
    %15 = vector.load %arg7[%c0_19, %c0_20, %c0_21] : memref<2x1x128xf32, #tpu.memory_space<vmem>>, vector<1x1x128xf32>
    %16 = vector.shape_cast %15 : vector<1x1x128xf32> to vector<1x128xf32>
    %c0_22 = arith.constant 0 : index
    %c0_23 = arith.constant 0 : index
    %c0_24 = arith.constant 0 : index
    %17 = vector.load %arg8[%c0_22, %c0_23, %c0_24] : memref<2x6x32xf32, #tpu.memory_space<vmem>>, vector<1x6x32xf32>
    %18 = vector.shape_cast %17 : vector<1x6x32xf32> to vector<6x32xf32>
    %19 = vector.extract_strided_slice %18 {offsets = [0, 0], sizes = [1, 32], strides = [1, 1]} : vector<6x32xf32> to vector<1x32xf32>
    %20 = vector.extract_strided_slice %18 {offsets = [1, 0], sizes = [1, 32], strides = [1, 1]} : vector<6x32xf32> to vector<1x32xf32>
    %21 = vector.extract_strided_slice %18 {offsets = [2, 0], sizes = [1, 32], strides = [1, 1]} : vector<6x32xf32> to vector<1x32xf32>
    %22 = vector.extract_strided_slice %18 {offsets = [3, 0], sizes = [1, 32], strides = [1, 1]} : vector<6x32xf32> to vector<1x32xf32>
    %23 = vector.extract_strided_slice %18 {offsets = [4, 0], sizes = [1, 32], strides = [1, 1]} : vector<6x32xf32> to vector<1x32xf32>
    %24 = vector.extract_strided_slice %18 {offsets = [5, 0], sizes = [1, 32], strides = [1, 1]} : vector<6x32xf32> to vector<1x32xf32>
    %25 = vector.shape_cast %1 : vector<8x32xf32> to vector<1x8x32xf32>
    %26 = vector.shape_cast %25 : vector<1x8x32xf32> to vector<1x8x32xf32>
    %27 = vector.broadcast %26 : vector<1x8x32xf32> to vector<4x8x32xf32>
    "tpu.trace_start"() <{level = 10 : i32, message = "hse,hef->hsf"}> : () -> ()
    %cst = arith.constant dense<0.000000e+00> : vector<4x8x24xf32>
    %28 = tpu.matmul %27, %8, %cst {dimension_numbers = #tpu.dot_dimension_numbers<[2], [1], [1], [2], [0, 0, 0, 1, 1, 2], [0], [0]>} : vector<4x8x32xf32>, vector<4x32x24xf32>, vector<4x8x24xf32> -> vector<4x8x24xf32>
    "tpu.trace_stop"() : () -> ()
    %29 = vector.extract_strided_slice %28 {offsets = [0, 0, 0], sizes = [4, 8, 8], strides = [1, 1, 1]} : vector<4x8x24xf32> to vector<4x8x8xf32>
    %30 = vector.extract_strided_slice %28 {offsets = [0, 0, 8], sizes = [4, 8, 8], strides = [1, 1, 1]} : vector<4x8x24xf32> to vector<4x8x8xf32>
    %31 = vector.extract_strided_slice %28 {offsets = [0, 0, 16], sizes = [4, 8, 8], strides = [1, 1, 1]} : vector<4x8x24xf32> to vector<4x8x8xf32>
    "tpu.trace_start"() <{level = 10 : i32, message = "hqd,hkd->hqk"}> : () -> ()
    %cst_25 = arith.constant dense<0.000000e+00> : vector<4x8x8xf32>
    %32 = tpu.matmul %29, %30, %cst_25 {dimension_numbers = #tpu.dot_dimension_numbers<[2], [2], [1], [1], [0, 0, 0, 1, 1, 1], [0], [0]>} : vector<4x8x8xf32>, vector<4x8x8xf32>, vector<4x8x8xf32> -> vector<4x8x8xf32>
    %cst_26 = arith.constant -1.000000e+20 : f32
    "tpu.trace_stop"() : () -> ()
    %33 = vector.shape_cast %6 : vector<1x8x8xi1> to vector<1x8x8xi1>
    %34 = vector.broadcast %33 : vector<1x8x8xi1> to vector<4x8x8xi1>
    %35 = vector.broadcast %cst_26 : f32 to vector<4x8x8xf32>
    %36 = arith.select %34, %35, %32 : vector<4x8x8xi1>, vector<4x8x8xf32>
    %cst_27 = arith.constant 0.176776692 : f32
    %37 = vector.broadcast %cst_27 : f32 to vector<4x8x8xf32>
    %38 = arith.mulf %36, %37 : vector<4x8x8xf32>
    %cst_28 = arith.constant dense<0xFF800000> : vector<4x8xf32>
    %39 = vector.multi_reduction <maximumf>, %38, %cst_28 [2] : vector<4x8x8xf32> to vector<4x8xf32>
    %40 = vector.shape_cast %39 : vector<4x8xf32> to vector<4x8x1xf32>
    %41 = vector.broadcast %40 : vector<4x8x1xf32> to vector<4x8x8xf32>
    %42 = arith.subf %38, %41 : vector<4x8x8xf32>
    %43 = math.exp %42 : vector<4x8x8xf32>
    %cst_29 = arith.constant dense<0.000000e+00> : vector<4x8xf32>
    %44 = vector.multi_reduction <add>, %43, %cst_29 [2] : vector<4x8x8xf32> to vector<4x8xf32>
    %45 = vector.shape_cast %44 : vector<4x8xf32> to vector<4x8x1xf32>
    %46 = tpu.reciprocal %45 {approx = true} : vector<4x8x1xf32> -> vector<4x8x1xf32>
    %47 = vector.broadcast %46 : vector<4x8x1xf32> to vector<4x8x8xf32>
    %48 = arith.mulf %43, %47 : vector<4x8x8xf32>
    "tpu.trace_start"() <{level = 10 : i32, message = "hqk,hkd->hqd"}> : () -> ()
    %cst_30 = arith.constant dense<0.000000e+00> : vector<4x8x8xf32>
    %49 = tpu.matmul %48, %31, %cst_30 {dimension_numbers = #tpu.dot_dimension_numbers<[2], [1], [1], [2], [0, 0, 0, 1, 1, 2], [0], [0]>} : vector<4x8x8xf32>, vector<4x8x8xf32>, vector<4x8x8xf32> -> vector<4x8x8xf32>
    "tpu.trace_stop"() : () -> ()
    "tpu.trace_start"() <{level = 10 : i32, message = "hqd,hde->hqe"}> : () -> ()
    %cst_31 = arith.constant dense<0.000000e+00> : vector<4x8x32xf32>
    %50 = tpu.matmul %49, %10, %cst_31 {dimension_numbers = #tpu.dot_dimension_numbers<[2], [1], [1], [2], [0, 0, 0, 1, 1, 2], [0], [0]>} : vector<4x8x8xf32>, vector<4x8x32xf32>, vector<4x8x32xf32> -> vector<4x8x32xf32>
    "tpu.trace_stop"() : () -> ()
    %cst_32 = arith.constant dense<0.000000e+00> : vector<8x32xf32>
    %51 = vector.multi_reduction <add>, %50, %cst_32 [0] : vector<4x8x32xf32> to vector<8x32xf32>
    %52 = vector.broadcast %19 : vector<1x32xf32> to vector<8x32xf32>
    %53 = arith.addf %51, %52 : vector<8x32xf32>
    %54 = arith.addf %53, %1 : vector<8x32xf32>
    %cst_33 = arith.constant dense<0.000000e+00> : vector<8xf32>
    %55 = vector.multi_reduction <add>, %54, %cst_33 [1] : vector<8x32xf32> to vector<8xf32>
    %56 = vector.shape_cast %55 : vector<8xf32> to vector<8x1xf32>
    %cst_34 = arith.constant 3.200000e+01 : f32
    %57 = vector.broadcast %cst_34 : f32 to vector<8x1xf32>
    %58 = arith.divf %56, %57 : vector<8x1xf32>
    %59 = vector.broadcast %58 : vector<8x1xf32> to vector<8x32xf32>
    %60 = arith.subf %54, %59 : vector<8x32xf32>
    %61 = arith.mulf %60, %60 : vector<8x32xf32>
    %cst_35 = arith.constant dense<0.000000e+00> : vector<8xf32>
    %62 = vector.multi_reduction <add>, %61, %cst_35 [1] : vector<8x32xf32> to vector<8xf32>
    %63 = vector.shape_cast %62 : vector<8xf32> to vector<8x1xf32>
    %cst_36 = arith.constant 3.200000e+01 : f32
    %64 = vector.broadcast %cst_36 : f32 to vector<8x1xf32>
    %65 = arith.divf %63, %64 : vector<8x1xf32>
    %66 = vector.broadcast %58 : vector<8x1xf32> to vector<8x32xf32>
    %67 = arith.subf %54, %66 : vector<8x32xf32>
    %cst_37 = arith.constant 9.99999974E-6 : f32
    %68 = vector.broadcast %cst_37 : f32 to vector<8x1xf32>
    %69 = arith.addf %65, %68 : vector<8x1xf32>
    %70 = math.rsqrt %69 : vector<8x1xf32>
    %71 = vector.broadcast %70 : vector<8x1xf32> to vector<8x32xf32>
    %72 = arith.mulf %67, %71 : vector<8x32xf32>
    %73 = vector.broadcast %20 : vector<1x32xf32> to vector<8x32xf32>
    %74 = arith.mulf %72, %73 : vector<8x32xf32>
    %75 = vector.broadcast %21 : vector<1x32xf32> to vector<8x32xf32>
    %76 = arith.addf %74, %75 : vector<8x32xf32>
    %cst_38 = arith.constant dense<0.000000e+00> : vector<8x128xf32>
    %77 = tpu.matmul %76, %12, %cst_38 {dimension_numbers = #tpu.dot_dimension_numbers<[1], [0], [0], [1], [0, 0, 1, 1], [], []>} : vector<8x32xf32>, vector<32x128xf32>, vector<8x128xf32> -> vector<8x128xf32>
    %78 = vector.broadcast %16 : vector<1x128xf32> to vector<8x128xf32>
    %79 = arith.addf %77, %78 : vector<8x128xf32>
    %cst_39 = arith.constant 0.000000e+00 : f32
    %80 = vector.broadcast %cst_39 : f32 to vector<8x128xf32>
    %81 = arith.maximumf %79, %80 : vector<8x128xf32>
    %cst_40 = arith.constant dense<0.000000e+00> : vector<8x32xf32>
    %82 = tpu.matmul %81, %14, %cst_40 {dimension_numbers = #tpu.dot_dimension_numbers<[1], [0], [0], [1], [0, 0, 1, 1], [], []>} : vector<8x128xf32>, vector<128x32xf32>, vector<8x32xf32> -> vector<8x32xf32>
    %83 = vector.broadcast %22 : vector<1x32xf32> to vector<8x32xf32>
    %84 = arith.addf %82, %83 : vector<8x32xf32>
    %85 = arith.addf %84, %76 : vector<8x32xf32>
    %cst_41 = arith.constant dense<0.000000e+00> : vector<8xf32>
    %86 = vector.multi_reduction <add>, %85, %cst_41 [1] : vector<8x32xf32> to vector<8xf32>
    %87 = vector.shape_cast %86 : vector<8xf32> to vector<8x1xf32>
    %cst_42 = arith.constant 3.200000e+01 : f32
    %88 = vector.broadcast %cst_42 : f32 to vector<8x1xf32>
    %89 = arith.divf %87, %88 : vector<8x1xf32>
    %90 = vector.broadcast %89 : vector<8x1xf32> to vector<8x32xf32>
    %91 = arith.subf %85, %90 : vector<8x32xf32>
    %92 = arith.mulf %91, %91 : vector<8x32xf32>
    %cst_43 = arith.constant dense<0.000000e+00> : vector<8xf32>
    %93 = vector.multi_reduction <add>, %92, %cst_43 [1] : vector<8x32xf32> to vector<8xf32>
    %94 = vector.shape_cast %93 : vector<8xf32> to vector<8x1xf32>
    %cst_44 = arith.constant 3.200000e+01 : f32
    %95 = vector.broadcast %cst_44 : f32 to vector<8x1xf32>
    %96 = arith.divf %94, %95 : vector<8x1xf32>
    %97 = vector.broadcast %89 : vector<8x1xf32> to vector<8x32xf32>
    %98 = arith.subf %85, %97 : vector<8x32xf32>
    %cst_45 = arith.constant 9.99999974E-6 : f32
    %99 = vector.broadcast %cst_45 : f32 to vector<8x1xf32>
    %100 = arith.addf %96, %99 : vector<8x1xf32>
    %101 = math.rsqrt %100 : vector<8x1xf32>
    %102 = vector.broadcast %101 : vector<8x1xf32> to vector<8x32xf32>
    %103 = arith.mulf %98, %102 : vector<8x32xf32>
    %104 = vector.broadcast %23 : vector<1x32xf32> to vector<8x32xf32>
    %105 = arith.mulf %103, %104 : vector<8x32xf32>
    %106 = vector.broadcast %24 : vector<1x32xf32> to vector<8x32xf32>
    %107 = arith.addf %105, %106 : vector<8x32xf32>
    %c1 = arith.constant 1 : index
    %c0_46 = arith.constant 0 : index
    %c0_47 = arith.constant 0 : index
    %c0_48 = arith.constant 0 : index
    %108 = vector.load %arg3[%c1, %c0_46, %c0_47, %c0_48] : memref<2x4x32x24xf32, #tpu.memory_space<vmem>>, vector<1x4x32x24xf32>
    %109 = vector.shape_cast %108 : vector<1x4x32x24xf32> to vector<4x32x24xf32>
    %c1_49 = arith.constant 1 : index
    %c0_50 = arith.constant 0 : index
    %c0_51 = arith.constant 0 : index
    %c0_52 = arith.constant 0 : index
    %110 = vector.load %arg4[%c1_49, %c0_50, %c0_51, %c0_52] : memref<2x4x8x32xf32, #tpu.memory_space<vmem>>, vector<1x4x8x32xf32>
    %111 = vector.shape_cast %110 : vector<1x4x8x32xf32> to vector<4x8x32xf32>
    %c1_53 = arith.constant 1 : index
    %c0_54 = arith.constant 0 : index
    %c0_55 = arith.constant 0 : index
    %112 = vector.load %arg5[%c1_53, %c0_54, %c0_55] : memref<2x32x128xf32, #tpu.memory_space<vmem>>, vector<1x32x128xf32>
    %113 = vector.shape_cast %112 : vector<1x32x128xf32> to vector<32x128xf32>
    %c1_56 = arith.constant 1 : index
    %c0_57 = arith.constant 0 : index
    %c0_58 = arith.constant 0 : index
    %114 = vector.load %arg6[%c1_56, %c0_57, %c0_58] : memref<2x128x32xf32, #tpu.memory_space<vmem>>, vector<1x128x32xf32>
    %115 = vector.shape_cast %114 : vector<1x128x32xf32> to vector<128x32xf32>
    %c1_59 = arith.constant 1 : index
    %c0_60 = arith.constant 0 : index
    %c0_61 = arith.constant 0 : index
    %116 = vector.load %arg7[%c1_59, %c0_60, %c0_61] : memref<2x1x128xf32, #tpu.memory_space<vmem>>, vector<1x1x128xf32>
    %117 = vector.shape_cast %116 : vector<1x1x128xf32> to vector<1x128xf32>
    %c1_62 = arith.constant 1 : index
    %c0_63 = arith.constant 0 : index
    %c0_64 = arith.constant 0 : index
    %118 = vector.load %arg8[%c1_62, %c0_63, %c0_64] : memref<2x6x32xf32, #tpu.memory_space<vmem>>, vector<1x6x32xf32>
    %119 = vector.shape_cast %118 : vector<1x6x32xf32> to vector<6x32xf32>
    %120 = vector.extract_strided_slice %119 {offsets = [0, 0], sizes = [1, 32], strides = [1, 1]} : vector<6x32xf32> to vector<1x32xf32>
    %121 = vector.extract_strided_slice %119 {offsets = [1, 0], sizes = [1, 32], strides = [1, 1]} : vector<6x32xf32> to vector<1x32xf32>
    %122 = vector.extract_strided_slice %119 {offsets = [2, 0], sizes = [1, 32], strides = [1, 1]} : vector<6x32xf32> to vector<1x32xf32>
    %123 = vector.extract_strided_slice %119 {offsets = [3, 0], sizes = [1, 32], strides = [1, 1]} : vector<6x32xf32> to vector<1x32xf32>
    %124 = vector.extract_strided_slice %119 {offsets = [4, 0], sizes = [1, 32], strides = [1, 1]} : vector<6x32xf32> to vector<1x32xf32>
    %125 = vector.extract_strided_slice %119 {offsets = [5, 0], sizes = [1, 32], strides = [1, 1]} : vector<6x32xf32> to vector<1x32xf32>
    %126 = vector.shape_cast %107 : vector<8x32xf32> to vector<1x8x32xf32>
    %127 = vector.shape_cast %126 : vector<1x8x32xf32> to vector<1x8x32xf32>
    %128 = vector.broadcast %127 : vector<1x8x32xf32> to vector<4x8x32xf32>
    "tpu.trace_start"() <{level = 10 : i32, message = "hse,hef->hsf"}> : () -> ()
    %cst_65 = arith.constant dense<0.000000e+00> : vector<4x8x24xf32>
    %129 = tpu.matmul %128, %109, %cst_65 {dimension_numbers = #tpu.dot_dimension_numbers<[2], [1], [1], [2], [0, 0, 0, 1, 1, 2], [0], [0]>} : vector<4x8x32xf32>, vector<4x32x24xf32>, vector<4x8x24xf32> -> vector<4x8x24xf32>
    "tpu.trace_stop"() : () -> ()
    %130 = vector.extract_strided_slice %129 {offsets = [0, 0, 0], sizes = [4, 8, 8], strides = [1, 1, 1]} : vector<4x8x24xf32> to vector<4x8x8xf32>
    %131 = vector.extract_strided_slice %129 {offsets = [0, 0, 8], sizes = [4, 8, 8], strides = [1, 1, 1]} : vector<4x8x24xf32> to vector<4x8x8xf32>
    %132 = vector.extract_strided_slice %129 {offsets = [0, 0, 16], sizes = [4, 8, 8], strides = [1, 1, 1]} : vector<4x8x24xf32> to vector<4x8x8xf32>
    "tpu.trace_start"() <{level = 10 : i32, message = "hqd,hkd->hqk"}> : () -> ()
    %cst_66 = arith.constant dense<0.000000e+00> : vector<4x8x8xf32>
    %133 = tpu.matmul %130, %131, %cst_66 {dimension_numbers = #tpu.dot_dimension_numbers<[2], [2], [1], [1], [0, 0, 0, 1, 1, 1], [0], [0]>} : vector<4x8x8xf32>, vector<4x8x8xf32>, vector<4x8x8xf32> -> vector<4x8x8xf32>
    %cst_67 = arith.constant -1.000000e+20 : f32
    "tpu.trace_stop"() : () -> ()
    %134 = vector.shape_cast %6 : vector<1x8x8xi1> to vector<1x8x8xi1>
    %135 = vector.broadcast %134 : vector<1x8x8xi1> to vector<4x8x8xi1>
    %136 = vector.broadcast %cst_67 : f32 to vector<4x8x8xf32>
    %137 = arith.select %135, %136, %133 : vector<4x8x8xi1>, vector<4x8x8xf32>
    %cst_68 = arith.constant 0.176776692 : f32
    %138 = vector.broadcast %cst_68 : f32 to vector<4x8x8xf32>
    %139 = arith.mulf %137, %138 : vector<4x8x8xf32>
    %cst_69 = arith.constant dense<0xFF800000> : vector<4x8xf32>
    %140 = vector.multi_reduction <maximumf>, %139, %cst_69 [2] : vector<4x8x8xf32> to vector<4x8xf32>
    %141 = vector.shape_cast %140 : vector<4x8xf32> to vector<4x8x1xf32>
    %142 = vector.broadcast %141 : vector<4x8x1xf32> to vector<4x8x8xf32>
    %143 = arith.subf %139, %142 : vector<4x8x8xf32>
    %144 = math.exp %143 : vector<4x8x8xf32>
    %cst_70 = arith.constant dense<0.000000e+00> : vector<4x8xf32>
    %145 = vector.multi_reduction <add>, %144, %cst_70 [2] : vector<4x8x8xf32> to vector<4x8xf32>
    %146 = vector.shape_cast %145 : vector<4x8xf32> to vector<4x8x1xf32>
    %147 = tpu.reciprocal %146 {approx = true} : vector<4x8x1xf32> -> vector<4x8x1xf32>
    %148 = vector.broadcast %147 : vector<4x8x1xf32> to vector<4x8x8xf32>
    %149 = arith.mulf %144, %148 : vector<4x8x8xf32>
    "tpu.trace_start"() <{level = 10 : i32, message = "hqk,hkd->hqd"}> : () -> ()
    %cst_71 = arith.constant dense<0.000000e+00> : vector<4x8x8xf32>
    %150 = tpu.matmul %149, %132, %cst_71 {dimension_numbers = #tpu.dot_dimension_numbers<[2], [1], [1], [2], [0, 0, 0, 1, 1, 2], [0], [0]>} : vector<4x8x8xf32>, vector<4x8x8xf32>, vector<4x8x8xf32> -> vector<4x8x8xf32>
    "tpu.trace_stop"() : () -> ()
    "tpu.trace_start"() <{level = 10 : i32, message = "hqd,hde->hqe"}> : () -> ()
    %cst_72 = arith.constant dense<0.000000e+00> : vector<4x8x32xf32>
    %151 = tpu.matmul %150, %111, %cst_72 {dimension_numbers = #tpu.dot_dimension_numbers<[2], [1], [1], [2], [0, 0, 0, 1, 1, 2], [0], [0]>} : vector<4x8x8xf32>, vector<4x8x32xf32>, vector<4x8x32xf32> -> vector<4x8x32xf32>
    "tpu.trace_stop"() : () -> ()
    %cst_73 = arith.constant dense<0.000000e+00> : vector<8x32xf32>
    %152 = vector.multi_reduction <add>, %151, %cst_73 [0] : vector<4x8x32xf32> to vector<8x32xf32>
    %153 = vector.broadcast %120 : vector<1x32xf32> to vector<8x32xf32>
    %154 = arith.addf %152, %153 : vector<8x32xf32>
    %155 = arith.addf %154, %107 : vector<8x32xf32>
    %cst_74 = arith.constant dense<0.000000e+00> : vector<8xf32>
    %156 = vector.multi_reduction <add>, %155, %cst_74 [1] : vector<8x32xf32> to vector<8xf32>
    %157 = vector.shape_cast %156 : vector<8xf32> to vector<8x1xf32>
    %cst_75 = arith.constant 3.200000e+01 : f32
    %158 = vector.broadcast %cst_75 : f32 to vector<8x1xf32>
    %159 = arith.divf %157, %158 : vector<8x1xf32>
    %160 = vector.broadcast %159 : vector<8x1xf32> to vector<8x32xf32>
    %161 = arith.subf %155, %160 : vector<8x32xf32>
    %162 = arith.mulf %161, %161 : vector<8x32xf32>
    %cst_76 = arith.constant dense<0.000000e+00> : vector<8xf32>
    %163 = vector.multi_reduction <add>, %162, %cst_76 [1] : vector<8x32xf32> to vector<8xf32>
    %164 = vector.shape_cast %163 : vector<8xf32> to vector<8x1xf32>
    %cst_77 = arith.constant 3.200000e+01 : f32
    %165 = vector.broadcast %cst_77 : f32 to vector<8x1xf32>
    %166 = arith.divf %164, %165 : vector<8x1xf32>
    %167 = vector.broadcast %159 : vector<8x1xf32> to vector<8x32xf32>
    %168 = arith.subf %155, %167 : vector<8x32xf32>
    %cst_78 = arith.constant 9.99999974E-6 : f32
    %169 = vector.broadcast %cst_78 : f32 to vector<8x1xf32>
    %170 = arith.addf %166, %169 : vector<8x1xf32>
    %171 = math.rsqrt %170 : vector<8x1xf32>
    %172 = vector.broadcast %171 : vector<8x1xf32> to vector<8x32xf32>
    %173 = arith.mulf %168, %172 : vector<8x32xf32>
    %174 = vector.broadcast %121 : vector<1x32xf32> to vector<8x32xf32>
    %175 = arith.mulf %173, %174 : vector<8x32xf32>
    %176 = vector.broadcast %122 : vector<1x32xf32> to vector<8x32xf32>
    %177 = arith.addf %175, %176 : vector<8x32xf32>
    %cst_79 = arith.constant dense<0.000000e+00> : vector<8x128xf32>
    %178 = tpu.matmul %177, %113, %cst_79 {dimension_numbers = #tpu.dot_dimension_numbers<[1], [0], [0], [1], [0, 0, 1, 1], [], []>} : vector<8x32xf32>, vector<32x128xf32>, vector<8x128xf32> -> vector<8x128xf32>
    %179 = vector.broadcast %117 : vector<1x128xf32> to vector<8x128xf32>
    %180 = arith.addf %178, %179 : vector<8x128xf32>
    %cst_80 = arith.constant 0.000000e+00 : f32
    %181 = vector.broadcast %cst_80 : f32 to vector<8x128xf32>
    %182 = arith.maximumf %180, %181 : vector<8x128xf32>
    %cst_81 = arith.constant dense<0.000000e+00> : vector<8x32xf32>
    %183 = tpu.matmul %182, %115, %cst_81 {dimension_numbers = #tpu.dot_dimension_numbers<[1], [0], [0], [1], [0, 0, 1, 1], [], []>} : vector<8x128xf32>, vector<128x32xf32>, vector<8x32xf32> -> vector<8x32xf32>
    %184 = vector.broadcast %123 : vector<1x32xf32> to vector<8x32xf32>
    %185 = arith.addf %183, %184 : vector<8x32xf32>
    %186 = arith.addf %185, %177 : vector<8x32xf32>
    %cst_82 = arith.constant dense<0.000000e+00> : vector<8xf32>
    %187 = vector.multi_reduction <add>, %186, %cst_82 [1] : vector<8x32xf32> to vector<8xf32>
    %188 = vector.shape_cast %187 : vector<8xf32> to vector<8x1xf32>
    %cst_83 = arith.constant 3.200000e+01 : f32
    %189 = vector.broadcast %cst_83 : f32 to vector<8x1xf32>
    %190 = arith.divf %188, %189 : vector<8x1xf32>
    %191 = vector.broadcast %190 : vector<8x1xf32> to vector<8x32xf32>
    %192 = arith.subf %186, %191 : vector<8x32xf32>
    %193 = arith.mulf %192, %192 : vector<8x32xf32>
    %cst_84 = arith.constant dense<0.000000e+00> : vector<8xf32>
    %194 = vector.multi_reduction <add>, %193, %cst_84 [1] : vector<8x32xf32> to vector<8xf32>
    %195 = vector.shape_cast %194 : vector<8xf32> to vector<8x1xf32>
    %cst_85 = arith.constant 3.200000e+01 : f32
    %196 = vector.broadcast %cst_85 : f32 to vector<8x1xf32>
    %197 = arith.divf %195, %196 : vector<8x1xf32>
    %198 = vector.broadcast %190 : vector<8x1xf32> to vector<8x32xf32>
    %199 = arith.subf %186, %198 : vector<8x32xf32>
    %cst_86 = arith.constant 9.99999974E-6 : f32
    %200 = vector.broadcast %cst_86 : f32 to vector<8x1xf32>
    %201 = arith.addf %197, %200 : vector<8x1xf32>
    %202 = math.rsqrt %201 : vector<8x1xf32>
    %203 = vector.broadcast %202 : vector<8x1xf32> to vector<8x32xf32>
    %204 = arith.mulf %199, %203 : vector<8x32xf32>
    %205 = vector.broadcast %124 : vector<1x32xf32> to vector<8x32xf32>
    %206 = arith.mulf %204, %205 : vector<8x32xf32>
    %207 = vector.broadcast %125 : vector<1x32xf32> to vector<8x32xf32>
    %208 = arith.addf %206, %207 : vector<8x32xf32>
    %c0_87 = arith.constant 0 : index
    %c0_88 = arith.constant 0 : index
    %c0_89 = arith.constant 0 : index
    %209 = vector.load %arg9[%c0_87, %c0_88, %c0_89] : memref<1x8x32xf32, #tpu.memory_space<vmem>>, vector<1x8x32xf32>
    %210 = vector.shape_cast %209 : vector<1x8x32xf32> to vector<8x32xf32>
    %211 = vector.shape_cast %208 : vector<8x32xf32> to vector<1x8x32xf32>
    tpu.vector_store %arg9[%c0_87, %c0_88, %c0_89], %211 {strides = array<i32>} : memref<1x8x32xf32, #tpu.memory_space<vmem>>, vector<1x8x32xf32>,
    return
  }
  func.func @transform_0(%arg0: i32) -> (i32, i32, i32) {
    %c0_i32 = arith.constant 0 : i32
    %c0_i32_0 = arith.constant 0 : i32
    %c0_i32_1 = arith.constant 0 : i32
    return %arg0, %c0_i32, %c0_i32_0 : i32, i32, i32
  }
  func.func @transform_1(%arg0: i32) -> (i32, i32, i32) {
    %c0_i32 = arith.constant 0 : i32
    %c0_i32_0 = arith.constant 0 : i32
    %c0_i32_1 = arith.constant 0 : i32
    return %arg0, %c0_i32, %c0_i32_0 : i32, i32, i32
  }
  func.func @transform_2(%arg0: i32) -> (i32, i32, i32, i32) {
    %c0_i32 = arith.constant 0 : i32
    %c0_i32_0 = arith.constant 0 : i32
    %c0_i32_1 = arith.constant 0 : i32
    %c0_i32_2 = arith.constant 0 : i32
    %c0_i32_3 = arith.constant 0 : i32
    return %c0_i32, %c0_i32_0, %c0_i32_1, %c0_i32_2 : i32, i32, i32, i32
  }
  func.func @transform_3(%arg0: i32) -> (i32, i32, i32, i32) {
    %c0_i32 = arith.constant 0 : i32
    %c0_i32_0 = arith.constant 0 : i32
    %c0_i32_1 = arith.constant 0 : i32
    %c0_i32_2 = arith.constant 0 : i32
    %c0_i32_3 = arith.constant 0 : i32
    return %c0_i32, %c0_i32_0, %c0_i32_1, %c0_i32_2 : i32, i32, i32, i32
  }
  func.func @transform_4(%arg0: i32) -> (i32, i32, i32) {
    %c0_i32 = arith.constant 0 : i32
    %c0_i32_0 = arith.constant 0 : i32
    %c0_i32_1 = arith.constant 0 : i32
    %c0_i32_2 = arith.constant 0 : i32
    return %c0_i32, %c0_i32_0, %c0_i32_1 : i32, i32, i32
  }
  func.func @transform_5(%arg0: i32) -> (i32, i32, i32) {
    %c0_i32 = arith.constant 0 : i32
    %c0_i32_0 = arith.constant 0 : i32
    %c0_i32_1 = arith.constant 0 : i32
    %c0_i32_2 = arith.constant 0 : i32
    return %c0_i32, %c0_i32_0, %c0_i32_1 : i32, i32, i32
  }
  func.func @transform_6(%arg0: i32) -> (i32, i32, i32) {
    %c0_i32 = arith.constant 0 : i32
    %c0_i32_0 = arith.constant 0 : i32
    %c0_i32_1 = arith.constant 0 : i32
    %c0_i32_2 = arith.constant 0 : i32
    return %c0_i32, %c0_i32_0, %c0_i32_1 : i32, i32, i32
  }
  func.func @transform_7(%arg0: i32) -> (i32, i32, i32) {
    %c0_i32 = arith.constant 0 : i32
    %c0_i32_0 = arith.constant 0 : i32
    %c0_i32_1 = arith.constant 0 : i32
    %c0_i32_2 = arith.constant 0 : i32
    return %c0_i32, %c0_i32_0, %c0_i32_1 : i32, i32, i32
  }
  func.func @transform_8(%arg0: i32) -> (i32, i32, i32) {
    %c0_i32 = arith.constant 0 : i32
    %c0_i32_0 = arith.constant 0 : i32
    %c0_i32_1 = arith.constant 0 : i32
    return %arg0, %c0_i32, %c0_i32_0 : i32, i32, i32
  }
}

</mosaic_0001>

<llo_original>
// kernel: tpu_custom_call.1
$region0: #{tpu_custom_call.1}
  #allocation0 [shape = 'u32[]', space=smem, size = 0x4, offset = 0x4, fixed_abs, tag = 'smem constant byte address 0x4 - core index']
  #allocation1 [shape = 'u32[144,128]{1,0:T(1,128)}', space=vmem, size = 0x12000, scoped, tag = 'internal scratch']
  %s0 = inlined_call_operand.vmem [shape: f32[2,8,32], index: 0, kind: input, shape index: {}]
  %s1 = inlined_call_operand.vmem [shape: s32[2,8,8], index: 1, kind: input, shape index: {}]
  %s2 = inlined_call_operand.vmem [shape: f32[2,4,32,24], index: 2, kind: input, shape index: {}]
  %s3 = inlined_call_operand.vmem [shape: f32[2,4,8,32], index: 3, kind: input, shape index: {}]
  %s4 = inlined_call_operand.vmem [shape: f32[2,32,128], index: 4, kind: input, shape index: {}]
  %s5 = inlined_call_operand.vmem [shape: f32[2,128,32], index: 5, kind: input, shape index: {}]
  %s6 = inlined_call_operand.vmem [shape: f32[2,1,128], index: 6, kind: input, shape index: {}]
  %s7 = inlined_call_operand.vmem [shape: f32[2,6,32], index: 7, kind: input, shape index: {}]
  %s8 = inlined_call_operand.hbm [shape: f32[2,8,32], index: 8, kind: output, shape index: {}]
  %s9 = sld [smem:[#allocation0]]
  $region65: #{tpu_custom_call.1} parent=0
    _
  %s11 = ssub.s32 1, %s9
  %s12 = scalar_select 0, %s11, %s9
  $region1: #{tpu_custom_call.1} parent=0
    #allocation2 [shape = 'u8[8192]{0}', space=vmem, size = 0x2000, scoped, tag = 'output window, operand 0']
    #allocation3 [shape = 's32[2]{0}', space=sflag, size = 0x8, scoped, tag = 'scoped memory for tpu_custom_call.1']
    %13 = vsyncpa [#allocation3], 0
    %s14 = scalar_lea.sflag [#allocation3], 1
    %15 = vsyncpa %s14, 0
    loop: start=0, step=1, limit=4
    $region2: #{tpu_custom_call.1} parent=1 // loop_pre_header
      _
    $region3: #{tpu_custom_call.1} parent=1 // loop_header
      %s17 = sphi 0, %s21
      %p18 = scmp.ge.s32.totalorder %s17, 4
      %s27 = sphi 0, %s29
      %s30 = sphi 0, %s27
      %s31 = sphi 0, %s30
      %s47 = sphi 0, %s31
      %s53 = sphi 0, %s55
      %s56 = sphi 0, %s53
      %s57 = sphi 0, %s56
      %s73 = sphi 0, %s57
      %s77 = sphi 0, %s77
      %s79 = sphi 0, %s77
      %s80 = sphi 0, %s79
      %s94 = sphi 0, %s80
      %s98 = sphi 0, %s98
      %s100 = sphi 0, %s98
      %s101 = sphi 0, %s100
      %s115 = sphi 0, %s101
      %s119 = sphi 0, %s119
      %s121 = sphi 0, %s119
      %s122 = sphi 0, %s121
      %s136 = sphi 0, %s122
      %s140 = sphi 0, %s140
      %s142 = sphi 0, %s140
      %s143 = sphi 0, %s142
      %s157 = sphi 0, %s143
      %s161 = sphi 0, %s161
      %s163 = sphi 0, %s161
      %s164 = sphi 0, %s163
      %s178 = sphi 0, %s164
      %s182 = sphi 0, %s182
      %s184 = sphi 0, %s182
      %s185 = sphi 0, %s184
      %s199 = sphi 0, %s185
      %s205 = sphi 0, %s207
      %s208 = sphi 0, %s205
      %s209 = sphi 0, %s208
      %s225 = sphi 0, %s209
    $region4: #{tpu_custom_call.1} parent=1 // loop_header_branch
      %20 = sbr.rel (%p18) target = $region8
    $region5: #{tpu_custom_call.1} parent=1 // loop_body
      %s22 = ssub.s32 %s17, 1
      %s23 = ssub.s32 %s17, 2
      %s24 = sadd.s32 %s17, 1
      %s25 = ssub.s32 %s17, %s24
      %p26 = scmp.eq.s32.totalorder %s25, 0
      %s28 = sadd.s32 %s27, 1
      %s29 = scalar_select %p26, %s27, %s28
      %p32 = pneg %p26
      %p33 = scmp.eq.s32.totalorder %s17, 1
      %p34 = por %p32, %p33
      %p35 = scmp.ne.s32.totalorder %s27, %s30
      %p36 = scmp.eq.s32.totalorder %s17, 0
      %p37 = por %p35, %p36
      %p38 = scmp.ne.s32.totalorder %s27, %s30
      %p39 = scmp.eq.s32.totalorder %s22, 1
      %p40 = por %p38, %p39
      %p41 = scmp.ne.s32.totalorder %s30, %s31
      %p42 = scmp.eq.s32.totalorder %s22, 0
      %p43 = por %p41, %p42
      %p44 = scmp.ne.s32.totalorder %s30, %s31
      %p45 = scmp.eq.s32.totalorder %s23, 1
      %p46 = por %p44, %p45
      %p48 = scmp.ne.s32.totalorder %s31, %s47
      %p49 = scmp.eq.s32.totalorder %s23, 0
      %p50 = por %p48, %p49
      %s51 = ssub.s32 %s17, %s24
      %p52 = scmp.eq.s32.totalorder %s51, 0
      %s54 = sadd.s32 %s53, 1
      %s55 = scalar_select %p52, %s53, %s54
      %p58 = pneg %p52
      %p59 = scmp.eq.s32.totalorder %s17, 1
      %p60 = por %p58, %p59
      %p61 = scmp.ne.s32.totalorder %s53, %s56
      %p62 = scmp.eq.s32.totalorder %s17, 0
      %p63 = por %p61, %p62
      %p64 = scmp.ne.s32.totalorder %s53, %s56
      %p65 = scmp.eq.s32.totalorder %s22, 1
      %p66 = por %p64, %p65
      %p67 = scmp.ne.s32.totalorder %s56, %s57
      %p68 = scmp.eq.s32.totalorder %s22, 0
      %p69 = por %p67, %p68
      %p70 = scmp.ne.s32.totalorder %s56, %s57
      %p71 = scmp.eq.s32.totalorder %s23, 1
      %p72 = por %p70, %p71
      %p74 = scmp.ne.s32.totalorder %s57, %s73
      %p75 = scmp.eq.s32.totalorder %s23, 0
      %p76 = por %p74, %p75
      %s78 = sadd.s32 %s77, 1
      %p81 = scmp.eq.s32.totalorder %s17, 1
      %p82 = scmp.ne.s32.totalorder %s77, %s79
      %p83 = scmp.eq.s32.totalorder %s17, 0
      %p84 = por %p82, %p83
      %p85 = scmp.ne.s32.totalorder %s77, %s79
      %p86 = scmp.eq.s32.totalorder %s22, 1
      %p87 = por %p85, %p86
      %p88 = scmp.ne.s32.totalorder %s79, %s80
      %p89 = scmp.eq.s32.totalorder %s22, 0
      %p90 = por %p88, %p89
      %p91 = scmp.ne.s32.totalorder %s79, %s80
      %p92 = scmp.eq.s32.totalorder %s23, 1
      %p93 = por %p91, %p92
      %p95 = scmp.ne.s32.totalorder %s80, %s94
      %p96 = scmp.eq.s32.totalorder %s23, 0
      %p97 = por %p95, %p96
      %s99 = sadd.s32 %s98, 1
      %p102 = scmp.eq.s32.totalorder %s17, 1
      %p103 = scmp.ne.s32.totalorder %s98, %s100
      %p104 = scmp.eq.s32.totalorder %s17, 0
      %p105 = por %p103, %p104
      %p106 = scmp.ne.s32.totalorder %s98, %s100
      %p107 = scmp.eq.s32.totalorder %s22, 1
      %p108 = por %p106, %p107
      %p109 = scmp.ne.s32.totalorder %s100, %s101
      %p110 = scmp.eq.s32.totalorder %s22, 0
      %p111 = por %p109, %p110
      %p112 = scmp.ne.s32.totalorder %s100, %s101
      %p113 = scmp.eq.s32.totalorder %s23, 1
      %p114 = por %p112, %p113
      %p116 = scmp.ne.s32.totalorder %s101, %s115
      %p117 = scmp.eq.s32.totalorder %s23, 0
      %p118 = por %p116, %p117
      %s120 = sadd.s32 %s119, 1
      %p123 = scmp.eq.s32.totalorder %s17, 1
      %p124 = scmp.ne.s32.totalorder %s119, %s121
      %p125 = scmp.eq.s32.totalorder %s17, 0
      %p126 = por %p124, %p125
      %p127 = scmp.ne.s32.totalorder %s119, %s121
      %p128 = scmp.eq.s32.totalorder %s22, 1
      %p129 = por %p127, %p128
      %p130 = scmp.ne.s32.totalorder %s121, %s122
      %p131 = scmp.eq.s32.totalorder %s22, 0
      %p132 = por %p130, %p131
      %p133 = scmp.ne.s32.totalorder %s121, %s122
      %p134 = scmp.eq.s32.totalorder %s23, 1
      %p135 = por %p133, %p134
      %p137 = scmp.ne.s32.totalorder %s122, %s136
      %p138 = scmp.eq.s32.totalorder %s23, 0
      %p139 = por %p137, %p138
      %s141 = sadd.s32 %s140, 1
      %p144 = scmp.eq.s32.totalorder %s17, 1
      %p145 = scmp.ne.s32.totalorder %s140, %s142
      %p146 = scmp.eq.s32.totalorder %s17, 0
      %p147 = por %p145, %p146
      %p148 = scmp.ne.s32.totalorder %s140, %s142
      %p149 = scmp.eq.s32.totalorder %s22, 1
      %p150 = por %p148, %p149
      %p151 = scmp.ne.s32.totalorder %s142, %s143
      %p152 = scmp.eq.s32.totalorder %s22, 0
      %p153 = por %p151, %p152
      %p154 = scmp.ne.s32.totalorder %s142, %s143
      %p155 = scmp.eq.s32.totalorder %s23, 1
      %p156 = por %p154, %p155
      %p158 = scmp.ne.s32.totalorder %s143, %s157
      %p159 = scmp.eq.s32.totalorder %s23, 0
      %p160 = por %p158, %p159
      %s162 = sadd.s32 %s161, 1
      %p165 = scmp.eq.s32.totalorder %s17, 1
      %p166 = scmp.ne.s32.totalorder %s161, %s163
      %p167 = scmp.eq.s32.totalorder %s17, 0
      %p168 = por %p166, %p167
      %p169 = scmp.ne.s32.totalorder %s161, %s163
      %p170 = scmp.eq.s32.totalorder %s22, 1
      %p171 = por %p169, %p170
      %p172 = scmp.ne.s32.totalorder %s163, %s164
      %p173 = scmp.eq.s32.totalorder %s22, 0
      %p174 = por %p172, %p173
      %p175 = scmp.ne.s32.totalorder %s163, %s164
      %p176 = scmp.eq.s32.totalorder %s23, 1
      %p177 = por %p175, %p176
      %p179 = scmp.ne.s32.totalorder %s164, %s178
      %p180 = scmp.eq.s32.totalorder %s23, 0
      %p181 = por %p179, %p180
      %s183 = sadd.s32 %s182, 1
      %p186 = scmp.eq.s32.totalorder %s17, 1
      %p187 = scmp.ne.s32.totalorder %s182, %s184
      %p188 = scmp.eq.s32.totalorder %s17, 0
      %p189 = por %p187, %p188
      %p190 = scmp.ne.s32.totalorder %s182, %s184
      %p191 = scmp.eq.s32.totalorder %s22, 1
      %p192 = por %p190, %p191
      %p193 = scmp.ne.s32.totalorder %s184, %s185
      %p194 = scmp.eq.s32.totalorder %s22, 0
      %p195 = por %p193, %p194
      %p196 = scmp.ne.s32.totalorder %s184, %s185
      %p197 = scmp.eq.s32.totalorder %s23, 1
      %p198 = por %p196, %p197
      %p200 = scmp.ne.s32.totalorder %s185, %s199
      %p201 = scmp.eq.s32.totalorder %s23, 0
      %p202 = por %p200, %p201
      %s203 = ssub.s32 %s17, %s24
      %p204 = scmp.eq.s32.totalorder %s203, 0
      %s206 = sadd.s32 %s205, 1
      %s207 = scalar_select %p204, %s205, %s206
      %p210 = pneg %p204
      %p211 = scmp.eq.s32.totalorder %s17, 1
      %p212 = por %p210, %p211
      %p213 = scmp.ne.s32.totalorder %s205, %s208
      %p214 = scmp.eq.s32.totalorder %s17, 0
      %p215 = por %p213, %p214
      %p216 = scmp.ne.s32.totalorder %s205, %s208
      %p217 = scmp.eq.s32.totalorder %s22, 1
      %p218 = por %p216, %p217
      %p219 = scmp.ne.s32.totalorder %s208, %s209
      %p220 = scmp.eq.s32.totalorder %s22, 0
      %p221 = por %p219, %p220
      %p222 = scmp.ne.s32.totalorder %s208, %s209
      %p223 = scmp.eq.s32.totalorder %s23, 1
      %p224 = por %p222, %p223
      %p226 = scmp.ne.s32.totalorder %s209, %s225
      %p227 = scmp.eq.s32.totalorder %s23, 0
      %p228 = por %p226, %p227
      %p229 = scmp.le.s32.totalorder 1, %s17
      %p230 = scmp.lt.s32.totalorder %s17, 3
      %p231 = pnand %p229, %p230
      %p232 = pneg %p231
      // Predicated region
      $region9: #{tpu_custom_call.1} parent=5 // pred_check
        _
      $region10: #{tpu_custom_call.1} parent=5 // pred_check_branch
        %234 = sbr.rel (%p231) target = $region12
      $region11: #{tpu_custom_call.1} parent=5 // pred_region
        %s235 = ssub.s32 %s17, 1
        // Predicated region
        $region13: #{tpu_custom_call.1} parent=11 // pred_check
          %p236 = pneg %p90
        $region14: #{tpu_custom_call.1} parent=11 // pred_check_branch
          %238 = sbr.rel (%p236) target = $region16
        $region15: #{tpu_custom_call.1} parent=11 // pred_region
          _
        $region16: #{tpu_custom_call.1} parent=11 // pred_fallthru
          _
        // Predicated region
        $region17: #{tpu_custom_call.1} parent=11 // pred_check
          %p239 = pneg %p111
        $region18: #{tpu_custom_call.1} parent=11 // pred_check_branch
          %241 = sbr.rel (%p239) target = $region20
        $region19: #{tpu_custom_call.1} parent=11 // pred_region
          _
        $region20: #{tpu_custom_call.1} parent=11 // pred_fallthru
          _
        // Predicated region
        $region21: #{tpu_custom_call.1} parent=11 // pred_check
          %p242 = pneg %p132
        $region22: #{tpu_custom_call.1} parent=11 // pred_check_branch
          %244 = sbr.rel (%p242) target = $region24
        $region23: #{tpu_custom_call.1} parent=11 // pred_region
          _
        $region24: #{tpu_custom_call.1} parent=11 // pred_fallthru
          _
        // Predicated region
        $region25: #{tpu_custom_call.1} parent=11 // pred_check
          %p245 = pneg %p153
        $region26: #{tpu_custom_call.1} parent=11 // pred_check_branch
          %247 = sbr.rel (%p245) target = $region28
        $region27: #{tpu_custom_call.1} parent=11 // pred_region
          _
        $region28: #{tpu_custom_call.1} parent=11 // pred_fallthru
          _
        // Predicated region
        $region29: #{tpu_custom_call.1} parent=11 // pred_check
          %p248 = pneg %p174
        $region30: #{tpu_custom_call.1} parent=11 // pred_check_branch
          %250 = sbr.rel (%p248) target = $region32
        $region31: #{tpu_custom_call.1} parent=11 // pred_region
          _
        $region32: #{tpu_custom_call.1} parent=11 // pred_fallthru
          _
        // Predicated region
        $region33: #{tpu_custom_call.1} parent=11 // pred_check
          %p251 = pneg %p195
        $region34: #{tpu_custom_call.1} parent=11 // pred_check_branch
          %253 = sbr.rel (%p251) target = $region36
        $region35: #{tpu_custom_call.1} parent=11 // pred_region
          _
        $region36: #{tpu_custom_call.1} parent=11 // pred_fallthru
          _
      $region12: #{tpu_custom_call.1} parent=5 // pred_fallthru
        _
      %p254 = scmp.lt.s32.totalorder %s17, 2
      // Predicated region
      $region37: #{tpu_custom_call.1} parent=5 // pred_check
        %p255 = pneg %p254
      $region38: #{tpu_custom_call.1} parent=5 // pred_check_branch
        %257 = sbr.rel (%p255) target = $region40
      $region39: #{tpu_custom_call.1} parent=5 // pred_region
        // Predicated region
        $region41: #{tpu_custom_call.1} parent=39 // pred_check
          %p258 = pneg %p37
        $region42: #{tpu_custom_call.1} parent=39 // pred_check_branch
          %260 = sbr.rel (%p258) target = $region44
        $region43: #{tpu_custom_call.1} parent=39 // pred_region
          %p261 = scmp.lt.s32.totalorder %s17, 1
          %s262 = scalar_select %p261, %s17, 1
          %s263 = smul.addr %s262, 8
          %s264 = scalar_lea.vmem %s0, %s263
        $region44: #{tpu_custom_call.1} parent=39 // pred_fallthru
          _
        // Predicated region
        $region45: #{tpu_custom_call.1} parent=39 // pred_check
          %p265 = pneg %p63
        $region46: #{tpu_custom_call.1} parent=39 // pred_check_branch
          %267 = sbr.rel (%p265) target = $region48
        $region47: #{tpu_custom_call.1} parent=39 // pred_region
          %p268 = scmp.lt.s32.totalorder %s17, 1
          %s269 = scalar_select %p268, %s17, 1
          %s270 = smul.addr %s269, 8
          %s271 = scalar_lea.vmem %s1, %s270
        $region48: #{tpu_custom_call.1} parent=39 // pred_fallthru
          _
      $region40: #{tpu_custom_call.1} parent=5 // pred_fallthru
        _
      %p272 = scmp.le.s32.totalorder 1, %s17
      %p273 = scmp.lt.s32.totalorder %s17, 3
      %p274 = pnand %p272, %p273
      %p275 = pneg %p274
      // Predicated region
      $region49: #{tpu_custom_call.1} parent=5 // pred_check
        _
      $region50: #{tpu_custom_call.1} parent=5 // pred_check_branch
        %277 = sbr.rel (%p274) target = $region52
      $region51: #{tpu_custom_call.1} parent=5 // pred_region
        %s278 = ssub.s32 %s17, 1
        %p279 = scmp.lt.s32.totalorder %s22, 1
        %s280 = scalar_select %p279, %s22, 1
        %s281 = smul.addr %s280, 8
        %s282 = scalar_lea.vmem %s0, %s281
        %p283 = pneg %p43
        %p284 = pneg %p40
        %p285 = scmp.lt.s32.totalorder %s22, 1
        %s286 = scalar_select %p285, %s22, 1
        %s287 = smul.addr %s286, 8
        %s288 = scalar_lea.vmem %s1, %s287
        %p289 = pneg %p69
        %p290 = pneg %p66
        %p291 = pneg %p90
        %p292 = pneg %p87
        %p293 = pneg %p111
        %p294 = pneg %p108
        %p295 = pneg %p132
        %p296 = pneg %p129
        %p297 = pneg %p153
        %p298 = pneg %p150
        %p299 = pneg %p174
        %p300 = pneg %p171
        %p301 = pneg %p195
        %p302 = pneg %p192
        %p303 = pneg %p221
        %p304 = pneg %p218
        %s305 = sand.u32 %s208, 1
        %s306 = scalar_lea.sflag [#allocation3], %s305
        %s307 = sand.u32 %s208, 1
        %s308 = smul.addr %s307, 8
        %s309 = scalar_lea.vmem [#allocation2], %s308
        %p310 = scmp.lt.s32.totalorder %s22, 1
        %s311 = scalar_select %p310, %s22, 1
        %s312 = smul.addr %s311, 8
        %s313 = scalar_lea.vmem %s0, %s312
        %p314 = scmp.lt.s32.totalorder %s22, 1
        %s315 = scalar_select %p314, %s22, 1
        %s316 = smul.addr %s315, 8
        %s317 = scalar_lea.vmem %s1, %s316
        %v318 = vld [vmem:[%s313] sm:$0xff]
        %v319 = vld [vmem:[%s317] sm:$0xff]
        %vm320 = vcmp.eq.s32.totalorder %v319, 0
        %v321 = vld [vmem:[%s2] sm:$0xff]
        %v322 = vld [vmem:[%s2 + $0x8] sm:$0xff]
        %v323 = vld [vmem:[%s2 + $0x10] sm:$0xff]
        %v324 = vld [vmem:[%s2 + $0x18] sm:$0xff]
        %v325 = vld [vmem:[%s2 + $0x20] sm:$0xff]
        %v326 = vld [vmem:[%s2 + $0x28] sm:$0xff]
        %v327 = vld [vmem:[%s2 + $0x30] sm:$0xff]
        %v328 = vld [vmem:[%s2 + $0x38] sm:$0xff]
        %v329 = vld [vmem:[%s2 + $0x40] sm:$0xff]
        %v330 = vld [vmem:[%s2 + $0x48] sm:$0xff]
        %v331 = vld [vmem:[%s2 + $0x50] sm:$0xff]
        %v332 = vld [vmem:[%s2 + $0x58] sm:$0xff]
        %v333 = vld [vmem:[%s2 + $0x60] sm:$0xff]
        %v334 = vld [vmem:[%s2 + $0x68] sm:$0xff]
        %v335 = vld [vmem:[%s2 + $0x70] sm:$0xff]
        %v336 = vld [vmem:[%s2 + $0x78] sm:$0xff]
        %v337 = vld [vmem:[%s3] sm:$0xff]
        %v338 = vld [vmem:[%s3 + $0x8] sm:$0xff]
        %v339 = vld [vmem:[%s3 + $0x10] sm:$0xff]
        %v340 = vld [vmem:[%s3 + $0x18] sm:$0xff]
        %v341 = vld [vmem:[%s4] sm:$0xff]
        %v342 = vld [vmem:[%s4 + $0x8] sm:$0xff]
        %v343 = vld [vmem:[%s4 + $0x10] sm:$0xff]
        %v344 = vld [vmem:[%s4 + $0x18] sm:$0xff]
        %v345 = vld [vmem:[%s5] sm:$0xff]
        %v346 = vld [vmem:[%s5 + $0x8] sm:$0xff]
        %v347 = vld [vmem:[%s5 + $0x10] sm:$0xff]
        %v348 = vld [vmem:[%s5 + $0x18] sm:$0xff]
        %v349 = vld [vmem:[%s5 + $0x20] sm:$0xff]
        %v350 = vld [vmem:[%s5 + $0x28] sm:$0xff]
        %v351 = vld [vmem:[%s5 + $0x30] sm:$0xff]
        %v352 = vld [vmem:[%s5 + $0x38] sm:$0xff]
        %v353 = vld [vmem:[%s5 + $0x40] sm:$0xff]
        %v354 = vld [vmem:[%s5 + $0x48] sm:$0xff]
        %v355 = vld [vmem:[%s5 + $0x50] sm:$0xff]
        %v356 = vld [vmem:[%s5 + $0x58] sm:$0xff]
        %v357 = vld [vmem:[%s5 + $0x60] sm:$0xff]
        %v358 = vld [vmem:[%s5 + $0x68] sm:$0xff]
        %v359 = vld [vmem:[%s5 + $0x70] sm:$0xff]
        %v360 = vld [vmem:[%s5 + $0x78] sm:$0xff]
        %v361 = vld [vmem:[%s6] sm:$0x1]
        %v362 = vld [vmem:[%s7] sm:$0x3f]
        %vm363 = vcmask 261120
        %v365 = vsel %vm363, %v318, 0
        %367 = vmatprep.subr.mxu0 0.0
        %368 = vmatpush1.msra.mxu0 0.0
        %369 = vmatprep.subr.mxu0 0.0
        %370 = vmatpush1.msra.mxu0 0.0
        %371 = vmatprep.subr.mxu0 0.0
        %372 = vmatpush1.msra.mxu0 0.0
        %373 = vmatprep.subr.mxu0 0.0
        %374 = vmatpush1.msra.mxu0 0.0
        %375 = vmatprep.subr.mxu0 0.0
        %376 = vmatpush1.msra.mxu0 0.0
        %377 = vmatprep.subr.mxu0 0.0
        %378 = vmatpush1.msra.mxu0 0.0
        %379 = vmatprep.subr.mxu0 0.0
        %380 = vmatpush1.msra.mxu0 0.0
        %381 = vmatprep.subr.mxu0 0.0
        %382 = vmatpush1.msra.mxu0 0.0
        %383 = vmatprep.subr.mxu0 0.0
        %384 = vmatpush1.msra.mxu0 0.0
        %385 = vmatprep.subr.mxu0 0.0
        %386 = vmatpush1.msra.mxu0 0.0
        %387 = vmatprep.subr.mxu0 0.0
        %388 = vmatpush1.msra.mxu0 0.0
        %389 = vmatprep.subr.mxu0 0.0
        %390 = vmatpush1.msra.mxu0 0.0
        %391 = vmatprep.subr.mxu0 0.0
        %392 = vmatpush1.msra.mxu0 %v324
        %393 = vmatprep.subr.mxu0 0.0
        %394 = vmatpush1.msra.mxu0 %v323
        %395 = vmatprep.subr.mxu0 0.0
        %396 = vmatpush1.msra.mxu0 %v322
        %397 = vmatprep.subr.mxu0 0.0
        %398 = vmatpush1.msra.mxu0 %v321
        %399 = vmatprep.subr.mxu0 0.0
        %400 = vmatpush2.msra.mxu0 0.0
        %401 = vmatprep.subr.mxu0 0.0
        %402 = vmatpush2.msra.mxu0 0.0
        %403 = vmatprep.subr.mxu0 0.0
        %404 = vmatpush2.msra.mxu0 0.0
        %405 = vmatprep.subr.mxu0 0.0
        %406 = vmatpush2.msra.mxu0 0.0
        %407 = vmatprep.subr.mxu0 0.0
        %408 = vmatpush2.msra.mxu0 0.0
        %409 = vmatprep.subr.mxu0 0.0
        %410 = vmatpush2.msra.mxu0 0.0
        %411 = vmatprep.subr.mxu0 0.0
        %412 = vmatpush2.msra.mxu0 0.0
        %413 = vmatprep.subr.mxu0 0.0
        %414 = vmatpush2.msra.mxu0 0.0
        %415 = vmatprep.subr.mxu0 0.0
        %416 = vmatpush2.msra.mxu0 0.0
        %417 = vmatprep.subr.mxu0 0.0
        %418 = vmatpush2.msra.mxu0 0.0
        %419 = vmatprep.subr.mxu0 0.0
        %420 = vmatpush2.msra.mxu0 0.0
        %421 = vmatprep.subr.mxu0 0.0
        %422 = vmatpush2.msra.mxu0 0.0
        %423 = vmatprep.subr.mxu0 0.0
        %424 = vmatpush2.msra.mxu0 0.0
        %425 = vmatprep.subr.mxu0 0.0
        %426 = vmatpush2.msra.mxu0 0.0
        %427 = vmatprep.subr.mxu0 0.0
        %428 = vmatpush2.msra.mxu0 0.0
        %429 = vmatprep.subr.mxu0 0.0
        %430 = vmatpush2.msra.mxu0 0.0
        %431 = vmatprep.mubr.f32.mxu0 0.0
        %432 = vmatmul.mubr.f32.gmra.mxu0 %v365
        %v433 = vpop.f32.mrf.mxu0
        %v434 = vadd.f32 0.0, %v433
        %v435 = vpop.f32.mrf.mxu0
        %436 = vdwg.mxu0
        %437 = vmatprep.subr.mxu0 0.0
        %438 = vmatpush1.msra.mxu0 0.0
        %439 = vmatprep.subr.mxu0 0.0
        %440 = vmatpush1.msra.mxu0 0.0
        %441 = vmatprep.subr.mxu0 0.0
        %442 = vmatpush1.msra.mxu0 0.0
        %443 = vmatprep.subr.mxu0 0.0
        %444 = vmatpush1.msra.mxu0 0.0
        %445 = vmatprep.subr.mxu0 0.0
        %446 = vmatpush1.msra.mxu0 0.0
        %447 = vmatprep.subr.mxu0 0.0
        %448 = vmatpush1.msra.mxu0 0.0
        %449 = vmatprep.subr.mxu0 0.0
        %450 = vmatpush1.msra.mxu0 0.0
        %451 = vmatprep.subr.mxu0 0.0
        %452 = vmatpush1.msra.mxu0 0.0
        %453 = vmatprep.subr.mxu0 0.0
        %454 = vmatpush1.msra.mxu0 0.0
        %455 = vmatprep.subr.mxu0 0.0
        %456 = vmatpush1.msra.mxu0 0.0
        %457 = vmatprep.subr.mxu0 0.0
        %458 = vmatpush1.msra.mxu0 0.0
        %459 = vmatprep.subr.mxu0 0.0
        %460 = vmatpush1.msra.mxu0 0.0
        %461 = vmatprep.subr.mxu0 0.0
        %462 = vmatpush1.msra.mxu0 %v328
        %463 = vmatprep.subr.mxu0 0.0
        %464 = vmatpush1.msra.mxu0 %v327
        %465 = vmatprep.subr.mxu0 0.0
        %466 = vmatpush1.msra.mxu0 %v326
        %467 = vmatprep.subr.mxu0 0.0
        %468 = vmatpush1.msra.mxu0 %v325
        %469 = vmatprep.subr.mxu0 0.0
        %470 = vmatpush2.msra.mxu0 0.0
        %471 = vmatprep.subr.mxu0 0.0
        %472 = vmatpush2.msra.mxu0 0.0
        %473 = vmatprep.subr.mxu0 0.0
        %474 = vmatpush2.msra.mxu0 0.0
        %475 = vmatprep.subr.mxu0 0.0
        %476 = vmatpush2.msra.mxu0 0.0
        %477 = vmatprep.subr.mxu0 0.0
        %478 = vmatpush2.msra.mxu0 0.0
        %479 = vmatprep.subr.mxu0 0.0
        %480 = vmatpush2.msra.mxu0 0.0
        %481 = vmatprep.subr.mxu0 0.0
        %482 = vmatpush2.msra.mxu0 0.0
        %483 = vmatprep.subr.mxu0 0.0
        %484 = vmatpush2.msra.mxu0 0.0
        %485 = vmatprep.subr.mxu0 0.0
        %486 = vmatpush2.msra.mxu0 0.0
        %487 = vmatprep.subr.mxu0 0.0
        %488 = vmatpush2.msra.mxu0 0.0
        %489 = vmatprep.subr.mxu0 0.0
        %490 = vmatpush2.msra.mxu0 0.0
        %491 = vmatprep.subr.mxu0 0.0
        %492 = vmatpush2.msra.mxu0 0.0
        %493 = vmatprep.subr.mxu0 0.0
        %494 = vmatpush2.msra.mxu0 0.0
        %495 = vmatprep.subr.mxu0 0.0
        %496 = vmatpush2.msra.mxu0 0.0
        %497 = vmatprep.subr.mxu0 0.0
        %498 = vmatpush2.msra.mxu0 0.0
        %499 = vmatprep.subr.mxu0 0.0
        %500 = vmatpush2.msra.mxu0 0.0
        %501 = vmatprep.mubr.f32.mxu0 0.0
        %502 = vmatmul.mubr.f32.gmra.mxu0 %v365
        %v503 = vpop.f32.mrf.mxu0
        %v504 = vadd.f32 0.0, %v503
        %v505 = vpop.f32.mrf.mxu0
        %506 = vdwg.mxu0
        %507 = vmatprep.subr.mxu0 0.0
        %508 = vmatpush1.msra.mxu0 0.0
        %509 = vmatprep.subr.mxu0 0.0
        %510 = vmatpush1.msra.mxu0 0.0
        %511 = vmatprep.subr.mxu0 0.0
        %512 = vmatpush1.msra.mxu0 0.0
        %513 = vmatprep.subr.mxu0 0.0
        %514 = vmatpush1.msra.mxu0 0.0
        %515 = vmatprep.subr.mxu0 0.0
        %516 = vmatpush1.msra.mxu0 0.0
        %517 = vmatprep.subr.mxu0 0.0
        %518 = vmatpush1.msra.mxu0 0.0
        %519 = vmatprep.subr.mxu0 0.0
        %520 = vmatpush1.msra.mxu0 0.0
        %521 = vmatprep.subr.mxu0 0.0
        %522 = vmatpush1.msra.mxu0 0.0
        %523 = vmatprep.subr.mxu0 0.0
        %524 = vmatpush1.msra.mxu0 0.0
        %525 = vmatprep.subr.mxu0 0.0
        %526 = vmatpush1.msra.mxu0 0.0
        %527 = vmatprep.subr.mxu0 0.0
        %528 = vmatpush1.msra.mxu0 0.0
        %529 = vmatprep.subr.mxu0 0.0
        %530 = vmatpush1.msra.mxu0 0.0
        %531 = vmatprep.subr.mxu0 0.0
        %532 = vmatpush1.msra.mxu0 %v332
        %533 = vmatprep.subr.mxu0 0.0
        %534 = vmatpush1.msra.mxu0 %v331
        %535 = vmatprep.subr.mxu0 0.0
        %536 = vmatpush1.msra.mxu0 %v330
        %537 = vmatprep.subr.mxu0 0.0
        %538 = vmatpush1.msra.mxu0 %v329
        %539 = vmatprep.subr.mxu0 0.0
        %540 = vmatpush2.msra.mxu0 0.0
        %541 = vmatprep.subr.mxu0 0.0
        %542 = vmatpush2.msra.mxu0 0.0
        %543 = vmatprep.subr.mxu0 0.0
        %544 = vmatpush2.msra.mxu0 0.0
        %545 = vmatprep.subr.mxu0 0.0
        %546 = vmatpush2.msra.mxu0 0.0
        %547 = vmatprep.subr.mxu0 0.0
        %548 = vmatpush2.msra.mxu0 0.0
        %549 = vmatprep.subr.mxu0 0.0
        %550 = vmatpush2.msra.mxu0 0.0
        %551 = vmatprep.subr.mxu0 0.0
        %552 = vmatpush2.msra.mxu0 0.0
        %553 = vmatprep.subr.mxu0 0.0
        %554 = vmatpush2.msra.mxu0 0.0
        %555 = vmatprep.subr.mxu0 0.0
        %556 = vmatpush2.msra.mxu0 0.0
        %557 = vmatprep.subr.mxu0 0.0
        %558 = vmatpush2.msra.mxu0 0.0
        %559 = vmatprep.subr.mxu0 0.0
        %560 = vmatpush2.msra.mxu0 0.0
        %561 = vmatprep.subr.mxu0 0.0
        %562 = vmatpush2.msra.mxu0 0.0
        %563 = vmatprep.subr.mxu0 0.0
        %564 = vmatpush2.msra.mxu0 0.0
        %565 = vmatprep.subr.mxu0 0.0
        %566 = vmatpush2.msra.mxu0 0.0
        %567 = vmatprep.subr.mxu0 0.0
        %568 = vmatpush2.msra.mxu0 0.0
        %569 = vmatprep.subr.mxu0 0.0
        %570 = vmatpush2.msra.mxu0 0.0
        %571 = vmatprep.mubr.f32.mxu0 0.0
        %572 = vmatmul.mubr.f32.gmra.mxu0 %v365
        %v573 = vpop.f32.mrf.mxu0
        %v574 = vadd.f32 0.0, %v573
        %v575 = vpop.f32.mrf.mxu0
        %576 = vdwg.mxu0
        %577 = vmatprep.subr.mxu0 0.0
        %578 = vmatpush1.msra.mxu0 0.0
        %579 = vmatprep.subr.mxu0 0.0
        %580 = vmatpush1.msra.mxu0 0.0
        %581 = vmatprep.subr.mxu0 0.0
        %582 = vmatpush1.msra.mxu0 0.0
        %583 = vmatprep.subr.mxu0 0.0
        %584 = vmatpush1.msra.mxu0 0.0
        %585 = vmatprep.subr.mxu0 0.0
        %586 = vmatpush1.msra.mxu0 0.0
        %587 = vmatprep.subr.mxu0 0.0
        %588 = vmatpush1.msra.mxu0 0.0
        %589 = vmatprep.subr.mxu0 0.0
        %590 = vmatpush1.msra.mxu0 0.0
        %591 = vmatprep.subr.mxu0 0.0
        %592 = vmatpush1.msra.mxu0 0.0
        %593 = vmatprep.subr.mxu0 0.0
        %594 = vmatpush1.msra.mxu0 0.0
        %595 = vmatprep.subr.mxu0 0.0
        %596 = vmatpush1.msra.mxu0 0.0
        %597 = vmatprep.subr.mxu0 0.0
        %598 = vmatpush1.msra.mxu0 0.0
        %599 = vmatprep.subr.mxu0 0.0
        %600 = vmatpush1.msra.mxu0 0.0
        %601 = vmatprep.subr.mxu0 0.0
        %602 = vmatpush1.msra.mxu0 %v336
        %603 = vmatprep.subr.mxu0 0.0
        %604 = vmatpush1.msra.mxu0 %v335
        %605 = vmatprep.subr.mxu0 0.0
        %606 = vmatpush1.msra.mxu0 %v334
        %607 = vmatprep.subr.mxu0 0.0
        %608 = vmatpush1.msra.mxu0 %v333
        %609 = vmatprep.subr.mxu0 0.0
        %610 = vmatpush2.msra.mxu0 0.0
        %611 = vmatprep.subr.mxu0 0.0
        %612 = vmatpush2.msra.mxu0 0.0
        %613 = vmatprep.subr.mxu0 0.0
        %614 = vmatpush2.msra.mxu0 0.0
        %615 = vmatprep.subr.mxu0 0.0
        %616 = vmatpush2.msra.mxu0 0.0
        %617 = vmatprep.subr.mxu0 0.0
        %618 = vmatpush2.msra.mxu0 0.0
        %619 = vmatprep.subr.mxu0 0.0
        %620 = vmatpush2.msra.mxu0 0.0
        %621 = vmatprep.subr.mxu0 0.0
        %622 = vmatpush2.msra.mxu0 0.0
        %623 = vmatprep.subr.mxu0 0.0
        %624 = vmatpush2.msra.mxu0 0.0
        %625 = vmatprep.subr.mxu0 0.0
        %626 = vmatpush2.msra.mxu0 0.0
        %627 = vmatprep.subr.mxu0 0.0
        %628 = vmatpush2.msra.mxu0 0.0
        %629 = vmatprep.subr.mxu0 0.0
        %630 = vmatpush2.msra.mxu0 0.0
        %631 = vmatprep.subr.mxu0 0.0
        %632 = vmatpush2.msra.mxu0 0.0
        %633 = vmatprep.subr.mxu0 0.0
        %634 = vmatpush2.msra.mxu0 0.0
        %635 = vmatprep.subr.mxu0 0.0
        %636 = vmatpush2.msra.mxu0 0.0
        %637 = vmatprep.subr.mxu0 0.0
        %638 = vmatpush2.msra.mxu0 0.0
        %639 = vmatprep.subr.mxu0 0.0
        %640 = vmatpush2.msra.mxu0 0.0
        %641 = vmatprep.mubr.f32.mxu0 0.0
        %642 = vmatmul.mubr.f32.gmra.mxu0 %v365
        %v643 = vpop.f32.mrf.mxu0
        %v644 = vadd.f32 0.0, %v643
        %v645 = vpop.f32.mrf.mxu0
        %646 = vdwg.mxu0
        %648 = vrot.lane.b32.xlu0 %v434, 120
        %v649 = vpop.permute.xlu0 %648
        %vm650 = vcmask 64512
        %v651 = vsel %vm650, %v434, 0
        %v653 = vsel %vm650, %v649, 0
        %655 = vmatprep.subr.mxu0 0.0
        %656 = vmatpush1.xpose.msra.mxu0 0.0
        %657 = vmatprep.subr.mxu0 0.0
        %658 = vmatpush1.xpose.msra.mxu0 0.0
        %659 = vmatprep.subr.mxu0 0.0
        %660 = vmatpush1.xpose.msra.mxu0 0.0
        %661 = vmatprep.subr.mxu0 0.0
        %662 = vmatpush1.xpose.msra.mxu0 0.0
        %663 = vmatprep.subr.mxu0 0.0
        %664 = vmatpush1.xpose.msra.mxu0 0.0
        %665 = vmatprep.subr.mxu0 0.0
        %666 = vmatpush1.xpose.msra.mxu0 0.0
        %667 = vmatprep.subr.mxu0 0.0
        %668 = vmatpush1.xpose.msra.mxu0 0.0
        %669 = vmatprep.subr.mxu0 0.0
        %670 = vmatpush1.xpose.msra.mxu0 0.0
        %671 = vmatprep.subr.mxu0 0.0
        %672 = vmatpush1.xpose.msra.mxu0 0.0
        %673 = vmatprep.subr.mxu0 0.0
        %674 = vmatpush1.xpose.msra.mxu0 0.0
        %675 = vmatprep.subr.mxu0 0.0
        %676 = vmatpush1.xpose.msra.mxu0 0.0
        %677 = vmatprep.subr.mxu0 0.0
        %678 = vmatpush1.xpose.msra.mxu0 0.0
        %679 = vmatprep.subr.mxu0 0.0
        %680 = vmatpush1.xpose.msra.mxu0 0.0
        %681 = vmatprep.subr.mxu0 0.0
        %682 = vmatpush1.xpose.msra.mxu0 0.0
        %683 = vmatprep.subr.mxu0 0.0
        %684 = vmatpush1.xpose.msra.mxu0 0.0
        %685 = vmatprep.subr.mxu0 0.0
        %686 = vmatpush1.xpose.msra.mxu0 %v653
        %687 = vmatprep.subr.mxu0 0.0
        %688 = vmatpush2.xpose.msra.mxu0 0.0
        %689 = vmatprep.subr.mxu0 0.0
        %690 = vmatpush2.xpose.msra.mxu0 0.0
        %691 = vmatprep.subr.mxu0 0.0
        %692 = vmatpush2.xpose.msra.mxu0 0.0
        %693 = vmatprep.subr.mxu0 0.0
        %694 = vmatpush2.xpose.msra.mxu0 0.0
        %695 = vmatprep.subr.mxu0 0.0
        %696 = vmatpush2.xpose.msra.mxu0 0.0
        %697 = vmatprep.subr.mxu0 0.0
        %698 = vmatpush2.xpose.msra.mxu0 0.0
        %699 = vmatprep.subr.mxu0 0.0
        %700 = vmatpush2.xpose.msra.mxu0 0.0
        %701 = vmatprep.subr.mxu0 0.0
        %702 = vmatpush2.xpose.msra.mxu0 0.0
        %703 = vmatprep.subr.mxu0 0.0
        %704 = vmatpush2.xpose.msra.mxu0 0.0
        %705 = vmatprep.subr.mxu0 0.0
        %706 = vmatpush2.xpose.msra.mxu0 0.0
        %707 = vmatprep.subr.mxu0 0.0
        %708 = vmatpush2.xpose.msra.mxu0 0.0
        %709 = vmatprep.subr.mxu0 0.0
        %710 = vmatpush2.xpose.msra.mxu0 0.0
        %711 = vmatprep.subr.mxu0 0.0
        %712 = vmatpush2.xpose.msra.mxu0 0.0
        %713 = vmatprep.subr.mxu0 0.0
        %714 = vmatpush2.xpose.msra.mxu0 0.0
        %715 = vmatprep.subr.mxu0 0.0
        %716 = vmatpush2.xpose.msra.mxu0 0.0
        %717 = vmatprep.subr.mxu0 0.0
        %718 = vmatpush2.xpose.msra.mxu0 0.0
        %719 = vmatprep.mubr.f32.mxu0 0.0
        %720 = vmatmul.mubr.f32.gmra.mxu0 %v651
        %v721 = vpop.f32.mrf.mxu0
        %v722 = vadd.f32 0.0, %v721
        %v723 = vpop.f32.mrf.mxu0
        %724 = vdwg.mxu0
        %726 = vrot.lane.b32.xlu0 %v504, 120
        %v727 = vpop.permute.xlu0 %726
        %v728 = vsel %vm650, %v504, 0
        %v730 = vsel %vm650, %v727, 0
        %732 = vmatprep.subr.mxu0 0.0
        %733 = vmatpush1.xpose.msra.mxu0 0.0
        %734 = vmatprep.subr.mxu0 0.0
        %735 = vmatpush1.xpose.msra.mxu0 0.0
        %736 = vmatprep.subr.mxu0 0.0
        %737 = vmatpush1.xpose.msra.mxu0 0.0
        %738 = vmatprep.subr.mxu0 0.0
        %739 = vmatpush1.xpose.msra.mxu0 0.0
        %740 = vmatprep.subr.mxu0 0.0
        %741 = vmatpush1.xpose.msra.mxu0 0.0
        %742 = vmatprep.subr.mxu0 0.0
        %743 = vmatpush1.xpose.msra.mxu0 0.0
        %744 = vmatprep.subr.mxu0 0.0
        %745 = vmatpush1.xpose.msra.mxu0 0.0
        %746 = vmatprep.subr.mxu0 0.0
        %747 = vmatpush1.xpose.msra.mxu0 0.0
        %748 = vmatprep.subr.mxu0 0.0
        %749 = vmatpush1.xpose.msra.mxu0 0.0
        %750 = vmatprep.subr.mxu0 0.0
        %751 = vmatpush1.xpose.msra.mxu0 0.0
        %752 = vmatprep.subr.mxu0 0.0
        %753 = vmatpush1.xpose.msra.mxu0 0.0
        %754 = vmatprep.subr.mxu0 0.0
        %755 = vmatpush1.xpose.msra.mxu0 0.0
        %756 = vmatprep.subr.mxu0 0.0
        %757 = vmatpush1.xpose.msra.mxu0 0.0
        %758 = vmatprep.subr.mxu0 0.0
        %759 = vmatpush1.xpose.msra.mxu0 0.0
        %760 = vmatprep.subr.mxu0 0.0
        %761 = vmatpush1.xpose.msra.mxu0 0.0
        %762 = vmatprep.subr.mxu0 0.0
        %763 = vmatpush1.xpose.msra.mxu0 %v730
        %764 = vmatprep.subr.mxu0 0.0
        %765 = vmatpush2.xpose.msra.mxu0 0.0
        %766 = vmatprep.subr.mxu0 0.0
        %767 = vmatpush2.xpose.msra.mxu0 0.0
        %768 = vmatprep.subr.mxu0 0.0
        %769 = vmatpush2.xpose.msra.mxu0 0.0
        %770 = vmatprep.subr.mxu0 0.0
        %771 = vmatpush2.xpose.msra.mxu0 0.0
        %772 = vmatprep.subr.mxu0 0.0
        %773 = vmatpush2.xpose.msra.mxu0 0.0
        %774 = vmatprep.subr.mxu0 0.0
        %775 = vmatpush2.xpose.msra.mxu0 0.0
        %776 = vmatprep.subr.mxu0 0.0
        %777 = vmatpush2.xpose.msra.mxu0 0.0
        %778 = vmatprep.subr.mxu0 0.0
        %779 = vmatpush2.xpose.msra.mxu0 0.0
        %780 = vmatprep.subr.mxu0 0.0
        %781 = vmatpush2.xpose.msra.mxu0 0.0
        %782 = vmatprep.subr.mxu0 0.0
        %783 = vmatpush2.xpose.msra.mxu0 0.0
        %784 = vmatprep.subr.mxu0 0.0
        %785 = vmatpush2.xpose.msra.mxu0 0.0
        %786 = vmatprep.subr.mxu0 0.0
        %787 = vmatpush2.xpose.msra.mxu0 0.0
        %788 = vmatprep.subr.mxu0 0.0
        %789 = vmatpush2.xpose.msra.mxu0 0.0
        %790 = vmatprep.subr.mxu0 0.0
        %791 = vmatpush2.xpose.msra.mxu0 0.0
        %792 = vmatprep.subr.mxu0 0.0
        %793 = vmatpush2.xpose.msra.mxu0 0.0
        %794 = vmatprep.subr.mxu0 0.0
        %795 = vmatpush2.xpose.msra.mxu0 0.0
        %796 = vmatprep.mubr.f32.mxu0 0.0
        %797 = vmatmul.mubr.f32.gmra.mxu0 %v728
        %v798 = vpop.f32.mrf.mxu0
        %v799 = vadd.f32 0.0, %v798
        %v800 = vpop.f32.mrf.mxu0
        %801 = vdwg.mxu0
        %803 = vrot.lane.b32.xlu0 %v574, 120
        %v804 = vpop.permute.xlu0 %803
        %v805 = vsel %vm650, %v574, 0
        %v807 = vsel %vm650, %v804, 0
        %809 = vmatprep.subr.mxu0 0.0
        %810 = vmatpush1.xpose.msra.mxu0 0.0
        %811 = vmatprep.subr.mxu0 0.0
        %812 = vmatpush1.xpose.msra.mxu0 0.0
        %813 = vmatprep.subr.mxu0 0.0
        %814 = vmatpush1.xpose.msra.mxu0 0.0
        %815 = vmatprep.subr.mxu0 0.0
        %816 = vmatpush1.xpose.msra.mxu0 0.0
        %817 = vmatprep.subr.mxu0 0.0
        %818 = vmatpush1.xpose.msra.mxu0 0.0
        %819 = vmatprep.subr.mxu0 0.0
        %820 = vmatpush1.xpose.msra.mxu0 0.0
        %821 = vmatprep.subr.mxu0 0.0
        %822 = vmatpush1.xpose.msra.mxu0 0.0
        %823 = vmatprep.subr.mxu0 0.0
        %824 = vmatpush1.xpose.msra.mxu0 0.0
        %825 = vmatprep.subr.mxu0 0.0
        %826 = vmatpush1.xpose.msra.mxu0 0.0
        %827 = vmatprep.subr.mxu0 0.0
        %828 = vmatpush1.xpose.msra.mxu0 0.0
        %829 = vmatprep.subr.mxu0 0.0
        %830 = vmatpush1.xpose.msra.mxu0 0.0
        %831 = vmatprep.subr.mxu0 0.0
        %832 = vmatpush1.xpose.msra.mxu0 0.0
        %833 = vmatprep.subr.mxu0 0.0
        %834 = vmatpush1.xpose.msra.mxu0 0.0
        %835 = vmatprep.subr.mxu0 0.0
        %836 = vmatpush1.xpose.msra.mxu0 0.0
        %837 = vmatprep.subr.mxu0 0.0
        %838 = vmatpush1.xpose.msra.mxu0 0.0
        %839 = vmatprep.subr.mxu0 0.0
        %840 = vmatpush1.xpose.msra.mxu0 %v807
        %841 = vmatprep.subr.mxu0 0.0
        %842 = vmatpush2.xpose.msra.mxu0 0.0
        %843 = vmatprep.subr.mxu0 0.0
        %844 = vmatpush2.xpose.msra.mxu0 0.0
        %845 = vmatprep.subr.mxu0 0.0
        %846 = vmatpush2.xpose.msra.mxu0 0.0
        %847 = vmatprep.subr.mxu0 0.0
        %848 = vmatpush2.xpose.msra.mxu0 0.0
        %849 = vmatprep.subr.mxu0 0.0
        %850 = vmatpush2.xpose.msra.mxu0 0.0
        %851 = vmatprep.subr.mxu0 0.0
        %852 = vmatpush2.xpose.msra.mxu0 0.0
        %853 = vmatprep.subr.mxu0 0.0
        %854 = vmatpush2.xpose.msra.mxu0 0.0
        %855 = vmatprep.subr.mxu0 0.0
        %856 = vmatpush2.xpose.msra.mxu0 0.0
        %857 = vmatprep.subr.mxu0 0.0
        %858 = vmatpush2.xpose.msra.mxu0 0.0
        %859 = vmatprep.subr.mxu0 0.0
        %860 = vmatpush2.xpose.msra.mxu0 0.0
        %861 = vmatprep.subr.mxu0 0.0
        %862 = vmatpush2.xpose.msra.mxu0 0.0
        %863 = vmatprep.subr.mxu0 0.0
        %864 = vmatpush2.xpose.msra.mxu0 0.0
        %865 = vmatprep.subr.mxu0 0.0
        %866 = vmatpush2.xpose.msra.mxu0 0.0
        %867 = vmatprep.subr.mxu0 0.0
        %868 = vmatpush2.xpose.msra.mxu0 0.0
        %869 = vmatprep.subr.mxu0 0.0
        %870 = vmatpush2.xpose.msra.mxu0 0.0
        %871 = vmatprep.subr.mxu0 0.0
        %872 = vmatpush2.xpose.msra.mxu0 0.0
        %873 = vmatprep.mubr.f32.mxu0 0.0
        %874 = vmatmul.mubr.f32.gmra.mxu0 %v805
        %v875 = vpop.f32.mrf.mxu0
        %v876 = vadd.f32 0.0, %v875
        %v877 = vpop.f32.mrf.mxu0
        %878 = vdwg.mxu0
        %880 = vrot.lane.b32.xlu0 %v644, 120
        %v881 = vpop.permute.xlu0 %880
        %v882 = vsel %vm650, %v644, 0
        %v884 = vsel %vm650, %v881, 0
        %886 = vmatprep.subr.mxu0 0.0
        %887 = vmatpush1.xpose.msra.mxu0 0.0
        %888 = vmatprep.subr.mxu0 0.0
        %889 = vmatpush1.xpose.msra.mxu0 0.0
        %890 = vmatprep.subr.mxu0 0.0
        %891 = vmatpush1.xpose.msra.mxu0 0.0
        %892 = vmatprep.subr.mxu0 0.0
        %893 = vmatpush1.xpose.msra.mxu0 0.0
        %894 = vmatprep.subr.mxu0 0.0
        %895 = vmatpush1.xpose.msra.mxu0 0.0
        %896 = vmatprep.subr.mxu0 0.0
        %897 = vmatpush1.xpose.msra.mxu0 0.0
        %898 = vmatprep.subr.mxu0 0.0
        %899 = vmatpush1.xpose.msra.mxu0 0.0
        %900 = vmatprep.subr.mxu0 0.0
        %901 = vmatpush1.xpose.msra.mxu0 0.0
        %902 = vmatprep.subr.mxu0 0.0
        %903 = vmatpush1.xpose.msra.mxu0 0.0
        %904 = vmatprep.subr.mxu0 0.0
        %905 = vmatpush1.xpose.msra.mxu0 0.0
        %906 = vmatprep.subr.mxu0 0.0
        %907 = vmatpush1.xpose.msra.mxu0 0.0
        %908 = vmatprep.subr.mxu0 0.0
        %909 = vmatpush1.xpose.msra.mxu0 0.0
        %910 = vmatprep.subr.mxu0 0.0
        %911 = vmatpush1.xpose.msra.mxu0 0.0
        %912 = vmatprep.subr.mxu0 0.0
        %913 = vmatpush1.xpose.msra.mxu0 0.0
        %914 = vmatprep.subr.mxu0 0.0
        %915 = vmatpush1.xpose.msra.mxu0 0.0
        %916 = vmatprep.subr.mxu0 0.0
        %917 = vmatpush1.xpose.msra.mxu0 %v884
        %918 = vmatprep.subr.mxu0 0.0
        %919 = vmatpush2.xpose.msra.mxu0 0.0
        %920 = vmatprep.subr.mxu0 0.0
        %921 = vmatpush2.xpose.msra.mxu0 0.0
        %922 = vmatprep.subr.mxu0 0.0
        %923 = vmatpush2.xpose.msra.mxu0 0.0
        %924 = vmatprep.subr.mxu0 0.0
        %925 = vmatpush2.xpose.msra.mxu0 0.0
        %926 = vmatprep.subr.mxu0 0.0
        %927 = vmatpush2.xpose.msra.mxu0 0.0
        %928 = vmatprep.subr.mxu0 0.0
        %929 = vmatpush2.xpose.msra.mxu0 0.0
        %930 = vmatprep.subr.mxu0 0.0
        %931 = vmatpush2.xpose.msra.mxu0 0.0
        %932 = vmatprep.subr.mxu0 0.0
        %933 = vmatpush2.xpose.msra.mxu0 0.0
        %934 = vmatprep.subr.mxu0 0.0
        %935 = vmatpush2.xpose.msra.mxu0 0.0
        %936 = vmatprep.subr.mxu0 0.0
        %937 = vmatpush2.xpose.msra.mxu0 0.0
        %938 = vmatprep.subr.mxu0 0.0
        %939 = vmatpush2.xpose.msra.mxu0 0.0
        %940 = vmatprep.subr.mxu0 0.0
        %941 = vmatpush2.xpose.msra.mxu0 0.0
        %942 = vmatprep.subr.mxu0 0.0
        %943 = vmatpush2.xpose.msra.mxu0 0.0
        %944 = vmatprep.subr.mxu0 0.0
        %945 = vmatpush2.xpose.msra.mxu0 0.0
        %946 = vmatprep.subr.mxu0 0.0
        %947 = vmatpush2.xpose.msra.mxu0 0.0
        %948 = vmatprep.subr.mxu0 0.0
        %949 = vmatpush2.xpose.msra.mxu0 0.0
        %950 = vmatprep.mubr.f32.mxu0 0.0
        %951 = vmatmul.mubr.f32.gmra.mxu0 %v882
        %v952 = vpop.f32.mrf.mxu0
        %v953 = vadd.f32 0.0, %v952
        %v954 = vpop.f32.mrf.mxu0
        %955 = vdwg.mxu0
        %v956 = vsel %vm320, 1, 0
        %vm957 = vcmp.eq.s32.totalorder %v956, 1
        %v958 = vsel %vm957, -1e+20, %v722
        %v959 = vsel %vm957, -1e+20, %v799
        %v960 = vsel %vm957, -1e+20, %v876
        %v961 = vsel %vm957, -1e+20, %v953
        %v962 = vmul.f32 %v958, 0.17677669
        %v963 = vmul.f32 %v959, 0.17677669
        %v964 = vmul.f32 %v960, 0.17677669
        %v965 = vmul.f32 %v961, 0.17677669
        %v966 = vsel %vm650, %v962, -inf
        %967 = vmax.xlane.f32.xlu0 %v966
        %v968 = vpop.xlane.xlu0 %967
        %v969 = vsel %vm650, %v963, -inf
        %970 = vmax.xlane.f32.xlu0 %v969
        %v971 = vpop.xlane.xlu0 %970
        %v972 = vsel %vm650, %v964, -inf
        %973 = vmax.xlane.f32.xlu0 %v972
        %v974 = vpop.xlane.xlu0 %973
        %v975 = vsel %vm650, %v965, -inf
        %976 = vmax.xlane.f32.xlu0 %v975
        %v977 = vpop.xlane.xlu0 %976
        %v978 = vsub.f32 %v962, %v968
        %v979 = vsub.f32 %v963, %v971
        %v980 = vsub.f32 %v964, %v974
        %v981 = vsub.f32 %v965, %v977
        %v982 = vmul.f32 %v978, 1.442695
        %v983 = vpow.pop %v982
        %v984 = vmul.f32 %v979, 1.442695
        %v985 = vpow.pop %v984
        %v986 = vmul.f32 %v980, 1.442695
        %v987 = vpow.pop %v986
        %v988 = vmul.f32 %v981, 1.442695
        %v989 = vpow.pop %v988
        %v990 = vsel %vm650, %v983, 0.0
        %991 = vadd.xlane.f32.xlu0 %v990
        %v992 = vpop.xlane.xlu0 %991
        %v993 = vsel %vm650, %v985, 0.0
        %994 = vadd.xlane.f32.xlu0 %v993
        %v995 = vpop.xlane.xlu0 %994
        %v996 = vsel %vm650, %v987, 0.0
        %997 = vadd.xlane.f32.xlu0 %v996
        %v998 = vpop.xlane.xlu0 %997
        %v999 = vsel %vm650, %v989, 0.0
        %1000 = vadd.xlane.f32.xlu0 %v999
        %v1001 = vpop.xlane.xlu0 %1000
        %v1002 = vrcp.pop %v992
        %v1003 = vrcp.pop %v995
        %v1004 = vrcp.pop %v998
        %v1005 = vrcp.pop %v1001
        %v1006 = vmul.f32 %v983, %v1002
        %v1007 = vmul.f32 %v985, %v1003
        %v1008 = vmul.f32 %v987, %v1004
        %v1009 = vmul.f32 %v989, %v1005
        %1010 = vrot.lane.b32.xlu0 %v434, 112
        %v1011 = vpop.permute.xlu0 %1010
        %v1014 = vsel %vm650, %v1006, 0
        %1016 = vmatprep.subr.mxu0 0.0
        %1017 = vmatpush1.msra.mxu0 0.0
        %1018 = vmatprep.subr.mxu0 0.0
        %1019 = vmatpush1.msra.mxu0 0.0
        %1020 = vmatprep.subr.mxu0 0.0
        %1021 = vmatpush1.msra.mxu0 0.0
        %1022 = vmatprep.subr.mxu0 0.0
        %1023 = vmatpush1.msra.mxu0 0.0
        %1024 = vmatprep.subr.mxu0 0.0
        %1025 = vmatpush1.msra.mxu0 0.0
        %1026 = vmatprep.subr.mxu0 0.0
        %1027 = vmatpush1.msra.mxu0 0.0
        %1028 = vmatprep.subr.mxu0 0.0
        %1029 = vmatpush1.msra.mxu0 0.0
        %1030 = vmatprep.subr.mxu0 0.0
        %1031 = vmatpush1.msra.mxu0 0.0
        %1032 = vmatprep.subr.mxu0 0.0
        %1033 = vmatpush1.msra.mxu0 0.0
        %1034 = vmatprep.subr.mxu0 0.0
        %1035 = vmatpush1.msra.mxu0 0.0
        %1036 = vmatprep.subr.mxu0 0.0
        %1037 = vmatpush1.msra.mxu0 0.0
        %1038 = vmatprep.subr.mxu0 0.0
        %1039 = vmatpush1.msra.mxu0 0.0
        %1040 = vmatprep.subr.mxu0 0.0
        %1041 = vmatpush1.msra.mxu0 0.0
        %1042 = vmatprep.subr.mxu0 0.0
        %1043 = vmatpush1.msra.mxu0 0.0
        %1044 = vmatprep.subr.mxu0 0.0
        %1045 = vmatpush1.msra.mxu0 0.0
        %1046 = vmatprep.subr.mxu0 0.0
        %1047 = vmatpush1.msra.mxu0 %v1011
        %1048 = vmatprep.subr.mxu0 0.0
        %1049 = vmatpush2.msra.mxu0 0.0
        %1050 = vmatprep.subr.mxu0 0.0
        %1051 = vmatpush2.msra.mxu0 0.0
        %1052 = vmatprep.subr.mxu0 0.0
        %1053 = vmatpush2.msra.mxu0 0.0
        %1054 = vmatprep.subr.mxu0 0.0
        %1055 = vmatpush2.msra.mxu0 0.0
        %1056 = vmatprep.subr.mxu0 0.0
        %1057 = vmatpush2.msra.mxu0 0.0
        %1058 = vmatprep.subr.mxu0 0.0
        %1059 = vmatpush2.msra.mxu0 0.0
        %1060 = vmatprep.subr.mxu0 0.0
        %1061 = vmatpush2.msra.mxu0 0.0
        %1062 = vmatprep.subr.mxu0 0.0
        %1063 = vmatpush2.msra.mxu0 0.0
        %1064 = vmatprep.subr.mxu0 0.0
        %1065 = vmatpush2.msra.mxu0 0.0
        %1066 = vmatprep.subr.mxu0 0.0
        %1067 = vmatpush2.msra.mxu0 0.0
        %1068 = vmatprep.subr.mxu0 0.0
        %1069 = vmatpush2.msra.mxu0 0.0
        %1070 = vmatprep.subr.mxu0 0.0
        %1071 = vmatpush2.msra.mxu0 0.0
        %1072 = vmatprep.subr.mxu0 0.0
        %1073 = vmatpush2.msra.mxu0 0.0
        %1074 = vmatprep.subr.mxu0 0.0
        %1075 = vmatpush2.msra.mxu0 0.0
        %1076 = vmatprep.subr.mxu0 0.0
        %1077 = vmatpush2.msra.mxu0 0.0
        %1078 = vmatprep.subr.mxu0 0.0
        %1079 = vmatpush2.msra.mxu0 0.0
        %1080 = vmatprep.mubr.f32.mxu0 0.0
        %1081 = vmatmul.mubr.f32.gmra.mxu0 %v1014
        %v1082 = vpop.f32.mrf.mxu0
        %v1083 = vadd.f32 0.0, %v1082
        %v1084 = vpop.f32.mrf.mxu0
        %1085 = vdwg.mxu0
        %1086 = vrot.lane.b32.xlu0 %v504, 112
        %v1087 = vpop.permute.xlu0 %1086
        %v1090 = vsel %vm650, %v1007, 0
        %1092 = vmatprep.subr.mxu0 0.0
        %1093 = vmatpush1.msra.mxu0 0.0
        %1094 = vmatprep.subr.mxu0 0.0
        %1095 = vmatpush1.msra.mxu0 0.0
        %1096 = vmatprep.subr.mxu0 0.0
        %1097 = vmatpush1.msra.mxu0 0.0
        %1098 = vmatprep.subr.mxu0 0.0
        %1099 = vmatpush1.msra.mxu0 0.0
        %1100 = vmatprep.subr.mxu0 0.0
        %1101 = vmatpush1.msra.mxu0 0.0
        %1102 = vmatprep.subr.mxu0 0.0
        %1103 = vmatpush1.msra.mxu0 0.0
        %1104 = vmatprep.subr.mxu0 0.0
        %1105 = vmatpush1.msra.mxu0 0.0
        %1106 = vmatprep.subr.mxu0 0.0
        %1107 = vmatpush1.msra.mxu0 0.0
        %1108 = vmatprep.subr.mxu0 0.0
        %1109 = vmatpush1.msra.mxu0 0.0
        %1110 = vmatprep.subr.mxu0 0.0
        %1111 = vmatpush1.msra.mxu0 0.0
        %1112 = vmatprep.subr.mxu0 0.0
        %1113 = vmatpush1.msra.mxu0 0.0
        %1114 = vmatprep.subr.mxu0 0.0
        %1115 = vmatpush1.msra.mxu0 0.0
        %1116 = vmatprep.subr.mxu0 0.0
        %1117 = vmatpush1.msra.mxu0 0.0
        %1118 = vmatprep.subr.mxu0 0.0
        %1119 = vmatpush1.msra.mxu0 0.0
        %1120 = vmatprep.subr.mxu0 0.0
        %1121 = vmatpush1.msra.mxu0 0.0
        %1122 = vmatprep.subr.mxu0 0.0
        %1123 = vmatpush1.msra.mxu0 %v1087
        %1124 = vmatprep.subr.mxu0 0.0
        %1125 = vmatpush2.msra.mxu0 0.0
        %1126 = vmatprep.subr.mxu0 0.0
        %1127 = vmatpush2.msra.mxu0 0.0
        %1128 = vmatprep.subr.mxu0 0.0
        %1129 = vmatpush2.msra.mxu0 0.0
        %1130 = vmatprep.subr.mxu0 0.0
        %1131 = vmatpush2.msra.mxu0 0.0
        %1132 = vmatprep.subr.mxu0 0.0
        %1133 = vmatpush2.msra.mxu0 0.0
        %1134 = vmatprep.subr.mxu0 0.0
        %1135 = vmatpush2.msra.mxu0 0.0
        %1136 = vmatprep.subr.mxu0 0.0
        %1137 = vmatpush2.msra.mxu0 0.0
        %1138 = vmatprep.subr.mxu0 0.0
        %1139 = vmatpush2.msra.mxu0 0.0
        %1140 = vmatprep.subr.mxu0 0.0
        %1141 = vmatpush2.msra.mxu0 0.0
        %1142 = vmatprep.subr.mxu0 0.0
        %1143 = vmatpush2.msra.mxu0 0.0
        %1144 = vmatprep.subr.mxu0 0.0
        %1145 = vmatpush2.msra.mxu0 0.0
        %1146 = vmatprep.subr.mxu0 0.0
        %1147 = vmatpush2.msra.mxu0 0.0
        %1148 = vmatprep.subr.mxu0 0.0
        %1149 = vmatpush2.msra.mxu0 0.0
        %1150 = vmatprep.subr.mxu0 0.0
        %1151 = vmatpush2.msra.mxu0 0.0
        %1152 = vmatprep.subr.mxu0 0.0
        %1153 = vmatpush2.msra.mxu0 0.0
        %1154 = vmatprep.subr.mxu0 0.0
        %1155 = vmatpush2.msra.mxu0 0.0
        %1156 = vmatprep.mubr.f32.mxu0 0.0
        %1157 = vmatmul.mubr.f32.gmra.mxu0 %v1090
        %v1158 = vpop.f32.mrf.mxu0
        %v1159 = vadd.f32 0.0, %v1158
        %v1160 = vpop.f32.mrf.mxu0
        %1161 = vdwg.mxu0
        %1162 = vrot.lane.b32.xlu0 %v574, 112
        %v1163 = vpop.permute.xlu0 %1162
        %v1166 = vsel %vm650, %v1008, 0
        %1168 = vmatprep.subr.mxu0 0.0
        %1169 = vmatpush1.msra.mxu0 0.0
        %1170 = vmatprep.subr.mxu0 0.0
        %1171 = vmatpush1.msra.mxu0 0.0
        %1172 = vmatprep.subr.mxu0 0.0
        %1173 = vmatpush1.msra.mxu0 0.0
        %1174 = vmatprep.subr.mxu0 0.0
        %1175 = vmatpush1.msra.mxu0 0.0
        %1176 = vmatprep.subr.mxu0 0.0
        %1177 = vmatpush1.msra.mxu0 0.0
        %1178 = vmatprep.subr.mxu0 0.0
        %1179 = vmatpush1.msra.mxu0 0.0
        %1180 = vmatprep.subr.mxu0 0.0
        %1181 = vmatpush1.msra.mxu0 0.0
        %1182 = vmatprep.subr.mxu0 0.0
        %1183 = vmatpush1.msra.mxu0 0.0
        %1184 = vmatprep.subr.mxu0 0.0
        %1185 = vmatpush1.msra.mxu0 0.0
        %1186 = vmatprep.subr.mxu0 0.0
        %1187 = vmatpush1.msra.mxu0 0.0
        %1188 = vmatprep.subr.mxu0 0.0
        %1189 = vmatpush1.msra.mxu0 0.0
        %1190 = vmatprep.subr.mxu0 0.0
        %1191 = vmatpush1.msra.mxu0 0.0
        %1192 = vmatprep.subr.mxu0 0.0
        %1193 = vmatpush1.msra.mxu0 0.0
        %1194 = vmatprep.subr.mxu0 0.0
        %1195 = vmatpush1.msra.mxu0 0.0
        %1196 = vmatprep.subr.mxu0 0.0
        %1197 = vmatpush1.msra.mxu0 0.0
        %1198 = vmatprep.subr.mxu0 0.0
        %1199 = vmatpush1.msra.mxu0 %v1163
        %1200 = vmatprep.subr.mxu0 0.0
        %1201 = vmatpush2.msra.mxu0 0.0
        %1202 = vmatprep.subr.mxu0 0.0
        %1203 = vmatpush2.msra.mxu0 0.0
        %1204 = vmatprep.subr.mxu0 0.0
        %1205 = vmatpush2.msra.mxu0 0.0
        %1206 = vmatprep.subr.mxu0 0.0
        %1207 = vmatpush2.msra.mxu0 0.0
        %1208 = vmatprep.subr.mxu0 0.0
        %1209 = vmatpush2.msra.mxu0 0.0
        %1210 = vmatprep.subr.mxu0 0.0
        %1211 = vmatpush2.msra.mxu0 0.0
        %1212 = vmatprep.subr.mxu0 0.0
        %1213 = vmatpush2.msra.mxu0 0.0
        %1214 = vmatprep.subr.mxu0 0.0
        %1215 = vmatpush2.msra.mxu0 0.0
        %1216 = vmatprep.subr.mxu0 0.0
        %1217 = vmatpush2.msra.mxu0 0.0
        %1218 = vmatprep.subr.mxu0 0.0
        %1219 = vmatpush2.msra.mxu0 0.0
        %1220 = vmatprep.subr.mxu0 0.0
        %1221 = vmatpush2.msra.mxu0 0.0
        %1222 = vmatprep.subr.mxu0 0.0
        %1223 = vmatpush2.msra.mxu0 0.0
        %1224 = vmatprep.subr.mxu0 0.0
        %1225 = vmatpush2.msra.mxu0 0.0
        %1226 = vmatprep.subr.mxu0 0.0
        %1227 = vmatpush2.msra.mxu0 0.0
        %1228 = vmatprep.subr.mxu0 0.0
        %1229 = vmatpush2.msra.mxu0 0.0
        %1230 = vmatprep.subr.mxu0 0.0
        %1231 = vmatpush2.msra.mxu0 0.0
        %1232 = vmatprep.mubr.f32.mxu0 0.0
        %1233 = vmatmul.mubr.f32.gmra.mxu0 %v1166
        %v1234 = vpop.f32.mrf.mxu0
        %v1235 = vadd.f32 0.0, %v1234
        %v1236 = vpop.f32.mrf.mxu0
        %1237 = vdwg.mxu0
        %1238 = vrot.lane.b32.xlu0 %v644, 112
        %v1239 = vpop.permute.xlu0 %1238
        %v1242 = vsel %vm650, %v1009, 0
        %1244 = vmatprep.subr.mxu0 0.0
        %1245 = vmatpush1.msra.mxu0 0.0
        %1246 = vmatprep.subr.mxu0 0.0
        %1247 = vmatpush1.msra.mxu0 0.0
        %1248 = vmatprep.subr.mxu0 0.0
        %1249 = vmatpush1.msra.mxu0 0.0
        %1250 = vmatprep.subr.mxu0 0.0
        %1251 = vmatpush1.msra.mxu0 0.0
        %1252 = vmatprep.subr.mxu0 0.0
        %1253 = vmatpush1.msra.mxu0 0.0
        %1254 = vmatprep.subr.mxu0 0.0
        %1255 = vmatpush1.msra.mxu0 0.0
        %1256 = vmatprep.subr.mxu0 0.0
        %1257 = vmatpush1.msra.mxu0 0.0
        %1258 = vmatprep.subr.mxu0 0.0
        %1259 = vmatpush1.msra.mxu0 0.0
        %1260 = vmatprep.subr.mxu0 0.0
        %1261 = vmatpush1.msra.mxu0 0.0
        %1262 = vmatprep.subr.mxu0 0.0
        %1263 = vmatpush1.msra.mxu0 0.0
        %1264 = vmatprep.subr.mxu0 0.0
        %1265 = vmatpush1.msra.mxu0 0.0
        %1266 = vmatprep.subr.mxu0 0.0
        %1267 = vmatpush1.msra.mxu0 0.0
        %1268 = vmatprep.subr.mxu0 0.0
        %1269 = vmatpush1.msra.mxu0 0.0
        %1270 = vmatprep.subr.mxu0 0.0
        %1271 = vmatpush1.msra.mxu0 0.0
        %1272 = vmatprep.subr.mxu0 0.0
        %1273 = vmatpush1.msra.mxu0 0.0
        %1274 = vmatprep.subr.mxu0 0.0
        %1275 = vmatpush1.msra.mxu0 %v1239
        %1276 = vmatprep.subr.mxu0 0.0
        %1277 = vmatpush2.msra.mxu0 0.0
        %1278 = vmatprep.subr.mxu0 0.0
        %1279 = vmatpush2.msra.mxu0 0.0
        %1280 = vmatprep.subr.mxu0 0.0
        %1281 = vmatpush2.msra.mxu0 0.0
        %1282 = vmatprep.subr.mxu0 0.0
        %1283 = vmatpush2.msra.mxu0 0.0
        %1284 = vmatprep.subr.mxu0 0.0
        %1285 = vmatpush2.msra.mxu0 0.0
        %1286 = vmatprep.subr.mxu0 0.0
        %1287 = vmatpush2.msra.mxu0 0.0
        %1288 = vmatprep.subr.mxu0 0.0
        %1289 = vmatpush2.msra.mxu0 0.0
        %1290 = vmatprep.subr.mxu0 0.0
        %1291 = vmatpush2.msra.mxu0 0.0
        %1292 = vmatprep.subr.mxu0 0.0
        %1293 = vmatpush2.msra.mxu0 0.0
        %1294 = vmatprep.subr.mxu0 0.0
        %1295 = vmatpush2.msra.mxu0 0.0
        %1296 = vmatprep.subr.mxu0 0.0
        %1297 = vmatpush2.msra.mxu0 0.0
        %1298 = vmatprep.subr.mxu0 0.0
        %1299 = vmatpush2.msra.mxu0 0.0
        %1300 = vmatprep.subr.mxu0 0.0
        %1301 = vmatpush2.msra.mxu0 0.0
        %1302 = vmatprep.subr.mxu0 0.0
        %1303 = vmatpush2.msra.mxu0 0.0
        %1304 = vmatprep.subr.mxu0 0.0
        %1305 = vmatpush2.msra.mxu0 0.0
        %1306 = vmatprep.subr.mxu0 0.0
        %1307 = vmatpush2.msra.mxu0 0.0
        %1308 = vmatprep.mubr.f32.mxu0 0.0
        %1309 = vmatmul.mubr.f32.gmra.mxu0 %v1242
        %v1310 = vpop.f32.mrf.mxu0
        %v1311 = vadd.f32 0.0, %v1310
        %v1312 = vpop.f32.mrf.mxu0
        %1313 = vdwg.mxu0
        %v1315 = vsel %vm650, %v1083, 0
        %1317 = vmatprep.subr.mxu0 0.0
        %1318 = vmatpush1.msra.mxu0 0.0
        %1319 = vmatprep.subr.mxu0 0.0
        %1320 = vmatpush1.msra.mxu0 0.0
        %1321 = vmatprep.subr.mxu0 0.0
        %1322 = vmatpush1.msra.mxu0 0.0
        %1323 = vmatprep.subr.mxu0 0.0
        %1324 = vmatpush1.msra.mxu0 0.0
        %1325 = vmatprep.subr.mxu0 0.0
        %1326 = vmatpush1.msra.mxu0 0.0
        %1327 = vmatprep.subr.mxu0 0.0
        %1328 = vmatpush1.msra.mxu0 0.0
        %1329 = vmatprep.subr.mxu0 0.0
        %1330 = vmatpush1.msra.mxu0 0.0
        %1331 = vmatprep.subr.mxu0 0.0
        %1332 = vmatpush1.msra.mxu0 0.0
        %1333 = vmatprep.subr.mxu0 0.0
        %1334 = vmatpush1.msra.mxu0 0.0
        %1335 = vmatprep.subr.mxu0 0.0
        %1336 = vmatpush1.msra.mxu0 0.0
        %1337 = vmatprep.subr.mxu0 0.0
        %1338 = vmatpush1.msra.mxu0 0.0
        %1339 = vmatprep.subr.mxu0 0.0
        %1340 = vmatpush1.msra.mxu0 0.0
        %1341 = vmatprep.subr.mxu0 0.0
        %1342 = vmatpush1.msra.mxu0 0.0
        %1343 = vmatprep.subr.mxu0 0.0
        %1344 = vmatpush1.msra.mxu0 0.0
        %1345 = vmatprep.subr.mxu0 0.0
        %1346 = vmatpush1.msra.mxu0 0.0
        %1347 = vmatprep.subr.mxu0 0.0
        %1348 = vmatpush1.msra.mxu0 %v337
        %1349 = vmatprep.subr.mxu0 0.0
        %1350 = vmatpush2.msra.mxu0 0.0
        %1351 = vmatprep.subr.mxu0 0.0
        %1352 = vmatpush2.msra.mxu0 0.0
        %1353 = vmatprep.subr.mxu0 0.0
        %1354 = vmatpush2.msra.mxu0 0.0
        %1355 = vmatprep.subr.mxu0 0.0
        %1356 = vmatpush2.msra.mxu0 0.0
        %1357 = vmatprep.subr.mxu0 0.0
        %1358 = vmatpush2.msra.mxu0 0.0
        %1359 = vmatprep.subr.mxu0 0.0
        %1360 = vmatpush2.msra.mxu0 0.0
        %1361 = vmatprep.subr.mxu0 0.0
        %1362 = vmatpush2.msra.mxu0 0.0
        %1363 = vmatprep.subr.mxu0 0.0
        %1364 = vmatpush2.msra.mxu0 0.0
        %1365 = vmatprep.subr.mxu0 0.0
        %1366 = vmatpush2.msra.mxu0 0.0
        %1367 = vmatprep.subr.mxu0 0.0
        %1368 = vmatpush2.msra.mxu0 0.0
        %1369 = vmatprep.subr.mxu0 0.0
        %1370 = vmatpush2.msra.mxu0 0.0
        %1371 = vmatprep.subr.mxu0 0.0
        %1372 = vmatpush2.msra.mxu0 0.0
        %1373 = vmatprep.subr.mxu0 0.0
        %1374 = vmatpush2.msra.mxu0 0.0
        %1375 = vmatprep.subr.mxu0 0.0
        %1376 = vmatpush2.msra.mxu0 0.0
        %1377 = vmatprep.subr.mxu0 0.0
        %1378 = vmatpush2.msra.mxu0 0.0
        %1379 = vmatprep.subr.mxu0 0.0
        %1380 = vmatpush2.msra.mxu0 0.0
        %1381 = vmatprep.mubr.f32.mxu0 0.0
        %1382 = vmatmul.mubr.f32.gmra.mxu0 %v1315
        %v1383 = vpop.f32.mrf.mxu0
        %v1384 = vadd.f32 0.0, %v1383
        %v1385 = vpop.f32.mrf.mxu0
        %1386 = vdwg.mxu0
        %v1388 = vsel %vm650, %v1159, 0
        %1390 = vmatprep.subr.mxu0 0.0
        %1391 = vmatpush1.msra.mxu0 0.0
        %1392 = vmatprep.subr.mxu0 0.0
        %1393 = vmatpush1.msra.mxu0 0.0
        %1394 = vmatprep.subr.mxu0 0.0
        %1395 = vmatpush1.msra.mxu0 0.0
        %1396 = vmatprep.subr.mxu0 0.0
        %1397 = vmatpush1.msra.mxu0 0.0
        %1398 = vmatprep.subr.mxu0 0.0
        %1399 = vmatpush1.msra.mxu0 0.0
        %1400 = vmatprep.subr.mxu0 0.0
        %1401 = vmatpush1.msra.mxu0 0.0
        %1402 = vmatprep.subr.mxu0 0.0
        %1403 = vmatpush1.msra.mxu0 0.0
        %1404 = vmatprep.subr.mxu0 0.0
        %1405 = vmatpush1.msra.mxu0 0.0
        %1406 = vmatprep.subr.mxu0 0.0
        %1407 = vmatpush1.msra.mxu0 0.0
        %1408 = vmatprep.subr.mxu0 0.0
        %1409 = vmatpush1.msra.mxu0 0.0
        %1410 = vmatprep.subr.mxu0 0.0
        %1411 = vmatpush1.msra.mxu0 0.0
        %1412 = vmatprep.subr.mxu0 0.0
        %1413 = vmatpush1.msra.mxu0 0.0
        %1414 = vmatprep.subr.mxu0 0.0
        %1415 = vmatpush1.msra.mxu0 0.0
        %1416 = vmatprep.subr.mxu0 0.0
        %1417 = vmatpush1.msra.mxu0 0.0
        %1418 = vmatprep.subr.mxu0 0.0
        %1419 = vmatpush1.msra.mxu0 0.0
        %1420 = vmatprep.subr.mxu0 0.0
        %1421 = vmatpush1.msra.mxu0 %v338
        %1422 = vmatprep.subr.mxu0 0.0
        %1423 = vmatpush2.msra.mxu0 0.0
        %1424 = vmatprep.subr.mxu0 0.0
        %1425 = vmatpush2.msra.mxu0 0.0
        %1426 = vmatprep.subr.mxu0 0.0
        %1427 = vmatpush2.msra.mxu0 0.0
        %1428 = vmatprep.subr.mxu0 0.0
        %1429 = vmatpush2.msra.mxu0 0.0
        %1430 = vmatprep.subr.mxu0 0.0
        %1431 = vmatpush2.msra.mxu0 0.0
        %1432 = vmatprep.subr.mxu0 0.0
        %1433 = vmatpush2.msra.mxu0 0.0
        %1434 = vmatprep.subr.mxu0 0.0
        %1435 = vmatpush2.msra.mxu0 0.0
        %1436 = vmatprep.subr.mxu0 0.0
        %1437 = vmatpush2.msra.mxu0 0.0
        %1438 = vmatprep.subr.mxu0 0.0
        %1439 = vmatpush2.msra.mxu0 0.0
        %1440 = vmatprep.subr.mxu0 0.0
        %1441 = vmatpush2.msra.mxu0 0.0
        %1442 = vmatprep.subr.mxu0 0.0
        %1443 = vmatpush2.msra.mxu0 0.0
        %1444 = vmatprep.subr.mxu0 0.0
        %1445 = vmatpush2.msra.mxu0 0.0
        %1446 = vmatprep.subr.mxu0 0.0
        %1447 = vmatpush2.msra.mxu0 0.0
        %1448 = vmatprep.subr.mxu0 0.0
        %1449 = vmatpush2.msra.mxu0 0.0
        %1450 = vmatprep.subr.mxu0 0.0
        %1451 = vmatpush2.msra.mxu0 0.0
        %1452 = vmatprep.subr.mxu0 0.0
        %1453 = vmatpush2.msra.mxu0 0.0
        %1454 = vmatprep.mubr.f32.mxu0 0.0
        %1455 = vmatmul.mubr.f32.gmra.mxu0 %v1388
        %v1456 = vpop.f32.mrf.mxu0
        %v1457 = vadd.f32 0.0, %v1456
        %v1458 = vpop.f32.mrf.mxu0
        %1459 = vdwg.mxu0
        %v1461 = vsel %vm650, %v1235, 0
        %1463 = vmatprep.subr.mxu0 0.0
        %1464 = vmatpush1.msra.mxu0 0.0
        %1465 = vmatprep.subr.mxu0 0.0
        %1466 = vmatpush1.msra.mxu0 0.0
        %1467 = vmatprep.subr.mxu0 0.0
        %1468 = vmatpush1.msra.mxu0 0.0
        %1469 = vmatprep.subr.mxu0 0.0
        %1470 = vmatpush1.msra.mxu0 0.0
        %1471 = vmatprep.subr.mxu0 0.0
        %1472 = vmatpush1.msra.mxu0 0.0
        %1473 = vmatprep.subr.mxu0 0.0
        %1474 = vmatpush1.msra.mxu0 0.0
        %1475 = vmatprep.subr.mxu0 0.0
        %1476 = vmatpush1.msra.mxu0 0.0
        %1477 = vmatprep.subr.mxu0 0.0
        %1478 = vmatpush1.msra.mxu0 0.0
        %1479 = vmatprep.subr.mxu0 0.0
        %1480 = vmatpush1.msra.mxu0 0.0
        %1481 = vmatprep.subr.mxu0 0.0
        %1482 = vmatpush1.msra.mxu0 0.0
        %1483 = vmatprep.subr.mxu0 0.0
        %1484 = vmatpush1.msra.mxu0 0.0
        %1485 = vmatprep.subr.mxu0 0.0
        %1486 = vmatpush1.msra.mxu0 0.0
        %1487 = vmatprep.subr.mxu0 0.0
        %1488 = vmatpush1.msra.mxu0 0.0
        %1489 = vmatprep.subr.mxu0 0.0
        %1490 = vmatpush1.msra.mxu0 0.0
        %1491 = vmatprep.subr.mxu0 0.0
        %1492 = vmatpush1.msra.mxu0 0.0
        %1493 = vmatprep.subr.mxu0 0.0
        %1494 = vmatpush1.msra.mxu0 %v339
        %1495 = vmatprep.subr.mxu0 0.0
        %1496 = vmatpush2.msra.mxu0 0.0
        %1497 = vmatprep.subr.mxu0 0.0
        %1498 = vmatpush2.msra.mxu0 0.0
        %1499 = vmatprep.subr.mxu0 0.0
        %1500 = vmatpush2.msra.mxu0 0.0
        %1501 = vmatprep.subr.mxu0 0.0
        %1502 = vmatpush2.msra.mxu0 0.0
        %1503 = vmatprep.subr.mxu0 0.0
        %1504 = vmatpush2.msra.mxu0 0.0
        %1505 = vmatprep.subr.mxu0 0.0
        %1506 = vmatpush2.msra.mxu0 0.0
        %1507 = vmatprep.subr.mxu0 0.0
        %1508 = vmatpush2.msra.mxu0 0.0
        %1509 = vmatprep.subr.mxu0 0.0
        %1510 = vmatpush2.msra.mxu0 0.0
        %1511 = vmatprep.subr.mxu0 0.0
        %1512 = vmatpush2.msra.mxu0 0.0
        %1513 = vmatprep.subr.mxu0 0.0
        %1514 = vmatpush2.msra.mxu0 0.0
        %1515 = vmatprep.subr.mxu0 0.0
        %1516 = vmatpush2.msra.mxu0 0.0
        %1517 = vmatprep.subr.mxu0 0.0
        %1518 = vmatpush2.msra.mxu0 0.0
        %1519 = vmatprep.subr.mxu0 0.0
        %1520 = vmatpush2.msra.mxu0 0.0
        %1521 = vmatprep.subr.mxu0 0.0
        %1522 = vmatpush2.msra.mxu0 0.0
        %1523 = vmatprep.subr.mxu0 0.0
        %1524 = vmatpush2.msra.mxu0 0.0
        %1525 = vmatprep.subr.mxu0 0.0
        %1526 = vmatpush2.msra.mxu0 0.0
        %1527 = vmatprep.mubr.f32.mxu0 0.0
        %1528 = vmatmul.mubr.f32.gmra.mxu0 %v1461
        %v1529 = vpop.f32.mrf.mxu0
        %v1530 = vadd.f32 0.0, %v1529
        %v1531 = vpop.f32.mrf.mxu0
        %1532 = vdwg.mxu0
        %v1534 = vsel %vm650, %v1311, 0
        %1536 = vmatprep.subr.mxu0 0.0
        %1537 = vmatpush1.msra.mxu0 0.0
        %1538 = vmatprep.subr.mxu0 0.0
        %1539 = vmatpush1.msra.mxu0 0.0
        %1540 = vmatprep.subr.mxu0 0.0
        %1541 = vmatpush1.msra.mxu0 0.0
        %1542 = vmatprep.subr.mxu0 0.0
        %1543 = vmatpush1.msra.mxu0 0.0
        %1544 = vmatprep.subr.mxu0 0.0
        %1545 = vmatpush1.msra.mxu0 0.0
        %1546 = vmatprep.subr.mxu0 0.0
        %1547 = vmatpush1.msra.mxu0 0.0
        %1548 = vmatprep.subr.mxu0 0.0
        %1549 = vmatpush1.msra.mxu0 0.0
        %1550 = vmatprep.subr.mxu0 0.0
        %1551 = vmatpush1.msra.mxu0 0.0
        %1552 = vmatprep.subr.mxu0 0.0
        %1553 = vmatpush1.msra.mxu0 0.0
        %1554 = vmatprep.subr.mxu0 0.0
        %1555 = vmatpush1.msra.mxu0 0.0
        %1556 = vmatprep.subr.mxu0 0.0
        %1557 = vmatpush1.msra.mxu0 0.0
        %1558 = vmatprep.subr.mxu0 0.0
        %1559 = vmatpush1.msra.mxu0 0.0
        %1560 = vmatprep.subr.mxu0 0.0
        %1561 = vmatpush1.msra.mxu0 0.0
        %1562 = vmatprep.subr.mxu0 0.0
        %1563 = vmatpush1.msra.mxu0 0.0
        %1564 = vmatprep.subr.mxu0 0.0
        %1565 = vmatpush1.msra.mxu0 0.0
        %1566 = vmatprep.subr.mxu0 0.0
        %1567 = vmatpush1.msra.mxu0 %v340
        %1568 = vmatprep.subr.mxu0 0.0
        %1569 = vmatpush2.msra.mxu0 0.0
        %1570 = vmatprep.subr.mxu0 0.0
        %1571 = vmatpush2.msra.mxu0 0.0
        %1572 = vmatprep.subr.mxu0 0.0
        %1573 = vmatpush2.msra.mxu0 0.0
        %1574 = vmatprep.subr.mxu0 0.0
        %1575 = vmatpush2.msra.mxu0 0.0
        %1576 = vmatprep.subr.mxu0 0.0
        %1577 = vmatpush2.msra.mxu0 0.0
        %1578 = vmatprep.subr.mxu0 0.0
        %1579 = vmatpush2.msra.mxu0 0.0
        %1580 = vmatprep.subr.mxu0 0.0
        %1581 = vmatpush2.msra.mxu0 0.0
        %1582 = vmatprep.subr.mxu0 0.0
        %1583 = vmatpush2.msra.mxu0 0.0
        %1584 = vmatprep.subr.mxu0 0.0
        %1585 = vmatpush2.msra.mxu0 0.0
        %1586 = vmatprep.subr.mxu0 0.0
        %1587 = vmatpush2.msra.mxu0 0.0
        %1588 = vmatprep.subr.mxu0 0.0
        %1589 = vmatpush2.msra.mxu0 0.0
        %1590 = vmatprep.subr.mxu0 0.0
        %1591 = vmatpush2.msra.mxu0 0.0
        %1592 = vmatprep.subr.mxu0 0.0
        %1593 = vmatpush2.msra.mxu0 0.0
        %1594 = vmatprep.subr.mxu0 0.0
        %1595 = vmatpush2.msra.mxu0 0.0
        %1596 = vmatprep.subr.mxu0 0.0
        %1597 = vmatpush2.msra.mxu0 0.0
        %1598 = vmatprep.subr.mxu0 0.0
        %1599 = vmatpush2.msra.mxu0 0.0
        %1600 = vmatprep.mubr.f32.mxu0 0.0
        %1601 = vmatmul.mubr.f32.gmra.mxu0 %v1534
        %v1602 = vpop.f32.mrf.mxu0
        %v1603 = vadd.f32 0.0, %v1602
        %v1604 = vpop.f32.mrf.mxu0
        %1605 = vdwg.mxu0
        %v1606 = vsel %vm363, %v1384, 0.0
        %v1607 = vsel %vm363, %v1457, 0.0
        %v1608 = vadd.f32 %v1606, %v1607
        %v1609 = vsel %vm363, %v1530, 0.0
        %v1610 = vadd.f32 %v1608, %v1609
        %v1611 = vsel %vm363, %v1603, 0.0
        %v1612 = vadd.f32 %v1610, %v1611
        %v1613 = vlaneseq
        %v1614 = vshrl.u32 %v1613, 7
        %v1615 = vsub.s32 0, %v1614
        %v1616 = vrot.slane %v362, %v1615
        %v1617 = vadd.f32 %v1612, %v1616
        %v1618 = vadd.f32 %v1617, %v318
        %v1619 = vsel %vm363, %v1618, 0.0
        %1620 = vadd.xlane.f32.xlu0 %v1619
        %v1621 = vpop.xlane.xlu0 %1620
        %v1622 = vrcp.pop 32.0
        %v1623 = vmul.f32 %v1621, %v1622
        %v1624 = vsub.f32 %v1618, %v1623
        %v1625 = vmul.f32 %v1624, %v1624
        %v1626 = vsel %vm363, %v1625, 0.0
        %1627 = vadd.xlane.f32.xlu0 %v1626
        %v1628 = vpop.xlane.xlu0 %1627
        %v1629 = vmul.f32 %v1628, %v1622
        %v1630 = vadd.f32 %v1629, 1e-05
        %v1631 = vrsqrt.pop %v1630
        %v1632 = vmul.f32 %v1624, %v1631
        %v1633 = vlaneseq
        %v1634 = vshrl.u32 %v1633, 7
        %v1635 = vsub.s32 1, %v1634
        %v1636 = vrot.slane %v362, %v1635
        %v1637 = vmul.f32 %v1632, %v1636
        %v1638 = vlaneseq
        %v1639 = vshrl.u32 %v1638, 7
        %v1640 = vsub.s32 2, %v1639
        %v1641 = vrot.slane %v362, %v1640
        %v1642 = vadd.f32 %v1637, %v1641
        %v1644 = vlaneseq
        %v1645 = vshrl.u32 %v1644, 7
        %v1646 = vsub.s32 0, %v1645
        %v1647 = vrot.slane %v361, %v1646
        %v1650 = vsel %vm363, %v1642, 0
        %1652 = vmatprep.subr.mxu0 0.0
        %1653 = vmatpush1.msra.mxu0 0.0
        %1654 = vmatprep.subr.mxu0 0.0
        %1655 = vmatpush1.msra.mxu0 0.0
        %1656 = vmatprep.subr.mxu0 0.0
        %1657 = vmatpush1.msra.mxu0 0.0
        %1658 = vmatprep.subr.mxu0 0.0
        %1659 = vmatpush1.msra.mxu0 0.0
        %1660 = vmatprep.subr.mxu0 0.0
        %1661 = vmatpush1.msra.mxu0 0.0
        %1662 = vmatprep.subr.mxu0 0.0
        %1663 = vmatpush1.msra.mxu0 0.0
        %1664 = vmatprep.subr.mxu0 0.0
        %1665 = vmatpush1.msra.mxu0 0.0
        %1666 = vmatprep.subr.mxu0 0.0
        %1667 = vmatpush1.msra.mxu0 0.0
        %1668 = vmatprep.subr.mxu0 0.0
        %1669 = vmatpush1.msra.mxu0 0.0
        %1670 = vmatprep.subr.mxu0 0.0
        %1671 = vmatpush1.msra.mxu0 0.0
        %1672 = vmatprep.subr.mxu0 0.0
        %1673 = vmatpush1.msra.mxu0 0.0
        %1674 = vmatprep.subr.mxu0 0.0
        %1675 = vmatpush1.msra.mxu0 0.0
        %1676 = vmatprep.subr.mxu0 0.0
        %1677 = vmatpush1.msra.mxu0 %v344
        %1678 = vmatprep.subr.mxu0 0.0
        %1679 = vmatpush1.msra.mxu0 %v343
        %1680 = vmatprep.subr.mxu0 0.0
        %1681 = vmatpush1.msra.mxu0 %v342
        %1682 = vmatprep.subr.mxu0 0.0
        %1683 = vmatpush1.msra.mxu0 %v341
        %1684 = vmatprep.subr.mxu0 0.0
        %1685 = vmatpush2.msra.mxu0 0.0
        %1686 = vmatprep.subr.mxu0 0.0
        %1687 = vmatpush2.msra.mxu0 0.0
        %1688 = vmatprep.subr.mxu0 0.0
        %1689 = vmatpush2.msra.mxu0 0.0
        %1690 = vmatprep.subr.mxu0 0.0
        %1691 = vmatpush2.msra.mxu0 0.0
        %1692 = vmatprep.subr.mxu0 0.0
        %1693 = vmatpush2.msra.mxu0 0.0
        %1694 = vmatprep.subr.mxu0 0.0
        %1695 = vmatpush2.msra.mxu0 0.0
        %1696 = vmatprep.subr.mxu0 0.0
        %1697 = vmatpush2.msra.mxu0 0.0
        %1698 = vmatprep.subr.mxu0 0.0
        %1699 = vmatpush2.msra.mxu0 0.0
        %1700 = vmatprep.subr.mxu0 0.0
        %1701 = vmatpush2.msra.mxu0 0.0
        %1702 = vmatprep.subr.mxu0 0.0
        %1703 = vmatpush2.msra.mxu0 0.0
        %1704 = vmatprep.subr.mxu0 0.0
        %1705 = vmatpush2.msra.mxu0 0.0
        %1706 = vmatprep.subr.mxu0 0.0
        %1707 = vmatpush2.msra.mxu0 0.0
        %1708 = vmatprep.subr.mxu0 0.0
        %1709 = vmatpush2.msra.mxu0 0.0
        %1710 = vmatprep.subr.mxu0 0.0
        %1711 = vmatpush2.msra.mxu0 0.0
        %1712 = vmatprep.subr.mxu0 0.0
        %1713 = vmatpush2.msra.mxu0 0.0
        %1714 = vmatprep.subr.mxu0 0.0
        %1715 = vmatpush2.msra.mxu0 0.0
        %1716 = vmatprep.mubr.f32.mxu0 0.0
        %1717 = vmatmul.mubr.f32.gmra.mxu0 %v1650
        %v1718 = vpop.f32.mrf.mxu0
        %v1719 = vadd.f32 %v1647, %v1718
        %v1720 = vpop.f32.mrf.mxu0
        %1721 = vdwg.mxu0
        %v1722 = vmax.f32 %v1719, 0.0
        %v1723 = vlaneseq
        %v1724 = vshrl.u32 %v1723, 7
        %v1725 = vsub.s32 3, %v1724
        %v1726 = vrot.slane %v362, %v1725
        %1727 = vmatprep.subr.mxu0 0.0
        %1728 = vmatpush1.msra.mxu0 %v360
        %1729 = vmatprep.subr.mxu0 0.0
        %1730 = vmatpush1.msra.mxu0 %v359
        %1731 = vmatprep.subr.mxu0 0.0
        %1732 = vmatpush1.msra.mxu0 %v358
        %1733 = vmatprep.subr.mxu0 0.0
        %1734 = vmatpush1.msra.mxu0 %v357
        %1735 = vmatprep.subr.mxu0 0.0
        %1736 = vmatpush1.msra.mxu0 %v356
        %1737 = vmatprep.subr.mxu0 0.0
        %1738 = vmatpush1.msra.mxu0 %v355
        %1739 = vmatprep.subr.mxu0 0.0
        %1740 = vmatpush1.msra.mxu0 %v354
        %1741 = vmatprep.subr.mxu0 0.0
        %1742 = vmatpush1.msra.mxu0 %v353
        %1743 = vmatprep.subr.mxu0 0.0
        %1744 = vmatpush1.msra.mxu0 %v352
        %1745 = vmatprep.subr.mxu0 0.0
        %1746 = vmatpush1.msra.mxu0 %v351
        %1747 = vmatprep.subr.mxu0 0.0
        %1748 = vmatpush1.msra.mxu0 %v350
        %1749 = vmatprep.subr.mxu0 0.0
        %1750 = vmatpush1.msra.mxu0 %v349
        %1751 = vmatprep.subr.mxu0 0.0
        %1752 = vmatpush1.msra.mxu0 %v348
        %1753 = vmatprep.subr.mxu0 0.0
        %1754 = vmatpush1.msra.mxu0 %v347
        %1755 = vmatprep.subr.mxu0 0.0
        %1756 = vmatpush1.msra.mxu0 %v346
        %1757 = vmatprep.subr.mxu0 0.0
        %1758 = vmatpush1.msra.mxu0 %v345
        %1759 = vmatprep.subr.mxu0 0.0
        %1760 = vmatpush2.msra.mxu0 0.0
        %1761 = vmatprep.subr.mxu0 0.0
        %1762 = vmatpush2.msra.mxu0 0.0
        %1763 = vmatprep.subr.mxu0 0.0
        %1764 = vmatpush2.msra.mxu0 0.0
        %1765 = vmatprep.subr.mxu0 0.0
        %1766 = vmatpush2.msra.mxu0 0.0
        %1767 = vmatprep.subr.mxu0 0.0
        %1768 = vmatpush2.msra.mxu0 0.0
        %1769 = vmatprep.subr.mxu0 0.0
        %1770 = vmatpush2.msra.mxu0 0.0
        %1771 = vmatprep.subr.mxu0 0.0
        %1772 = vmatpush2.msra.mxu0 0.0
        %1773 = vmatprep.subr.mxu0 0.0
        %1774 = vmatpush2.msra.mxu0 0.0
        %1775 = vmatprep.subr.mxu0 0.0
        %1776 = vmatpush2.msra.mxu0 0.0
        %1777 = vmatprep.subr.mxu0 0.0
        %1778 = vmatpush2.msra.mxu0 0.0
        %1779 = vmatprep.subr.mxu0 0.0
        %1780 = vmatpush2.msra.mxu0 0.0
        %1781 = vmatprep.subr.mxu0 0.0
        %1782 = vmatpush2.msra.mxu0 0.0
        %1783 = vmatprep.subr.mxu0 0.0
        %1784 = vmatpush2.msra.mxu0 0.0
        %1785 = vmatprep.subr.mxu0 0.0
        %1786 = vmatpush2.msra.mxu0 0.0
        %1787 = vmatprep.subr.mxu0 0.0
        %1788 = vmatpush2.msra.mxu0 0.0
        %1789 = vmatprep.subr.mxu0 0.0
        %1790 = vmatpush2.msra.mxu0 0.0
        %1791 = vmatprep.mubr.f32.mxu0 0.0
        %1792 = vmatmul.mubr.f32.gmra.mxu0 %v1722
        %v1793 = vpop.f32.mrf.mxu0
        %v1794 = vadd.f32 %v1726, %v1793
        %v1795 = vpop.f32.mrf.mxu0
        %1796 = vdwg.mxu0
        %v1797 = vadd.f32 %v1794, %v1642
        %v1798 = vsel %vm363, %v1797, 0.0
        %1799 = vadd.xlane.f32.xlu0 %v1798
        %v1800 = vpop.xlane.xlu0 %1799
        %v1801 = vmul.f32 %v1800, %v1622
        %v1802 = vsub.f32 %v1797, %v1801
        %v1803 = vmul.f32 %v1802, %v1802
        %v1804 = vsel %vm363, %v1803, 0.0
        %1805 = vadd.xlane.f32.xlu0 %v1804
        %v1806 = vpop.xlane.xlu0 %1805
        %v1807 = vmul.f32 %v1806, %v1622
        %v1808 = vadd.f32 %v1807, 1e-05
        %v1809 = vrsqrt.pop %v1808
        %v1810 = vmul.f32 %v1802, %v1809
        %v1811 = vlaneseq
        %v1812 = vshrl.u32 %v1811, 7
        %v1813 = vsub.s32 4, %v1812
        %v1814 = vrot.slane %v362, %v1813
        %v1815 = vmul.f32 %v1810, %v1814
        %v1816 = vlaneseq
        %v1817 = vshrl.u32 %v1816, 7
        %v1818 = vsub.s32 5, %v1817
        %v1819 = vrot.slane %v362, %v1818
        %v1820 = vadd.f32 %v1815, %v1819
        %s1821 = scalar_lea.vmem %s2, 128
        %v1822 = vld [vmem:[%s1821] sm:$0xff]
        %v1823 = vld [vmem:[%s1821 + $0x8] sm:$0xff]
        %v1824 = vld [vmem:[%s1821 + $0x10] sm:$0xff]
        %v1825 = vld [vmem:[%s1821 + $0x18] sm:$0xff]
        %v1826 = vld [vmem:[%s1821 + $0x20] sm:$0xff]
        %v1827 = vld [vmem:[%s1821 + $0x28] sm:$0xff]
        %v1828 = vld [vmem:[%s1821 + $0x30] sm:$0xff]
        %v1829 = vld [vmem:[%s1821 + $0x38] sm:$0xff]
        %v1830 = vld [vmem:[%s1821 + $0x40] sm:$0xff]
        %v1831 = vld [vmem:[%s1821 + $0x48] sm:$0xff]
        %v1832 = vld [vmem:[%s1821 + $0x50] sm:$0xff]
        %v1833 = vld [vmem:[%s1821 + $0x58] sm:$0xff]
        %v1834 = vld [vmem:[%s1821 + $0x60] sm:$0xff]
        %v1835 = vld [vmem:[%s1821 + $0x68] sm:$0xff]
        %v1836 = vld [vmem:[%s1821 + $0x70] sm:$0xff]
        %v1837 = vld [vmem:[%s1821 + $0x78] sm:$0xff]
        %s1838 = scalar_lea.vmem %s3, 32
        %v1839 = vld [vmem:[%s1838] sm:$0xff]
        %v1840 = vld [vmem:[%s1838 + $0x8] sm:$0xff]
        %v1841 = vld [vmem:[%s1838 + $0x10] sm:$0xff]
        %v1842 = vld [vmem:[%s1838 + $0x18] sm:$0xff]
        %s1843 = scalar_lea.vmem %s4, 32
        %v1844 = vld [vmem:[%s1843] sm:$0xff]
        %v1845 = vld [vmem:[%s1843 + $0x8] sm:$0xff]
        %v1846 = vld [vmem:[%s1843 + $0x10] sm:$0xff]
        %v1847 = vld [vmem:[%s1843 + $0x18] sm:$0xff]
        %s1848 = scalar_lea.vmem %s5, 128
        %v1849 = vld [vmem:[%s1848] sm:$0xff]
        %v1850 = vld [vmem:[%s1848 + $0x8] sm:$0xff]
        %v1851 = vld [vmem:[%s1848 + $0x10] sm:$0xff]
        %v1852 = vld [vmem:[%s1848 + $0x18] sm:$0xff]
        %v1853 = vld [vmem:[%s1848 + $0x20] sm:$0xff]
        %v1854 = vld [vmem:[%s1848 + $0x28] sm:$0xff]
        %v1855 = vld [vmem:[%s1848 + $0x30] sm:$0xff]
        %v1856 = vld [vmem:[%s1848 + $0x38] sm:$0xff]
        %v1857 = vld [vmem:[%s1848 + $0x40] sm:$0xff]
        %v1858 = vld [vmem:[%s1848 + $0x48] sm:$0xff]
        %v1859 = vld [vmem:[%s1848 + $0x50] sm:$0xff]
        %v1860 = vld [vmem:[%s1848 + $0x58] sm:$0xff]
        %v1861 = vld [vmem:[%s1848 + $0x60] sm:$0xff]
        %v1862 = vld [vmem:[%s1848 + $0x68] sm:$0xff]
        %v1863 = vld [vmem:[%s1848 + $0x70] sm:$0xff]
        %v1864 = vld [vmem:[%s1848 + $0x78] sm:$0xff]
        %s1865 = scalar_lea.vmem %s6, 1
        %v1866 = vld [vmem:[%s1865] sm:$0x1]
        %s1867 = scalar_lea.vmem %s7, 8
        %v1868 = vld [vmem:[%s1867] sm:$0x3f]
        %v1870 = vsel %vm363, %v1820, 0
        %1872 = vmatprep.subr.mxu0 0.0
        %1873 = vmatpush1.msra.mxu0 0.0
        %1874 = vmatprep.subr.mxu0 0.0
        %1875 = vmatpush1.msra.mxu0 0.0
        %1876 = vmatprep.subr.mxu0 0.0
        %1877 = vmatpush1.msra.mxu0 0.0
        %1878 = vmatprep.subr.mxu0 0.0
        %1879 = vmatpush1.msra.mxu0 0.0
        %1880 = vmatprep.subr.mxu0 0.0
        %1881 = vmatpush1.msra.mxu0 0.0
        %1882 = vmatprep.subr.mxu0 0.0
        %1883 = vmatpush1.msra.mxu0 0.0
        %1884 = vmatprep.subr.mxu0 0.0
        %1885 = vmatpush1.msra.mxu0 0.0
        %1886 = vmatprep.subr.mxu0 0.0
        %1887 = vmatpush1.msra.mxu0 0.0
        %1888 = vmatprep.subr.mxu0 0.0
        %1889 = vmatpush1.msra.mxu0 0.0
        %1890 = vmatprep.subr.mxu0 0.0
        %1891 = vmatpush1.msra.mxu0 0.0
        %1892 = vmatprep.subr.mxu0 0.0
        %1893 = vmatpush1.msra.mxu0 0.0
        %1894 = vmatprep.subr.mxu0 0.0
        %1895 = vmatpush1.msra.mxu0 0.0
        %1896 = vmatprep.subr.mxu0 0.0
        %1897 = vmatpush1.msra.mxu0 %v1825
        %1898 = vmatprep.subr.mxu0 0.0
        %1899 = vmatpush1.msra.mxu0 %v1824
        %1900 = vmatprep.subr.mxu0 0.0
        %1901 = vmatpush1.msra.mxu0 %v1823
        %1902 = vmatprep.subr.mxu0 0.0
        %1903 = vmatpush1.msra.mxu0 %v1822
        %1904 = vmatprep.subr.mxu0 0.0
        %1905 = vmatpush2.msra.mxu0 0.0
        %1906 = vmatprep.subr.mxu0 0.0
        %1907 = vmatpush2.msra.mxu0 0.0
        %1908 = vmatprep.subr.mxu0 0.0
        %1909 = vmatpush2.msra.mxu0 0.0
        %1910 = vmatprep.subr.mxu0 0.0
        %1911 = vmatpush2.msra.mxu0 0.0
        %1912 = vmatprep.subr.mxu0 0.0
        %1913 = vmatpush2.msra.mxu0 0.0
        %1914 = vmatprep.subr.mxu0 0.0
        %1915 = vmatpush2.msra.mxu0 0.0
        %1916 = vmatprep.subr.mxu0 0.0
        %1917 = vmatpush2.msra.mxu0 0.0
        %1918 = vmatprep.subr.mxu0 0.0
        %1919 = vmatpush2.msra.mxu0 0.0
        %1920 = vmatprep.subr.mxu0 0.0
        %1921 = vmatpush2.msra.mxu0 0.0
        %1922 = vmatprep.subr.mxu0 0.0
        %1923 = vmatpush2.msra.mxu0 0.0
        %1924 = vmatprep.subr.mxu0 0.0
        %1925 = vmatpush2.msra.mxu0 0.0
        %1926 = vmatprep.subr.mxu0 0.0
        %1927 = vmatpush2.msra.mxu0 0.0
        %1928 = vmatprep.subr.mxu0 0.0
        %1929 = vmatpush2.msra.mxu0 0.0
        %1930 = vmatprep.subr.mxu0 0.0
        %1931 = vmatpush2.msra.mxu0 0.0
        %1932 = vmatprep.subr.mxu0 0.0
        %1933 = vmatpush2.msra.mxu0 0.0
        %1934 = vmatprep.subr.mxu0 0.0
        %1935 = vmatpush2.msra.mxu0 0.0
        %1936 = vmatprep.mubr.f32.mxu0 0.0
        %1937 = vmatmul.mubr.f32.gmra.mxu0 %v1870
        %v1938 = vpop.f32.mrf.mxu0
        %v1939 = vadd.f32 0.0, %v1938
        %v1940 = vpop.f32.mrf.mxu0
        %1941 = vdwg.mxu0
        %1942 = vmatprep.subr.mxu0 0.0
        %1943 = vmatpush1.msra.mxu0 0.0
        %1944 = vmatprep.subr.mxu0 0.0
        %1945 = vmatpush1.msra.mxu0 0.0
        %1946 = vmatprep.subr.mxu0 0.0
        %1947 = vmatpush1.msra.mxu0 0.0
        %1948 = vmatprep.subr.mxu0 0.0
        %1949 = vmatpush1.msra.mxu0 0.0
        %1950 = vmatprep.subr.mxu0 0.0
        %1951 = vmatpush1.msra.mxu0 0.0
        %1952 = vmatprep.subr.mxu0 0.0
        %1953 = vmatpush1.msra.mxu0 0.0
        %1954 = vmatprep.subr.mxu0 0.0
        %1955 = vmatpush1.msra.mxu0 0.0
        %1956 = vmatprep.subr.mxu0 0.0
        %1957 = vmatpush1.msra.mxu0 0.0
        %1958 = vmatprep.subr.mxu0 0.0
        %1959 = vmatpush1.msra.mxu0 0.0
        %1960 = vmatprep.subr.mxu0 0.0
        %1961 = vmatpush1.msra.mxu0 0.0
        %1962 = vmatprep.subr.mxu0 0.0
        %1963 = vmatpush1.msra.mxu0 0.0
        %1964 = vmatprep.subr.mxu0 0.0
        %1965 = vmatpush1.msra.mxu0 0.0
        %1966 = vmatprep.subr.mxu0 0.0
        %1967 = vmatpush1.msra.mxu0 %v1829
        %1968 = vmatprep.subr.mxu0 0.0
        %1969 = vmatpush1.msra.mxu0 %v1828
        %1970 = vmatprep.subr.mxu0 0.0
        %1971 = vmatpush1.msra.mxu0 %v1827
        %1972 = vmatprep.subr.mxu0 0.0
        %1973 = vmatpush1.msra.mxu0 %v1826
        %1974 = vmatprep.subr.mxu0 0.0
        %1975 = vmatpush2.msra.mxu0 0.0
        %1976 = vmatprep.subr.mxu0 0.0
        %1977 = vmatpush2.msra.mxu0 0.0
        %1978 = vmatprep.subr.mxu0 0.0
        %1979 = vmatpush2.msra.mxu0 0.0
        %1980 = vmatprep.subr.mxu0 0.0
        %1981 = vmatpush2.msra.mxu0 0.0
        %1982 = vmatprep.subr.mxu0 0.0
        %1983 = vmatpush2.msra.mxu0 0.0
        %1984 = vmatprep.subr.mxu0 0.0
        %1985 = vmatpush2.msra.mxu0 0.0
        %1986 = vmatprep.subr.mxu0 0.0
        %1987 = vmatpush2.msra.mxu0 0.0
        %1988 = vmatprep.subr.mxu0 0.0
        %1989 = vmatpush2.msra.mxu0 0.0
        %1990 = vmatprep.subr.mxu0 0.0
        %1991 = vmatpush2.msra.mxu0 0.0
        %1992 = vmatprep.subr.mxu0 0.0
        %1993 = vmatpush2.msra.mxu0 0.0
        %1994 = vmatprep.subr.mxu0 0.0
        %1995 = vmatpush2.msra.mxu0 0.0
        %1996 = vmatprep.subr.mxu0 0.0
        %1997 = vmatpush2.msra.mxu0 0.0
        %1998 = vmatprep.subr.mxu0 0.0
        %1999 = vmatpush2.msra.mxu0 0.0
        %2000 = vmatprep.subr.mxu0 0.0
        %2001 = vmatpush2.msra.mxu0 0.0
        %2002 = vmatprep.subr.mxu0 0.0
        %2003 = vmatpush2.msra.mxu0 0.0
        %2004 = vmatprep.subr.mxu0 0.0
        %2005 = vmatpush2.msra.mxu0 0.0
        %2006 = vmatprep.mubr.f32.mxu0 0.0
        %2007 = vmatmul.mubr.f32.gmra.mxu0 %v1870
        %v2008 = vpop.f32.mrf.mxu0
        %v2009 = vadd.f32 0.0, %v2008
        %v2010 = vpop.f32.mrf.mxu0
        %2011 = vdwg.mxu0
        %2012 = vmatprep.subr.mxu0 0.0
        %2013 = vmatpush1.msra.mxu0 0.0
        %2014 = vmatprep.subr.mxu0 0.0
        %2015 = vmatpush1.msra.mxu0 0.0
        %2016 = vmatprep.subr.mxu0 0.0
        %2017 = vmatpush1.msra.mxu0 0.0
        %2018 = vmatprep.subr.mxu0 0.0
        %2019 = vmatpush1.msra.mxu0 0.0
        %2020 = vmatprep.subr.mxu0 0.0
        %2021 = vmatpush1.msra.mxu0 0.0
        %2022 = vmatprep.subr.mxu0 0.0
        %2023 = vmatpush1.msra.mxu0 0.0
        %2024 = vmatprep.subr.mxu0 0.0
        %2025 = vmatpush1.msra.mxu0 0.0
        %2026 = vmatprep.subr.mxu0 0.0
        %2027 = vmatpush1.msra.mxu0 0.0
        %2028 = vmatprep.subr.mxu0 0.0
        %2029 = vmatpush1.msra.mxu0 0.0
        %2030 = vmatprep.subr.mxu0 0.0
        %2031 = vmatpush1.msra.mxu0 0.0
        %2032 = vmatprep.subr.mxu0 0.0
        %2033 = vmatpush1.msra.mxu0 0.0
        %2034 = vmatprep.subr.mxu0 0.0
        %2035 = vmatpush1.msra.mxu0 0.0
        %2036 = vmatprep.subr.mxu0 0.0
        %2037 = vmatpush1.msra.mxu0 %v1833
        %2038 = vmatprep.subr.mxu0 0.0
        %2039 = vmatpush1.msra.mxu0 %v1832
        %2040 = vmatprep.subr.mxu0 0.0
        %2041 = vmatpush1.msra.mxu0 %v1831
        %2042 = vmatprep.subr.mxu0 0.0
        %2043 = vmatpush1.msra.mxu0 %v1830
        %2044 = vmatprep.subr.mxu0 0.0
        %2045 = vmatpush2.msra.mxu0 0.0
        %2046 = vmatprep.subr.mxu0 0.0
        %2047 = vmatpush2.msra.mxu0 0.0
        %2048 = vmatprep.subr.mxu0 0.0
        %2049 = vmatpush2.msra.mxu0 0.0
        %2050 = vmatprep.subr.mxu0 0.0
        %2051 = vmatpush2.msra.mxu0 0.0
        %2052 = vmatprep.subr.mxu0 0.0
        %2053 = vmatpush2.msra.mxu0 0.0
        %2054 = vmatprep.subr.mxu0 0.0
        %2055 = vmatpush2.msra.mxu0 0.0
        %2056 = vmatprep.subr.mxu0 0.0
        %2057 = vmatpush2.msra.mxu0 0.0
        %2058 = vmatprep.subr.mxu0 0.0
        %2059 = vmatpush2.msra.mxu0 0.0
        %2060 = vmatprep.subr.mxu0 0.0
        %2061 = vmatpush2.msra.mxu0 0.0
        %2062 = vmatprep.subr.mxu0 0.0
        %2063 = vmatpush2.msra.mxu0 0.0
        %2064 = vmatprep.subr.mxu0 0.0
        %2065 = vmatpush2.msra.mxu0 0.0
        %2066 = vmatprep.subr.mxu0 0.0
        %2067 = vmatpush2.msra.mxu0 0.0
        %2068 = vmatprep.subr.mxu0 0.0
        %2069 = vmatpush2.msra.mxu0 0.0
        %2070 = vmatprep.subr.mxu0 0.0
        %2071 = vmatpush2.msra.mxu0 0.0
        %2072 = vmatprep.subr.mxu0 0.0
        %2073 = vmatpush2.msra.mxu0 0.0
        %2074 = vmatprep.subr.mxu0 0.0
        %2075 = vmatpush2.msra.mxu0 0.0
        %2076 = vmatprep.mubr.f32.mxu0 0.0
        %2077 = vmatmul.mubr.f32.gmra.mxu0 %v1870
        %v2078 = vpop.f32.mrf.mxu0
        %v2079 = vadd.f32 0.0, %v2078
        %v2080 = vpop.f32.mrf.mxu0
        %2081 = vdwg.mxu0
        %2082 = vmatprep.subr.mxu0 0.0
        %2083 = vmatpush1.msra.mxu0 0.0
        %2084 = vmatprep.subr.mxu0 0.0
        %2085 = vmatpush1.msra.mxu0 0.0
        %2086 = vmatprep.subr.mxu0 0.0
        %2087 = vmatpush1.msra.mxu0 0.0
        %2088 = vmatprep.subr.mxu0 0.0
        %2089 = vmatpush1.msra.mxu0 0.0
        %2090 = vmatprep.subr.mxu0 0.0
        %2091 = vmatpush1.msra.mxu0 0.0
        %2092 = vmatprep.subr.mxu0 0.0
        %2093 = vmatpush1.msra.mxu0 0.0
        %2094 = vmatprep.subr.mxu0 0.0
        %2095 = vmatpush1.msra.mxu0 0.0
        %2096 = vmatprep.subr.mxu0 0.0
        %2097 = vmatpush1.msra.mxu0 0.0
        %2098 = vmatprep.subr.mxu0 0.0
        %2099 = vmatpush1.msra.mxu0 0.0
        %2100 = vmatprep.subr.mxu0 0.0
        %2101 = vmatpush1.msra.mxu0 0.0
        %2102 = vmatprep.subr.mxu0 0.0
        %2103 = vmatpush1.msra.mxu0 0.0
        %2104 = vmatprep.subr.mxu0 0.0
        %2105 = vmatpush1.msra.mxu0 0.0
        %2106 = vmatprep.subr.mxu0 0.0
        %2107 = vmatpush1.msra.mxu0 %v1837
        %2108 = vmatprep.subr.mxu0 0.0
        %2109 = vmatpush1.msra.mxu0 %v1836
        %2110 = vmatprep.subr.mxu0 0.0
        %2111 = vmatpush1.msra.mxu0 %v1835
        %2112 = vmatprep.subr.mxu0 0.0
        %2113 = vmatpush1.msra.mxu0 %v1834
        %2114 = vmatprep.subr.mxu0 0.0
        %2115 = vmatpush2.msra.mxu0 0.0
        %2116 = vmatprep.subr.mxu0 0.0
        %2117 = vmatpush2.msra.mxu0 0.0
        %2118 = vmatprep.subr.mxu0 0.0
        %2119 = vmatpush2.msra.mxu0 0.0
        %2120 = vmatprep.subr.mxu0 0.0
        %2121 = vmatpush2.msra.mxu0 0.0
        %2122 = vmatprep.subr.mxu0 0.0
        %2123 = vmatpush2.msra.mxu0 0.0
        %2124 = vmatprep.subr.mxu0 0.0
        %2125 = vmatpush2.msra.mxu0 0.0
        %2126 = vmatprep.subr.mxu0 0.0
        %2127 = vmatpush2.msra.mxu0 0.0
        %2128 = vmatprep.subr.mxu0 0.0
        %2129 = vmatpush2.msra.mxu0 0.0
        %2130 = vmatprep.subr.mxu0 0.0
        %2131 = vmatpush2.msra.mxu0 0.0
        %2132 = vmatprep.subr.mxu0 0.0
        %2133 = vmatpush2.msra.mxu0 0.0
        %2134 = vmatprep.subr.mxu0 0.0
        %2135 = vmatpush2.msra.mxu0 0.0
        %2136 = vmatprep.subr.mxu0 0.0
        %2137 = vmatpush2.msra.mxu0 0.0
        %2138 = vmatprep.subr.mxu0 0.0
        %2139 = vmatpush2.msra.mxu0 0.0
        %2140 = vmatprep.subr.mxu0 0.0
        %2141 = vmatpush2.msra.mxu0 0.0
        %2142 = vmatprep.subr.mxu0 0.0
        %2143 = vmatpush2.msra.mxu0 0.0
        %2144 = vmatprep.subr.mxu0 0.0
        %2145 = vmatpush2.msra.mxu0 0.0
        %2146 = vmatprep.mubr.f32.mxu0 0.0
        %2147 = vmatmul.mubr.f32.gmra.mxu0 %v1870
        %v2148 = vpop.f32.mrf.mxu0
        %v2149 = vadd.f32 0.0, %v2148
        %v2150 = vpop.f32.mrf.mxu0
        %2151 = vdwg.mxu0
        %2153 = vrot.lane.b32.xlu0 %v1939, 120
        %v2154 = vpop.permute.xlu0 %2153
        %v2155 = vsel %vm650, %v1939, 0
        %v2157 = vsel %vm650, %v2154, 0
        %2159 = vmatprep.subr.mxu0 0.0
        %2160 = vmatpush1.xpose.msra.mxu0 0.0
        %2161 = vmatprep.subr.mxu0 0.0
        %2162 = vmatpush1.xpose.msra.mxu0 0.0
        %2163 = vmatprep.subr.mxu0 0.0
        %2164 = vmatpush1.xpose.msra.mxu0 0.0
        %2165 = vmatprep.subr.mxu0 0.0
        %2166 = vmatpush1.xpose.msra.mxu0 0.0
        %2167 = vmatprep.subr.mxu0 0.0
        %2168 = vmatpush1.xpose.msra.mxu0 0.0
        %2169 = vmatprep.subr.mxu0 0.0
        %2170 = vmatpush1.xpose.msra.mxu0 0.0
        %2171 = vmatprep.subr.mxu0 0.0
        %2172 = vmatpush1.xpose.msra.mxu0 0.0
        %2173 = vmatprep.subr.mxu0 0.0
        %2174 = vmatpush1.xpose.msra.mxu0 0.0
        %2175 = vmatprep.subr.mxu0 0.0
        %2176 = vmatpush1.xpose.msra.mxu0 0.0
        %2177 = vmatprep.subr.mxu0 0.0
        %2178 = vmatpush1.xpose.msra.mxu0 0.0
        %2179 = vmatprep.subr.mxu0 0.0
        %2180 = vmatpush1.xpose.msra.mxu0 0.0
        %2181 = vmatprep.subr.mxu0 0.0
        %2182 = vmatpush1.xpose.msra.mxu0 0.0
        %2183 = vmatprep.subr.mxu0 0.0
        %2184 = vmatpush1.xpose.msra.mxu0 0.0
        %2185 = vmatprep.subr.mxu0 0.0
        %2186 = vmatpush1.xpose.msra.mxu0 0.0
        %2187 = vmatprep.subr.mxu0 0.0
        %2188 = vmatpush1.xpose.msra.mxu0 0.0
        %2189 = vmatprep.subr.mxu0 0.0
        %2190 = vmatpush1.xpose.msra.mxu0 %v2157
        %2191 = vmatprep.subr.mxu0 0.0
        %2192 = vmatpush2.xpose.msra.mxu0 0.0
        %2193 = vmatprep.subr.mxu0 0.0
        %2194 = vmatpush2.xpose.msra.mxu0 0.0
        %2195 = vmatprep.subr.mxu0 0.0
        %2196 = vmatpush2.xpose.msra.mxu0 0.0
        %2197 = vmatprep.subr.mxu0 0.0
        %2198 = vmatpush2.xpose.msra.mxu0 0.0
        %2199 = vmatprep.subr.mxu0 0.0
        %2200 = vmatpush2.xpose.msra.mxu0 0.0
        %2201 = vmatprep.subr.mxu0 0.0
        %2202 = vmatpush2.xpose.msra.mxu0 0.0
        %2203 = vmatprep.subr.mxu0 0.0
        %2204 = vmatpush2.xpose.msra.mxu0 0.0
        %2205 = vmatprep.subr.mxu0 0.0
        %2206 = vmatpush2.xpose.msra.mxu0 0.0
        %2207 = vmatprep.subr.mxu0 0.0
        %2208 = vmatpush2.xpose.msra.mxu0 0.0
        %2209 = vmatprep.subr.mxu0 0.0
        %2210 = vmatpush2.xpose.msra.mxu0 0.0
        %2211 = vmatprep.subr.mxu0 0.0
        %2212 = vmatpush2.xpose.msra.mxu0 0.0
        %2213 = vmatprep.subr.mxu0 0.0
        %2214 = vmatpush2.xpose.msra.mxu0 0.0
        %2215 = vmatprep.subr.mxu0 0.0
        %2216 = vmatpush2.xpose.msra.mxu0 0.0
        %2217 = vmatprep.subr.mxu0 0.0
        %2218 = vmatpush2.xpose.msra.mxu0 0.0
        %2219 = vmatprep.subr.mxu0 0.0
        %2220 = vmatpush2.xpose.msra.mxu0 0.0
        %2221 = vmatprep.subr.mxu0 0.0
        %2222 = vmatpush2.xpose.msra.mxu0 0.0
        %2223 = vmatprep.mubr.f32.mxu0 0.0
        %2224 = vmatmul.mubr.f32.gmra.mxu0 %v2155
        %v2225 = vpop.f32.mrf.mxu0
        %v2226 = vadd.f32 0.0, %v2225
        %v2227 = vpop.f32.mrf.mxu0
        %2228 = vdwg.mxu0
        %2230 = vrot.lane.b32.xlu0 %v2009, 120
        %v2231 = vpop.permute.xlu0 %2230
        %v2232 = vsel %vm650, %v2009, 0
        %v2234 = vsel %vm650, %v2231, 0
        %2236 = vmatprep.subr.mxu0 0.0
        %2237 = vmatpush1.xpose.msra.mxu0 0.0
        %2238 = vmatprep.subr.mxu0 0.0
        %2239 = vmatpush1.xpose.msra.mxu0 0.0
        %2240 = vmatprep.subr.mxu0 0.0
        %2241 = vmatpush1.xpose.msra.mxu0 0.0
        %2242 = vmatprep.subr.mxu0 0.0
        %2243 = vmatpush1.xpose.msra.mxu0 0.0
        %2244 = vmatprep.subr.mxu0 0.0
        %2245 = vmatpush1.xpose.msra.mxu0 0.0
        %2246 = vmatprep.subr.mxu0 0.0
        %2247 = vmatpush1.xpose.msra.mxu0 0.0
        %2248 = vmatprep.subr.mxu0 0.0
        %2249 = vmatpush1.xpose.msra.mxu0 0.0
        %2250 = vmatprep.subr.mxu0 0.0
        %2251 = vmatpush1.xpose.msra.mxu0 0.0
        %2252 = vmatprep.subr.mxu0 0.0
        %2253 = vmatpush1.xpose.msra.mxu0 0.0
        %2254 = vmatprep.subr.mxu0 0.0
        %2255 = vmatpush1.xpose.msra.mxu0 0.0
        %2256 = vmatprep.subr.mxu0 0.0
        %2257 = vmatpush1.xpose.msra.mxu0 0.0
        %2258 = vmatprep.subr.mxu0 0.0
        %2259 = vmatpush1.xpose.msra.mxu0 0.0
        %2260 = vmatprep.subr.mxu0 0.0
        %2261 = vmatpush1.xpose.msra.mxu0 0.0
        %2262 = vmatprep.subr.mxu0 0.0
        %2263 = vmatpush1.xpose.msra.mxu0 0.0
        %2264 = vmatprep.subr.mxu0 0.0
        %2265 = vmatpush1.xpose.msra.mxu0 0.0
        %2266 = vmatprep.subr.mxu0 0.0
        %2267 = vmatpush1.xpose.msra.mxu0 %v2234
        %2268 = vmatprep.subr.mxu0 0.0
        %2269 = vmatpush2.xpose.msra.mxu0 0.0
        %2270 = vmatprep.subr.mxu0 0.0
        %2271 = vmatpush2.xpose.msra.mxu0 0.0
        %2272 = vmatprep.subr.mxu0 0.0
        %2273 = vmatpush2.xpose.msra.mxu0 0.0
        %2274 = vmatprep.subr.mxu0 0.0
        %2275 = vmatpush2.xpose.msra.mxu0 0.0
        %2276 = vmatprep.subr.mxu0 0.0
        %2277 = vmatpush2.xpose.msra.mxu0 0.0
        %2278 = vmatprep.subr.mxu0 0.0
        %2279 = vmatpush2.xpose.msra.mxu0 0.0
        %2280 = vmatprep.subr.mxu0 0.0
        %2281 = vmatpush2.xpose.msra.mxu0 0.0
        %2282 = vmatprep.subr.mxu0 0.0
        %2283 = vmatpush2.xpose.msra.mxu0 0.0
        %2284 = vmatprep.subr.mxu0 0.0
        %2285 = vmatpush2.xpose.msra.mxu0 0.0
        %2286 = vmatprep.subr.mxu0 0.0
        %2287 = vmatpush2.xpose.msra.mxu0 0.0
        %2288 = vmatprep.subr.mxu0 0.0
        %2289 = vmatpush2.xpose.msra.mxu0 0.0
        %2290 = vmatprep.subr.mxu0 0.0
        %2291 = vmatpush2.xpose.msra.mxu0 0.0
        %2292 = vmatprep.subr.mxu0 0.0
        %2293 = vmatpush2.xpose.msra.mxu0 0.0
        %2294 = vmatprep.subr.mxu0 0.0
        %2295 = vmatpush2.xpose.msra.mxu0 0.0
        %2296 = vmatprep.subr.mxu0 0.0
        %2297 = vmatpush2.xpose.msra.mxu0 0.0
        %2298 = vmatprep.subr.mxu0 0.0
        %2299 = vmatpush2.xpose.msra.mxu0 0.0
        %2300 = vmatprep.mubr.f32.mxu0 0.0
        %2301 = vmatmul.mubr.f32.gmra.mxu0 %v2232
        %v2302 = vpop.f32.mrf.mxu0
        %v2303 = vadd.f32 0.0, %v2302
        %v2304 = vpop.f32.mrf.mxu0
        %2305 = vdwg.mxu0
        %2307 = vrot.lane.b32.xlu0 %v2079, 120
        %v2308 = vpop.permute.xlu0 %2307
        %v2309 = vsel %vm650, %v2079, 0
        %v2311 = vsel %vm650, %v2308, 0
        %2313 = vmatprep.subr.mxu0 0.0
        %2314 = vmatpush1.xpose.msra.mxu0 0.0
        %2315 = vmatprep.subr.mxu0 0.0
        %2316 = vmatpush1.xpose.msra.mxu0 0.0
        %2317 = vmatprep.subr.mxu0 0.0
        %2318 = vmatpush1.xpose.msra.mxu0 0.0
        %2319 = vmatprep.subr.mxu0 0.0
        %2320 = vmatpush1.xpose.msra.mxu0 0.0
        %2321 = vmatprep.subr.mxu0 0.0
        %2322 = vmatpush1.xpose.msra.mxu0 0.0
        %2323 = vmatprep.subr.mxu0 0.0
        %2324 = vmatpush1.xpose.msra.mxu0 0.0
        %2325 = vmatprep.subr.mxu0 0.0
        %2326 = vmatpush1.xpose.msra.mxu0 0.0
        %2327 = vmatprep.subr.mxu0 0.0
        %2328 = vmatpush1.xpose.msra.mxu0 0.0
        %2329 = vmatprep.subr.mxu0 0.0
        %2330 = vmatpush1.xpose.msra.mxu0 0.0
        %2331 = vmatprep.subr.mxu0 0.0
        %2332 = vmatpush1.xpose.msra.mxu0 0.0
        %2333 = vmatprep.subr.mxu0 0.0
        %2334 = vmatpush1.xpose.msra.mxu0 0.0
        %2335 = vmatprep.subr.mxu0 0.0
        %2336 = vmatpush1.xpose.msra.mxu0 0.0
        %2337 = vmatprep.subr.mxu0 0.0
        %2338 = vmatpush1.xpose.msra.mxu0 0.0
        %2339 = vmatprep.subr.mxu0 0.0
        %2340 = vmatpush1.xpose.msra.mxu0 0.0
        %2341 = vmatprep.subr.mxu0 0.0
        %2342 = vmatpush1.xpose.msra.mxu0 0.0
        %2343 = vmatprep.subr.mxu0 0.0
        %2344 = vmatpush1.xpose.msra.mxu0 %v2311
        %2345 = vmatprep.subr.mxu0 0.0
        %2346 = vmatpush2.xpose.msra.mxu0 0.0
        %2347 = vmatprep.subr.mxu0 0.0
        %2348 = vmatpush2.xpose.msra.mxu0 0.0
        %2349 = vmatprep.subr.mxu0 0.0
        %2350 = vmatpush2.xpose.msra.mxu0 0.0
        %2351 = vmatprep.subr.mxu0 0.0
        %2352 = vmatpush2.xpose.msra.mxu0 0.0
        %2353 = vmatprep.subr.mxu0 0.0
        %2354 = vmatpush2.xpose.msra.mxu0 0.0
        %2355 = vmatprep.subr.mxu0 0.0
        %2356 = vmatpush2.xpose.msra.mxu0 0.0
        %2357 = vmatprep.subr.mxu0 0.0
        %2358 = vmatpush2.xpose.msra.mxu0 0.0
        %2359 = vmatprep.subr.mxu0 0.0
        %2360 = vmatpush2.xpose.msra.mxu0 0.0
        %2361 = vmatprep.subr.mxu0 0.0
        %2362 = vmatpush2.xpose.msra.mxu0 0.0
        %2363 = vmatprep.subr.mxu0 0.0
        %2364 = vmatpush2.xpose.msra.mxu0 0.0
        %2365 = vmatprep.subr.mxu0 0.0
        %2366 = vmatpush2.xpose.msra.mxu0 0.0
        %2367 = vmatprep.subr.mxu0 0.0
        %2368 = vmatpush2.xpose.msra.mxu0 0.0
        %2369 = vmatprep.subr.mxu0 0.0
        %2370 = vmatpush2.xpose.msra.mxu0 0.0
        %2371 = vmatprep.subr.mxu0 0.0
        %2372 = vmatpush2.xpose.msra.mxu0 0.0
        %2373 = vmatprep.subr.mxu0 0.0
        %2374 = vmatpush2.xpose.msra.mxu0 0.0
        %2375 = vmatprep.subr.mxu0 0.0
        %2376 = vmatpush2.xpose.msra.mxu0 0.0
        %2377 = vmatprep.mubr.f32.mxu0 0.0
        %2378 = vmatmul.mubr.f32.gmra.mxu0 %v2309
        %v2379 = vpop.f32.mrf.mxu0
        %v2380 = vadd.f32 0.0, %v2379
        %v2381 = vpop.f32.mrf.mxu0
        %2382 = vdwg.mxu0
        %2384 = vrot.lane.b32.xlu0 %v2149, 120
        %v2385 = vpop.permute.xlu0 %2384
        %v2386 = vsel %vm650, %v2149, 0
        %v2388 = vsel %vm650, %v2385, 0
        %2390 = vmatprep.subr.mxu0 0.0
        %2391 = vmatpush1.xpose.msra.mxu0 0.0
        %2392 = vmatprep.subr.mxu0 0.0
        %2393 = vmatpush1.xpose.msra.mxu0 0.0
        %2394 = vmatprep.subr.mxu0 0.0
        %2395 = vmatpush1.xpose.msra.mxu0 0.0
        %2396 = vmatprep.subr.mxu0 0.0
        %2397 = vmatpush1.xpose.msra.mxu0 0.0
        %2398 = vmatprep.subr.mxu0 0.0
        %2399 = vmatpush1.xpose.msra.mxu0 0.0
        %2400 = vmatprep.subr.mxu0 0.0
        %2401 = vmatpush1.xpose.msra.mxu0 0.0
        %2402 = vmatprep.subr.mxu0 0.0
        %2403 = vmatpush1.xpose.msra.mxu0 0.0
        %2404 = vmatprep.subr.mxu0 0.0
        %2405 = vmatpush1.xpose.msra.mxu0 0.0
        %2406 = vmatprep.subr.mxu0 0.0
        %2407 = vmatpush1.xpose.msra.mxu0 0.0
        %2408 = vmatprep.subr.mxu0 0.0
        %2409 = vmatpush1.xpose.msra.mxu0 0.0
        %2410 = vmatprep.subr.mxu0 0.0
        %2411 = vmatpush1.xpose.msra.mxu0 0.0
        %2412 = vmatprep.subr.mxu0 0.0
        %2413 = vmatpush1.xpose.msra.mxu0 0.0
        %2414 = vmatprep.subr.mxu0 0.0
        %2415 = vmatpush1.xpose.msra.mxu0 0.0
        %2416 = vmatprep.subr.mxu0 0.0
        %2417 = vmatpush1.xpose.msra.mxu0 0.0
        %2418 = vmatprep.subr.mxu0 0.0
        %2419 = vmatpush1.xpose.msra.mxu0 0.0
        %2420 = vmatprep.subr.mxu0 0.0
        %2421 = vmatpush1.xpose.msra.mxu0 %v2388
        %2422 = vmatprep.subr.mxu0 0.0
        %2423 = vmatpush2.xpose.msra.mxu0 0.0
        %2424 = vmatprep.subr.mxu0 0.0
        %2425 = vmatpush2.xpose.msra.mxu0 0.0
        %2426 = vmatprep.subr.mxu0 0.0
        %2427 = vmatpush2.xpose.msra.mxu0 0.0
        %2428 = vmatprep.subr.mxu0 0.0
        %2429 = vmatpush2.xpose.msra.mxu0 0.0
        %2430 = vmatprep.subr.mxu0 0.0
        %2431 = vmatpush2.xpose.msra.mxu0 0.0
        %2432 = vmatprep.subr.mxu0 0.0
        %2433 = vmatpush2.xpose.msra.mxu0 0.0
        %2434 = vmatprep.subr.mxu0 0.0
        %2435 = vmatpush2.xpose.msra.mxu0 0.0
        %2436 = vmatprep.subr.mxu0 0.0
        %2437 = vmatpush2.xpose.msra.mxu0 0.0
        %2438 = vmatprep.subr.mxu0 0.0
        %2439 = vmatpush2.xpose.msra.mxu0 0.0
        %2440 = vmatprep.subr.mxu0 0.0
        %2441 = vmatpush2.xpose.msra.mxu0 0.0
        %2442 = vmatprep.subr.mxu0 0.0
        %2443 = vmatpush2.xpose.msra.mxu0 0.0
        %2444 = vmatprep.subr.mxu0 0.0
        %2445 = vmatpush2.xpose.msra.mxu0 0.0
        %2446 = vmatprep.subr.mxu0 0.0
        %2447 = vmatpush2.xpose.msra.mxu0 0.0
        %2448 = vmatprep.subr.mxu0 0.0
        %2449 = vmatpush2.xpose.msra.mxu0 0.0
        %2450 = vmatprep.subr.mxu0 0.0
        %2451 = vmatpush2.xpose.msra.mxu0 0.0
        %2452 = vmatprep.subr.mxu0 0.0
        %2453 = vmatpush2.xpose.msra.mxu0 0.0
        %2454 = vmatprep.mubr.f32.mxu0 0.0
        %2455 = vmatmul.mubr.f32.gmra.mxu0 %v2386
        %v2456 = vpop.f32.mrf.mxu0
        %v2457 = vadd.f32 0.0, %v2456
        %v2458 = vpop.f32.mrf.mxu0
        %2459 = vdwg.mxu0
        %v2460 = vsel %vm957, -1e+20, %v2226
        %v2461 = vsel %vm957, -1e+20, %v2303
        %v2462 = vsel %vm957, -1e+20, %v2380
        %v2463 = vsel %vm957, -1e+20, %v2457
        %v2464 = vmul.f32 %v2460, 0.17677669
        %v2465 = vmul.f32 %v2461, 0.17677669
        %v2466 = vmul.f32 %v2462, 0.17677669
        %v2467 = vmul.f32 %v2463, 0.17677669
        %v2468 = vsel %vm650, %v2464, -inf
        %2469 = vmax.xlane.f32.xlu0 %v2468
        %v2470 = vpop.xlane.xlu0 %2469
        %v2471 = vsel %vm650, %v2465, -inf
        %2472 = vmax.xlane.f32.xlu0 %v2471
        %v2473 = vpop.xlane.xlu0 %2472
        %v2474 = vsel %vm650, %v2466, -inf
        %2475 = vmax.xlane.f32.xlu0 %v2474
        %v2476 = vpop.xlane.xlu0 %2475
        %v2477 = vsel %vm650, %v2467, -inf
        %2478 = vmax.xlane.f32.xlu0 %v2477
        %v2479 = vpop.xlane.xlu0 %2478
        %v2480 = vsub.f32 %v2464, %v2470
        %v2481 = vsub.f32 %v2465, %v2473
        %v2482 = vsub.f32 %v2466, %v2476
        %v2483 = vsub.f32 %v2467, %v2479
        %v2484 = vmul.f32 %v2480, 1.442695
        %v2485 = vpow.pop %v2484
        %v2486 = vmul.f32 %v2481, 1.442695
        %v2487 = vpow.pop %v2486
        %v2488 = vmul.f32 %v2482, 1.442695
        %v2489 = vpow.pop %v2488
        %v2490 = vmul.f32 %v2483, 1.442695
        %v2491 = vpow.pop %v2490
        %v2492 = vsel %vm650, %v2485, 0.0
        %2493 = vadd.xlane.f32.xlu0 %v2492
        %v2494 = vpop.xlane.xlu0 %2493
        %v2495 = vsel %vm650, %v2487, 0.0
        %2496 = vadd.xlane.f32.xlu0 %v2495
        %v2497 = vpop.xlane.xlu0 %2496
        %v2498 = vsel %vm650, %v2489, 0.0
        %2499 = vadd.xlane.f32.xlu0 %v2498
        %v2500 = vpop.xlane.xlu0 %2499
        %v2501 = vsel %vm650, %v2491, 0.0
        %2502 = vadd.xlane.f32.xlu0 %v2501
        %v2503 = vpop.xlane.xlu0 %2502
        %v2504 = vrcp.pop %v2494
        %v2505 = vrcp.pop %v2497
        %v2506 = vrcp.pop %v2500
        %v2507 = vrcp.pop %v2503
        %v2508 = vmul.f32 %v2485, %v2504
        %v2509 = vmul.f32 %v2487, %v2505
        %v2510 = vmul.f32 %v2489, %v2506
        %v2511 = vmul.f32 %v2491, %v2507
        %2512 = vrot.lane.b32.xlu0 %v1939, 112
        %v2513 = vpop.permute.xlu0 %2512
        %v2516 = vsel %vm650, %v2508, 0
        %2518 = vmatprep.subr.mxu0 0.0
        %2519 = vmatpush1.msra.mxu0 0.0
        %2520 = vmatprep.subr.mxu0 0.0
        %2521 = vmatpush1.msra.mxu0 0.0
        %2522 = vmatprep.subr.mxu0 0.0
        %2523 = vmatpush1.msra.mxu0 0.0
        %2524 = vmatprep.subr.mxu0 0.0
        %2525 = vmatpush1.msra.mxu0 0.0
        %2526 = vmatprep.subr.mxu0 0.0
        %2527 = vmatpush1.msra.mxu0 0.0
        %2528 = vmatprep.subr.mxu0 0.0
        %2529 = vmatpush1.msra.mxu0 0.0
        %2530 = vmatprep.subr.mxu0 0.0
        %2531 = vmatpush1.msra.mxu0 0.0
        %2532 = vmatprep.subr.mxu0 0.0
        %2533 = vmatpush1.msra.mxu0 0.0
        %2534 = vmatprep.subr.mxu0 0.0
        %2535 = vmatpush1.msra.mxu0 0.0
        %2536 = vmatprep.subr.mxu0 0.0
        %2537 = vmatpush1.msra.mxu0 0.0
        %2538 = vmatprep.subr.mxu0 0.0
        %2539 = vmatpush1.msra.mxu0 0.0
        %2540 = vmatprep.subr.mxu0 0.0
        %2541 = vmatpush1.msra.mxu0 0.0
        %2542 = vmatprep.subr.mxu0 0.0
        %2543 = vmatpush1.msra.mxu0 0.0
        %2544 = vmatprep.subr.mxu0 0.0
        %2545 = vmatpush1.msra.mxu0 0.0
        %2546 = vmatprep.subr.mxu0 0.0
        %2547 = vmatpush1.msra.mxu0 0.0
        %2548 = vmatprep.subr.mxu0 0.0
        %2549 = vmatpush1.msra.mxu0 %v2513
        %2550 = vmatprep.subr.mxu0 0.0
        %2551 = vmatpush2.msra.mxu0 0.0
        %2552 = vmatprep.subr.mxu0 0.0
        %2553 = vmatpush2.msra.mxu0 0.0
        %2554 = vmatprep.subr.mxu0 0.0
        %2555 = vmatpush2.msra.mxu0 0.0
        %2556 = vmatprep.subr.mxu0 0.0
        %2557 = vmatpush2.msra.mxu0 0.0
        %2558 = vmatprep.subr.mxu0 0.0
        %2559 = vmatpush2.msra.mxu0 0.0
        %2560 = vmatprep.subr.mxu0 0.0
        %2561 = vmatpush2.msra.mxu0 0.0
        %2562 = vmatprep.subr.mxu0 0.0
        %2563 = vmatpush2.msra.mxu0 0.0
        %2564 = vmatprep.subr.mxu0 0.0
        %2565 = vmatpush2.msra.mxu0 0.0
        %2566 = vmatprep.subr.mxu0 0.0
        %2567 = vmatpush2.msra.mxu0 0.0
        %2568 = vmatprep.subr.mxu0 0.0
        %2569 = vmatpush2.msra.mxu0 0.0
        %2570 = vmatprep.subr.mxu0 0.0
        %2571 = vmatpush2.msra.mxu0 0.0
        %2572 = vmatprep.subr.mxu0 0.0
        %2573 = vmatpush2.msra.mxu0 0.0
        %2574 = vmatprep.subr.mxu0 0.0
        %2575 = vmatpush2.msra.mxu0 0.0
        %2576 = vmatprep.subr.mxu0 0.0
        %2577 = vmatpush2.msra.mxu0 0.0
        %2578 = vmatprep.subr.mxu0 0.0
        %2579 = vmatpush2.msra.mxu0 0.0
        %2580 = vmatprep.subr.mxu0 0.0
        %2581 = vmatpush2.msra.mxu0 0.0
        %2582 = vmatprep.mubr.f32.mxu0 0.0
        %2583 = vmatmul.mubr.f32.gmra.mxu0 %v2516
        %v2584 = vpop.f32.mrf.mxu0
        %v2585 = vadd.f32 0.0, %v2584
        %v2586 = vpop.f32.mrf.mxu0
        %2587 = vdwg.mxu0
        %2588 = vrot.lane.b32.xlu0 %v2009, 112
        %v2589 = vpop.permute.xlu0 %2588
        %v2592 = vsel %vm650, %v2509, 0
        %2594 = vmatprep.subr.mxu0 0.0
        %2595 = vmatpush1.msra.mxu0 0.0
        %2596 = vmatprep.subr.mxu0 0.0
        %2597 = vmatpush1.msra.mxu0 0.0
        %2598 = vmatprep.subr.mxu0 0.0
        %2599 = vmatpush1.msra.mxu0 0.0
        %2600 = vmatprep.subr.mxu0 0.0
        %2601 = vmatpush1.msra.mxu0 0.0
        %2602 = vmatprep.subr.mxu0 0.0
        %2603 = vmatpush1.msra.mxu0 0.0
        %2604 = vmatprep.subr.mxu0 0.0
        %2605 = vmatpush1.msra.mxu0 0.0
        %2606 = vmatprep.subr.mxu0 0.0
        %2607 = vmatpush1.msra.mxu0 0.0
        %2608 = vmatprep.subr.mxu0 0.0
        %2609 = vmatpush1.msra.mxu0 0.0
        %2610 = vmatprep.subr.mxu0 0.0
        %2611 = vmatpush1.msra.mxu0 0.0
        %2612 = vmatprep.subr.mxu0 0.0
        %2613 = vmatpush1.msra.mxu0 0.0
        %2614 = vmatprep.subr.mxu0 0.0
        %2615 = vmatpush1.msra.mxu0 0.0
        %2616 = vmatprep.subr.mxu0 0.0
        %2617 = vmatpush1.msra.mxu0 0.0
        %2618 = vmatprep.subr.mxu0 0.0
        %2619 = vmatpush1.msra.mxu0 0.0
        %2620 = vmatprep.subr.mxu0 0.0
        %2621 = vmatpush1.msra.mxu0 0.0
        %2622 = vmatprep.subr.mxu0 0.0
        %2623 = vmatpush1.msra.mxu0 0.0
        %2624 = vmatprep.subr.mxu0 0.0
        %2625 = vmatpush1.msra.mxu0 %v2589
        %2626 = vmatprep.subr.mxu0 0.0
        %2627 = vmatpush2.msra.mxu0 0.0
        %2628 = vmatprep.subr.mxu0 0.0
        %2629 = vmatpush2.msra.mxu0 0.0
        %2630 = vmatprep.subr.mxu0 0.0
        %2631 = vmatpush2.msra.mxu0 0.0
        %2632 = vmatprep.subr.mxu0 0.0
        %2633 = vmatpush2.msra.mxu0 0.0
        %2634 = vmatprep.subr.mxu0 0.0
        %2635 = vmatpush2.msra.mxu0 0.0
        %2636 = vmatprep.subr.mxu0 0.0
        %2637 = vmatpush2.msra.mxu0 0.0
        %2638 = vmatprep.subr.mxu0 0.0
        %2639 = vmatpush2.msra.mxu0 0.0
        %2640 = vmatprep.subr.mxu0 0.0
        %2641 = vmatpush2.msra.mxu0 0.0
        %2642 = vmatprep.subr.mxu0 0.0
        %2643 = vmatpush2.msra.mxu0 0.0
        %2644 = vmatprep.subr.mxu0 0.0
        %2645 = vmatpush2.msra.mxu0 0.0
        %2646 = vmatprep.subr.mxu0 0.0
        %2647 = vmatpush2.msra.mxu0 0.0
        %2648 = vmatprep.subr.mxu0 0.0
        %2649 = vmatpush2.msra.mxu0 0.0
        %2650 = vmatprep.subr.mxu0 0.0
        %2651 = vmatpush2.msra.mxu0 0.0
        %2652 = vmatprep.subr.mxu0 0.0
        %2653 = vmatpush2.msra.mxu0 0.0
        %2654 = vmatprep.subr.mxu0 0.0
        %2655 = vmatpush2.msra.mxu0 0.0
        %2656 = vmatprep.subr.mxu0 0.0
        %2657 = vmatpush2.msra.mxu0 0.0
        %2658 = vmatprep.mubr.f32.mxu0 0.0
        %2659 = vmatmul.mubr.f32.gmra.mxu0 %v2592
        %v2660 = vpop.f32.mrf.mxu0
        %v2661 = vadd.f32 0.0, %v2660
        %v2662 = vpop.f32.mrf.mxu0
        %2663 = vdwg.mxu0
        %2664 = vrot.lane.b32.xlu0 %v2079, 112
        %v2665 = vpop.permute.xlu0 %2664
        %v2668 = vsel %vm650, %v2510, 0
        %2670 = vmatprep.subr.mxu0 0.0
        %2671 = vmatpush1.msra.mxu0 0.0
        %2672 = vmatprep.subr.mxu0 0.0
        %2673 = vmatpush1.msra.mxu0 0.0
        %2674 = vmatprep.subr.mxu0 0.0
        %2675 = vmatpush1.msra.mxu0 0.0
        %2676 = vmatprep.subr.mxu0 0.0
        %2677 = vmatpush1.msra.mxu0 0.0
        %2678 = vmatprep.subr.mxu0 0.0
        %2679 = vmatpush1.msra.mxu0 0.0
        %2680 = vmatprep.subr.mxu0 0.0
        %2681 = vmatpush1.msra.mxu0 0.0
        %2682 = vmatprep.subr.mxu0 0.0
        %2683 = vmatpush1.msra.mxu0 0.0
        %2684 = vmatprep.subr.mxu0 0.0
        %2685 = vmatpush1.msra.mxu0 0.0
        %2686 = vmatprep.subr.mxu0 0.0
        %2687 = vmatpush1.msra.mxu0 0.0
        %2688 = vmatprep.subr.mxu0 0.0
        %2689 = vmatpush1.msra.mxu0 0.0
        %2690 = vmatprep.subr.mxu0 0.0
        %2691 = vmatpush1.msra.mxu0 0.0
        %2692 = vmatprep.subr.mxu0 0.0
        %2693 = vmatpush1.msra.mxu0 0.0
        %2694 = vmatprep.subr.mxu0 0.0
        %2695 = vmatpush1.msra.mxu0 0.0
        %2696 = vmatprep.subr.mxu0 0.0
        %2697 = vmatpush1.msra.mxu0 0.0
        %2698 = vmatprep.subr.mxu0 0.0
        %2699 = vmatpush1.msra.mxu0 0.0
        %2700 = vmatprep.subr.mxu0 0.0
        %2701 = vmatpush1.msra.mxu0 %v2665
        %2702 = vmatprep.subr.mxu0 0.0
        %2703 = vmatpush2.msra.mxu0 0.0
        %2704 = vmatprep.subr.mxu0 0.0
        %2705 = vmatpush2.msra.mxu0 0.0
        %2706 = vmatprep.subr.mxu0 0.0
        %2707 = vmatpush2.msra.mxu0 0.0
        %2708 = vmatprep.subr.mxu0 0.0
        %2709 = vmatpush2.msra.mxu0 0.0
        %2710 = vmatprep.subr.mxu0 0.0
        %2711 = vmatpush2.msra.mxu0 0.0
        %2712 = vmatprep.subr.mxu0 0.0
        %2713 = vmatpush2.msra.mxu0 0.0
        %2714 = vmatprep.subr.mxu0 0.0
        %2715 = vmatpush2.msra.mxu0 0.0
        %2716 = vmatprep.subr.mxu0 0.0
        %2717 = vmatpush2.msra.mxu0 0.0
        %2718 = vmatprep.subr.mxu0 0.0
        %2719 = vmatpush2.msra.mxu0 0.0
        %2720 = vmatprep.subr.mxu0 0.0
        %2721 = vmatpush2.msra.mxu0 0.0
        %2722 = vmatprep.subr.mxu0 0.0
        %2723 = vmatpush2.msra.mxu0 0.0
        %2724 = vmatprep.subr.mxu0 0.0
        %2725 = vmatpush2.msra.mxu0 0.0
        %2726 = vmatprep.subr.mxu0 0.0
        %2727 = vmatpush2.msra.mxu0 0.0
        %2728 = vmatprep.subr.mxu0 0.0
        %2729 = vmatpush2.msra.mxu0 0.0
        %2730 = vmatprep.subr.mxu0 0.0
        %2731 = vmatpush2.msra.mxu0 0.0
        %2732 = vmatprep.subr.mxu0 0.0
        %2733 = vmatpush2.msra.mxu0 0.0
        %2734 = vmatprep.mubr.f32.mxu0 0.0
        %2735 = vmatmul.mubr.f32.gmra.mxu0 %v2668
        %v2736 = vpop.f32.mrf.mxu0
        %v2737 = vadd.f32 0.0, %v2736
        %v2738 = vpop.f32.mrf.mxu0
        %2739 = vdwg.mxu0
        %2740 = vrot.lane.b32.xlu0 %v2149, 112
        %v2741 = vpop.permute.xlu0 %2740
        %v2744 = vsel %vm650, %v2511, 0
        %2746 = vmatprep.subr.mxu0 0.0
        %2747 = vmatpush1.msra.mxu0 0.0
        %2748 = vmatprep.subr.mxu0 0.0
        %2749 = vmatpush1.msra.mxu0 0.0
        %2750 = vmatprep.subr.mxu0 0.0
        %2751 = vmatpush1.msra.mxu0 0.0
        %2752 = vmatprep.subr.mxu0 0.0
        %2753 = vmatpush1.msra.mxu0 0.0
        %2754 = vmatprep.subr.mxu0 0.0
        %2755 = vmatpush1.msra.mxu0 0.0
        %2756 = vmatprep.subr.mxu0 0.0
        %2757 = vmatpush1.msra.mxu0 0.0
        %2758 = vmatprep.subr.mxu0 0.0
        %2759 = vmatpush1.msra.mxu0 0.0
        %2760 = vmatprep.subr.mxu0 0.0
        %2761 = vmatpush1.msra.mxu0 0.0
        %2762 = vmatprep.subr.mxu0 0.0
        %2763 = vmatpush1.msra.mxu0 0.0
        %2764 = vmatprep.subr.mxu0 0.0
        %2765 = vmatpush1.msra.mxu0 0.0
        %2766 = vmatprep.subr.mxu0 0.0
        %2767 = vmatpush1.msra.mxu0 0.0
        %2768 = vmatprep.subr.mxu0 0.0
        %2769 = vmatpush1.msra.mxu0 0.0
        %2770 = vmatprep.subr.mxu0 0.0
        %2771 = vmatpush1.msra.mxu0 0.0
        %2772 = vmatprep.subr.mxu0 0.0
        %2773 = vmatpush1.msra.mxu0 0.0
        %2774 = vmatprep.subr.mxu0 0.0
        %2775 = vmatpush1.msra.mxu0 0.0
        %2776 = vmatprep.subr.mxu0 0.0
        %2777 = vmatpush1.msra.mxu0 %v2741
        %2778 = vmatprep.subr.mxu0 0.0
        %2779 = vmatpush2.msra.mxu0 0.0
        %2780 = vmatprep.subr.mxu0 0.0
        %2781 = vmatpush2.msra.mxu0 0.0
        %2782 = vmatprep.subr.mxu0 0.0
        %2783 = vmatpush2.msra.mxu0 0.0
        %2784 = vmatprep.subr.mxu0 0.0
        %2785 = vmatpush2.msra.mxu0 0.0
        %2786 = vmatprep.subr.mxu0 0.0
        %2787 = vmatpush2.msra.mxu0 0.0
        %2788 = vmatprep.subr.mxu0 0.0
        %2789 = vmatpush2.msra.mxu0 0.0
        %2790 = vmatprep.subr.mxu0 0.0
        %2791 = vmatpush2.msra.mxu0 0.0
        %2792 = vmatprep.subr.mxu0 0.0
        %2793 = vmatpush2.msra.mxu0 0.0
        %2794 = vmatprep.subr.mxu0 0.0
        %2795 = vmatpush2.msra.mxu0 0.0
        %2796 = vmatprep.subr.mxu0 0.0
        %2797 = vmatpush2.msra.mxu0 0.0
        %2798 = vmatprep.subr.mxu0 0.0
        %2799 = vmatpush2.msra.mxu0 0.0
        %2800 = vmatprep.subr.mxu0 0.0
        %2801 = vmatpush2.msra.mxu0 0.0
        %2802 = vmatprep.subr.mxu0 0.0
        %2803 = vmatpush2.msra.mxu0 0.0
        %2804 = vmatprep.subr.mxu0 0.0
        %2805 = vmatpush2.msra.mxu0 0.0
        %2806 = vmatprep.subr.mxu0 0.0
        %2807 = vmatpush2.msra.mxu0 0.0
        %2808 = vmatprep.subr.mxu0 0.0
        %2809 = vmatpush2.msra.mxu0 0.0
        %2810 = vmatprep.mubr.f32.mxu0 0.0
        %2811 = vmatmul.mubr.f32.gmra.mxu0 %v2744
        %v2812 = vpop.f32.mrf.mxu0
        %v2813 = vadd.f32 0.0, %v2812
        %v2814 = vpop.f32.mrf.mxu0
        %2815 = vdwg.mxu0
        %v2817 = vsel %vm650, %v2585, 0
        %2819 = vmatprep.subr.mxu0 0.0
        %2820 = vmatpush1.msra.mxu0 0.0
        %2821 = vmatprep.subr.mxu0 0.0
        %2822 = vmatpush1.msra.mxu0 0.0
        %2823 = vmatprep.subr.mxu0 0.0
        %2824 = vmatpush1.msra.mxu0 0.0
        %2825 = vmatprep.subr.mxu0 0.0
        %2826 = vmatpush1.msra.mxu0 0.0
        %2827 = vmatprep.subr.mxu0 0.0
        %2828 = vmatpush1.msra.mxu0 0.0
        %2829 = vmatprep.subr.mxu0 0.0
        %2830 = vmatpush1.msra.mxu0 0.0
        %2831 = vmatprep.subr.mxu0 0.0
        %2832 = vmatpush1.msra.mxu0 0.0
        %2833 = vmatprep.subr.mxu0 0.0
        %2834 = vmatpush1.msra.mxu0 0.0
        %2835 = vmatprep.subr.mxu0 0.0
        %2836 = vmatpush1.msra.mxu0 0.0
        %2837 = vmatprep.subr.mxu0 0.0
        %2838 = vmatpush1.msra.mxu0 0.0
        %2839 = vmatprep.subr.mxu0 0.0
        %2840 = vmatpush1.msra.mxu0 0.0
        %2841 = vmatprep.subr.mxu0 0.0
        %2842 = vmatpush1.msra.mxu0 0.0
        %2843 = vmatprep.subr.mxu0 0.0
        %2844 = vmatpush1.msra.mxu0 0.0
        %2845 = vmatprep.subr.mxu0 0.0
        %2846 = vmatpush1.msra.mxu0 0.0
        %2847 = vmatprep.subr.mxu0 0.0
        %2848 = vmatpush1.msra.mxu0 0.0
        %2849 = vmatprep.subr.mxu0 0.0
        %2850 = vmatpush1.msra.mxu0 %v1839
        %2851 = vmatprep.subr.mxu0 0.0
        %2852 = vmatpush2.msra.mxu0 0.0
        %2853 = vmatprep.subr.mxu0 0.0
        %2854 = vmatpush2.msra.mxu0 0.0
        %2855 = vmatprep.subr.mxu0 0.0
        %2856 = vmatpush2.msra.mxu0 0.0
        %2857 = vmatprep.subr.mxu0 0.0
        %2858 = vmatpush2.msra.mxu0 0.0
        %2859 = vmatprep.subr.mxu0 0.0
        %2860 = vmatpush2.msra.mxu0 0.0
        %2861 = vmatprep.subr.mxu0 0.0
        %2862 = vmatpush2.msra.mxu0 0.0
        %2863 = vmatprep.subr.mxu0 0.0
        %2864 = vmatpush2.msra.mxu0 0.0
        %2865 = vmatprep.subr.mxu0 0.0
        %2866 = vmatpush2.msra.mxu0 0.0
        %2867 = vmatprep.subr.mxu0 0.0
        %2868 = vmatpush2.msra.mxu0 0.0
        %2869 = vmatprep.subr.mxu0 0.0
        %2870 = vmatpush2.msra.mxu0 0.0
        %2871 = vmatprep.subr.mxu0 0.0
        %2872 = vmatpush2.msra.mxu0 0.0
        %2873 = vmatprep.subr.mxu0 0.0
        %2874 = vmatpush2.msra.mxu0 0.0
        %2875 = vmatprep.subr.mxu0 0.0
        %2876 = vmatpush2.msra.mxu0 0.0
        %2877 = vmatprep.subr.mxu0 0.0
        %2878 = vmatpush2.msra.mxu0 0.0
        %2879 = vmatprep.subr.mxu0 0.0
        %2880 = vmatpush2.msra.mxu0 0.0
        %2881 = vmatprep.subr.mxu0 0.0
        %2882 = vmatpush2.msra.mxu0 0.0
        %2883 = vmatprep.mubr.f32.mxu0 0.0
        %2884 = vmatmul.mubr.f32.gmra.mxu0 %v2817
        %v2885 = vpop.f32.mrf.mxu0
        %v2886 = vadd.f32 0.0, %v2885
        %v2887 = vpop.f32.mrf.mxu0
        %2888 = vdwg.mxu0
        %v2890 = vsel %vm650, %v2661, 0
        %2892 = vmatprep.subr.mxu0 0.0
        %2893 = vmatpush1.msra.mxu0 0.0
        %2894 = vmatprep.subr.mxu0 0.0
        %2895 = vmatpush1.msra.mxu0 0.0
        %2896 = vmatprep.subr.mxu0 0.0
        %2897 = vmatpush1.msra.mxu0 0.0
        %2898 = vmatprep.subr.mxu0 0.0
        %2899 = vmatpush1.msra.mxu0 0.0
        %2900 = vmatprep.subr.mxu0 0.0
        %2901 = vmatpush1.msra.mxu0 0.0
        %2902 = vmatprep.subr.mxu0 0.0
        %2903 = vmatpush1.msra.mxu0 0.0
        %2904 = vmatprep.subr.mxu0 0.0
        %2905 = vmatpush1.msra.mxu0 0.0
        %2906 = vmatprep.subr.mxu0 0.0
        %2907 = vmatpush1.msra.mxu0 0.0
        %2908 = vmatprep.subr.mxu0 0.0
        %2909 = vmatpush1.msra.mxu0 0.0
        %2910 = vmatprep.subr.mxu0 0.0
        %2911 = vmatpush1.msra.mxu0 0.0
        %2912 = vmatprep.subr.mxu0 0.0
        %2913 = vmatpush1.msra.mxu0 0.0
        %2914 = vmatprep.subr.mxu0 0.0
        %2915 = vmatpush1.msra.mxu0 0.0
        %2916 = vmatprep.subr.mxu0 0.0
        %2917 = vmatpush1.msra.mxu0 0.0
        %2918 = vmatprep.subr.mxu0 0.0
        %2919 = vmatpush1.msra.mxu0 0.0
        %2920 = vmatprep.subr.mxu0 0.0
        %2921 = vmatpush1.msra.mxu0 0.0
        %2922 = vmatprep.subr.mxu0 0.0
        %2923 = vmatpush1.msra.mxu0 %v1840
        %2924 = vmatprep.subr.mxu0 0.0
        %2925 = vmatpush2.msra.mxu0 0.0
        %2926 = vmatprep.subr.mxu0 0.0
        %2927 = vmatpush2.msra.mxu0 0.0
        %2928 = vmatprep.subr.mxu0 0.0
        %2929 = vmatpush2.msra.mxu0 0.0
        %2930 = vmatprep.subr.mxu0 0.0
        %2931 = vmatpush2.msra.mxu0 0.0
        %2932 = vmatprep.subr.mxu0 0.0
        %2933 = vmatpush2.msra.mxu0 0.0
        %2934 = vmatprep.subr.mxu0 0.0
        %2935 = vmatpush2.msra.mxu0 0.0
        %2936 = vmatprep.subr.mxu0 0.0
        %2937 = vmatpush2.msra.mxu0 0.0
        %2938 = vmatprep.subr.mxu0 0.0
        %2939 = vmatpush2.msra.mxu0 0.0
        %2940 = vmatprep.subr.mxu0 0.0
        %2941 = vmatpush2.msra.mxu0 0.0
        %2942 = vmatprep.subr.mxu0 0.0
        %2943 = vmatpush2.msra.mxu0 0.0
        %2944 = vmatprep.subr.mxu0 0.0
        %2945 = vmatpush2.msra.mxu0 0.0
        %2946 = vmatprep.subr.mxu0 0.0
        %2947 = vmatpush2.msra.mxu0 0.0
        %2948 = vmatprep.subr.mxu0 0.0
        %2949 = vmatpush2.msra.mxu0 0.0
        %2950 = vmatprep.subr.mxu0 0.0
        %2951 = vmatpush2.msra.mxu0 0.0
        %2952 = vmatprep.subr.mxu0 0.0
        %2953 = vmatpush2.msra.mxu0 0.0
        %2954 = vmatprep.subr.mxu0 0.0
        %2955 = vmatpush2.msra.mxu0 0.0
        %2956 = vmatprep.mubr.f32.mxu0 0.0
        %2957 = vmatmul.mubr.f32.gmra.mxu0 %v2890
        %v2958 = vpop.f32.mrf.mxu0
        %v2959 = vadd.f32 0.0, %v2958
        %v2960 = vpop.f32.mrf.mxu0
        %2961 = vdwg.mxu0
        %v2963 = vsel %vm650, %v2737, 0
        %2965 = vmatprep.subr.mxu0 0.0
        %2966 = vmatpush1.msra.mxu0 0.0
        %2967 = vmatprep.subr.mxu0 0.0
        %2968 = vmatpush1.msra.mxu0 0.0
        %2969 = vmatprep.subr.mxu0 0.0
        %2970 = vmatpush1.msra.mxu0 0.0
        %2971 = vmatprep.subr.mxu0 0.0
        %2972 = vmatpush1.msra.mxu0 0.0
        %2973 = vmatprep.subr.mxu0 0.0
        %2974 = vmatpush1.msra.mxu0 0.0
        %2975 = vmatprep.subr.mxu0 0.0
        %2976 = vmatpush1.msra.mxu0 0.0
        %2977 = vmatprep.subr.mxu0 0.0
        %2978 = vmatpush1.msra.mxu0 0.0
        %2979 = vmatprep.subr.mxu0 0.0
        %2980 = vmatpush1.msra.mxu0 0.0
        %2981 = vmatprep.subr.mxu0 0.0
        %2982 = vmatpush1.msra.mxu0 0.0
        %2983 = vmatprep.subr.mxu0 0.0
        %2984 = vmatpush1.msra.mxu0 0.0
        %2985 = vmatprep.subr.mxu0 0.0
        %2986 = vmatpush1.msra.mxu0 0.0
        %2987 = vmatprep.subr.mxu0 0.0
        %2988 = vmatpush1.msra.mxu0 0.0
        %2989 = vmatprep.subr.mxu0 0.0
        %2990 = vmatpush1.msra.mxu0 0.0
        %2991 = vmatprep.subr.mxu0 0.0
        %2992 = vmatpush1.msra.mxu0 0.0
        %2993 = vmatprep.subr.mxu0 0.0
        %2994 = vmatpush1.msra.mxu0 0.0
        %2995 = vmatprep.subr.mxu0 0.0
        %2996 = vmatpush1.msra.mxu0 %v1841
        %2997 = vmatprep.subr.mxu0 0.0
        %2998 = vmatpush2.msra.mxu0 0.0
        %2999 = vmatprep.subr.mxu0 0.0
        %3000 = vmatpush2.msra.mxu0 0.0
        %3001 = vmatprep.subr.mxu0 0.0
        %3002 = vmatpush2.msra.mxu0 0.0
        %3003 = vmatprep.subr.mxu0 0.0
        %3004 = vmatpush2.msra.mxu0 0.0
        %3005 = vmatprep.subr.mxu0 0.0
        %3006 = vmatpush2.msra.mxu0 0.0
        %3007 = vmatprep.subr.mxu0 0.0
        %3008 = vmatpush2.msra.mxu0 0.0
        %3009 = vmatprep.subr.mxu0 0.0
        %3010 = vmatpush2.msra.mxu0 0.0
        %3011 = vmatprep.subr.mxu0 0.0
        %3012 = vmatpush2.msra.mxu0 0.0
        %3013 = vmatprep.subr.mxu0 0.0
        %3014 = vmatpush2.msra.mxu0 0.0
        %3015 = vmatprep.subr.mxu0 0.0
        %3016 = vmatpush2.msra.mxu0 0.0
        %3017 = vmatprep.subr.mxu0 0.0
        %3018 = vmatpush2.msra.mxu0 0.0
        %3019 = vmatprep.subr.mxu0 0.0
        %3020 = vmatpush2.msra.mxu0 0.0
        %3021 = vmatprep.subr.mxu0 0.0
        %3022 = vmatpush2.msra.mxu0 0.0
        %3023 = vmatprep.subr.mxu0 0.0
        %3024 = vmatpush2.msra.mxu0 0.0
        %3025 = vmatprep.subr.mxu0 0.0
        %3026 = vmatpush2.msra.mxu0 0.0
        %3027 = vmatprep.subr.mxu0 0.0
        %3028 = vmatpush2.msra.mxu0 0.0
        %3029 = vmatprep.mubr.f32.mxu0 0.0
        %3030 = vmatmul.mubr.f32.gmra.mxu0 %v2963
        %v3031 = vpop.f32.mrf.mxu0
        %v3032 = vadd.f32 0.0, %v3031
        %v3033 = vpop.f32.mrf.mxu0
        %3034 = vdwg.mxu0
        %v3036 = vsel %vm650, %v2813, 0
        %3038 = vmatprep.subr.mxu0 0.0
        %3039 = vmatpush1.msra.mxu0 0.0
        %3040 = vmatprep.subr.mxu0 0.0
        %3041 = vmatpush1.msra.mxu0 0.0
        %3042 = vmatprep.subr.mxu0 0.0
        %3043 = vmatpush1.msra.mxu0 0.0
        %3044 = vmatprep.subr.mxu0 0.0
        %3045 = vmatpush1.msra.mxu0 0.0
        %3046 = vmatprep.subr.mxu0 0.0
        %3047 = vmatpush1.msra.mxu0 0.0
        %3048 = vmatprep.subr.mxu0 0.0
        %3049 = vmatpush1.msra.mxu0 0.0
        %3050 = vmatprep.subr.mxu0 0.0
        %3051 = vmatpush1.msra.mxu0 0.0
        %3052 = vmatprep.subr.mxu0 0.0
        %3053 = vmatpush1.msra.mxu0 0.0
        %3054 = vmatprep.subr.mxu0 0.0
        %3055 = vmatpush1.msra.mxu0 0.0
        %3056 = vmatprep.subr.mxu0 0.0
        %3057 = vmatpush1.msra.mxu0 0.0
        %3058 = vmatprep.subr.mxu0 0.0
        %3059 = vmatpush1.msra.mxu0 0.0
        %3060 = vmatprep.subr.mxu0 0.0
        %3061 = vmatpush1.msra.mxu0 0.0
        %3062 = vmatprep.subr.mxu0 0.0
        %3063 = vmatpush1.msra.mxu0 0.0
        %3064 = vmatprep.subr.mxu0 0.0
        %3065 = vmatpush1.msra.mxu0 0.0
        %3066 = vmatprep.subr.mxu0 0.0
        %3067 = vmatpush1.msra.mxu0 0.0
        %3068 = vmatprep.subr.mxu0 0.0
        %3069 = vmatpush1.msra.mxu0 %v1842
        %3070 = vmatprep.subr.mxu0 0.0
        %3071 = vmatpush2.msra.mxu0 0.0
        %3072 = vmatprep.subr.mxu0 0.0
        %3073 = vmatpush2.msra.mxu0 0.0
        %3074 = vmatprep.subr.mxu0 0.0
        %3075 = vmatpush2.msra.mxu0 0.0
        %3076 = vmatprep.subr.mxu0 0.0
        %3077 = vmatpush2.msra.mxu0 0.0
        %3078 = vmatprep.subr.mxu0 0.0
        %3079 = vmatpush2.msra.mxu0 0.0
        %3080 = vmatprep.subr.mxu0 0.0
        %3081 = vmatpush2.msra.mxu0 0.0
        %3082 = vmatprep.subr.mxu0 0.0
        %3083 = vmatpush2.msra.mxu0 0.0
        %3084 = vmatprep.subr.mxu0 0.0
        %3085 = vmatpush2.msra.mxu0 0.0
        %3086 = vmatprep.subr.mxu0 0.0
        %3087 = vmatpush2.msra.mxu0 0.0
        %3088 = vmatprep.subr.mxu0 0.0
        %3089 = vmatpush2.msra.mxu0 0.0
        %3090 = vmatprep.subr.mxu0 0.0
        %3091 = vmatpush2.msra.mxu0 0.0
        %3092 = vmatprep.subr.mxu0 0.0
        %3093 = vmatpush2.msra.mxu0 0.0
        %3094 = vmatprep.subr.mxu0 0.0
        %3095 = vmatpush2.msra.mxu0 0.0
        %3096 = vmatprep.subr.mxu0 0.0
        %3097 = vmatpush2.msra.mxu0 0.0
        %3098 = vmatprep.subr.mxu0 0.0
        %3099 = vmatpush2.msra.mxu0 0.0
        %3100 = vmatprep.subr.mxu0 0.0
        %3101 = vmatpush2.msra.mxu0 0.0
        %3102 = vmatprep.mubr.f32.mxu0 0.0
        %3103 = vmatmul.mubr.f32.gmra.mxu0 %v3036
        %v3104 = vpop.f32.mrf.mxu0
        %v3105 = vadd.f32 0.0, %v3104
        %v3106 = vpop.f32.mrf.mxu0
        %3107 = vdwg.mxu0
        %v3108 = vsel %vm363, %v2886, 0.0
        %v3109 = vsel %vm363, %v2959, 0.0
        %v3110 = vadd.f32 %v3108, %v3109
        %v3111 = vsel %vm363, %v3032, 0.0
        %v3112 = vadd.f32 %v3110, %v3111
        %v3113 = vsel %vm363, %v3105, 0.0
        %v3114 = vadd.f32 %v3112, %v3113
        %v3115 = vlaneseq
        %v3116 = vshrl.u32 %v3115, 7
        %v3117 = vsub.s32 0, %v3116
        %v3118 = vrot.slane %v1868, %v3117
        %v3119 = vadd.f32 %v3114, %v3118
        %v3120 = vadd.f32 %v3119, %v1820
        %v3121 = vsel %vm363, %v3120, 0.0
        %3122 = vadd.xlane.f32.xlu0 %v3121
        %v3123 = vpop.xlane.xlu0 %3122
        %v3124 = vmul.f32 %v3123, %v1622
        %v3125 = vsub.f32 %v3120, %v3124
        %v3126 = vmul.f32 %v3125, %v3125
        %v3127 = vsel %vm363, %v3126, 0.0
        %3128 = vadd.xlane.f32.xlu0 %v3127
        %v3129 = vpop.xlane.xlu0 %3128
        %v3130 = vmul.f32 %v3129, %v1622
        %v3131 = vadd.f32 %v3130, 1e-05
        %v3132 = vrsqrt.pop %v3131
        %v3133 = vmul.f32 %v3125, %v3132
        %v3134 = vlaneseq
        %v3135 = vshrl.u32 %v3134, 7
        %v3136 = vsub.s32 1, %v3135
        %v3137 = vrot.slane %v1868, %v3136
        %v3138 = vmul.f32 %v3133, %v3137
        %v3139 = vlaneseq
        %v3140 = vshrl.u32 %v3139, 7
        %v3141 = vsub.s32 2, %v3140
        %v3142 = vrot.slane %v1868, %v3141
        %v3143 = vadd.f32 %v3138, %v3142
        %v3145 = vlaneseq
        %v3146 = vshrl.u32 %v3145, 7
        %v3147 = vsub.s32 0, %v3146
        %v3148 = vrot.slane %v1866, %v3147
        %v3151 = vsel %vm363, %v3143, 0
        %3153 = vmatprep.subr.mxu0 0.0
        %3154 = vmatpush1.msra.mxu0 0.0
        %3155 = vmatprep.subr.mxu0 0.0
        %3156 = vmatpush1.msra.mxu0 0.0
        %3157 = vmatprep.subr.mxu0 0.0
        %3158 = vmatpush1.msra.mxu0 0.0
        %3159 = vmatprep.subr.mxu0 0.0
        %3160 = vmatpush1.msra.mxu0 0.0
        %3161 = vmatprep.subr.mxu0 0.0
        %3162 = vmatpush1.msra.mxu0 0.0
        %3163 = vmatprep.subr.mxu0 0.0
        %3164 = vmatpush1.msra.mxu0 0.0
        %3165 = vmatprep.subr.mxu0 0.0
        %3166 = vmatpush1.msra.mxu0 0.0
        %3167 = vmatprep.subr.mxu0 0.0
        %3168 = vmatpush1.msra.mxu0 0.0
        %3169 = vmatprep.subr.mxu0 0.0
        %3170 = vmatpush1.msra.mxu0 0.0
        %3171 = vmatprep.subr.mxu0 0.0
        %3172 = vmatpush1.msra.mxu0 0.0
        %3173 = vmatprep.subr.mxu0 0.0
        %3174 = vmatpush1.msra.mxu0 0.0
        %3175 = vmatprep.subr.mxu0 0.0
        %3176 = vmatpush1.msra.mxu0 0.0
        %3177 = vmatprep.subr.mxu0 0.0
        %3178 = vmatpush1.msra.mxu0 %v1847
        %3179 = vmatprep.subr.mxu0 0.0
        %3180 = vmatpush1.msra.mxu0 %v1846
        %3181 = vmatprep.subr.mxu0 0.0
        %3182 = vmatpush1.msra.mxu0 %v1845
        %3183 = vmatprep.subr.mxu0 0.0
        %3184 = vmatpush1.msra.mxu0 %v1844
        %3185 = vmatprep.subr.mxu0 0.0
        %3186 = vmatpush2.msra.mxu0 0.0
        %3187 = vmatprep.subr.mxu0 0.0
        %3188 = vmatpush2.msra.mxu0 0.0
        %3189 = vmatprep.subr.mxu0 0.0
        %3190 = vmatpush2.msra.mxu0 0.0
        %3191 = vmatprep.subr.mxu0 0.0
        %3192 = vmatpush2.msra.mxu0 0.0
        %3193 = vmatprep.subr.mxu0 0.0
        %3194 = vmatpush2.msra.mxu0 0.0
        %3195 = vmatprep.subr.mxu0 0.0
        %3196 = vmatpush2.msra.mxu0 0.0
        %3197 = vmatprep.subr.mxu0 0.0
        %3198 = vmatpush2.msra.mxu0 0.0
        %3199 = vmatprep.subr.mxu0 0.0
        %3200 = vmatpush2.msra.mxu0 0.0
        %3201 = vmatprep.subr.mxu0 0.0
        %3202 = vmatpush2.msra.mxu0 0.0
        %3203 = vmatprep.subr.mxu0 0.0
        %3204 = vmatpush2.msra.mxu0 0.0
        %3205 = vmatprep.subr.mxu0 0.0
        %3206 = vmatpush2.msra.mxu0 0.0
        %3207 = vmatprep.subr.mxu0 0.0
        %3208 = vmatpush2.msra.mxu0 0.0
        %3209 = vmatprep.subr.mxu0 0.0
        %3210 = vmatpush2.msra.mxu0 0.0
        %3211 = vmatprep.subr.mxu0 0.0
        %3212 = vmatpush2.msra.mxu0 0.0
        %3213 = vmatprep.subr.mxu0 0.0
        %3214 = vmatpush2.msra.mxu0 0.0
        %3215 = vmatprep.subr.mxu0 0.0
        %3216 = vmatpush2.msra.mxu0 0.0
        %3217 = vmatprep.mubr.f32.mxu0 0.0
        %3218 = vmatmul.mubr.f32.gmra.mxu0 %v3151
        %v3219 = vpop.f32.mrf.mxu0
        %v3220 = vadd.f32 %v3148, %v3219
        %v3221 = vpop.f32.mrf.mxu0
        %3222 = vdwg.mxu0
        %v3223 = vmax.f32 %v3220, 0.0
        %v3224 = vlaneseq
        %v3225 = vshrl.u32 %v3224, 7
        %v3226 = vsub.s32 3, %v3225
        %v3227 = vrot.slane %v1868, %v3226
        %3228 = vmatprep.subr.mxu0 0.0
        %3229 = vmatpush1.msra.mxu0 %v1864
        %3230 = vmatprep.subr.mxu0 0.0
        %3231 = vmatpush1.msra.mxu0 %v1863
        %3232 = vmatprep.subr.mxu0 0.0
        %3233 = vmatpush1.msra.mxu0 %v1862
        %3234 = vmatprep.subr.mxu0 0.0
        %3235 = vmatpush1.msra.mxu0 %v1861
        %3236 = vmatprep.subr.mxu0 0.0
        %3237 = vmatpush1.msra.mxu0 %v1860
        %3238 = vmatprep.subr.mxu0 0.0
        %3239 = vmatpush1.msra.mxu0 %v1859
        %3240 = vmatprep.subr.mxu0 0.0
        %3241 = vmatpush1.msra.mxu0 %v1858
        %3242 = vmatprep.subr.mxu0 0.0
        %3243 = vmatpush1.msra.mxu0 %v1857
        %3244 = vmatprep.subr.mxu0 0.0
        %3245 = vmatpush1.msra.mxu0 %v1856
        %3246 = vmatprep.subr.mxu0 0.0
        %3247 = vmatpush1.msra.mxu0 %v1855
        %3248 = vmatprep.subr.mxu0 0.0
        %3249 = vmatpush1.msra.mxu0 %v1854
        %3250 = vmatprep.subr.mxu0 0.0
        %3251 = vmatpush1.msra.mxu0 %v1853
        %3252 = vmatprep.subr.mxu0 0.0
        %3253 = vmatpush1.msra.mxu0 %v1852
        %3254 = vmatprep.subr.mxu0 0.0
        %3255 = vmatpush1.msra.mxu0 %v1851
        %3256 = vmatprep.subr.mxu0 0.0
        %3257 = vmatpush1.msra.mxu0 %v1850
        %3258 = vmatprep.subr.mxu0 0.0
        %3259 = vmatpush1.msra.mxu0 %v1849
        %3260 = vmatprep.subr.mxu0 0.0
        %3261 = vmatpush2.msra.mxu0 0.0
        %3262 = vmatprep.subr.mxu0 0.0
        %3263 = vmatpush2.msra.mxu0 0.0
        %3264 = vmatprep.subr.mxu0 0.0
        %3265 = vmatpush2.msra.mxu0 0.0
        %3266 = vmatprep.subr.mxu0 0.0
        %3267 = vmatpush2.msra.mxu0 0.0
        %3268 = vmatprep.subr.mxu0 0.0
        %3269 = vmatpush2.msra.mxu0 0.0
        %3270 = vmatprep.subr.mxu0 0.0
        %3271 = vmatpush2.msra.mxu0 0.0
        %3272 = vmatprep.subr.mxu0 0.0
        %3273 = vmatpush2.msra.mxu0 0.0
        %3274 = vmatprep.subr.mxu0 0.0
        %3275 = vmatpush2.msra.mxu0 0.0
        %3276 = vmatprep.subr.mxu0 0.0
        %3277 = vmatpush2.msra.mxu0 0.0
        %3278 = vmatprep.subr.mxu0 0.0
        %3279 = vmatpush2.msra.mxu0 0.0
        %3280 = vmatprep.subr.mxu0 0.0
        %3281 = vmatpush2.msra.mxu0 0.0
        %3282 = vmatprep.subr.mxu0 0.0
        %3283 = vmatpush2.msra.mxu0 0.0
        %3284 = vmatprep.subr.mxu0 0.0
        %3285 = vmatpush2.msra.mxu0 0.0
        %3286 = vmatprep.subr.mxu0 0.0
        %3287 = vmatpush2.msra.mxu0 0.0
        %3288 = vmatprep.subr.mxu0 0.0
        %3289 = vmatpush2.msra.mxu0 0.0
        %3290 = vmatprep.subr.mxu0 0.0
        %3291 = vmatpush2.msra.mxu0 0.0
        %3292 = vmatprep.mubr.f32.mxu0 0.0
        %3293 = vmatmul.mubr.f32.gmra.mxu0 %v3223
        %v3294 = vpop.f32.mrf.mxu0
        %v3295 = vadd.f32 %v3227, %v3294
        %v3296 = vpop.f32.mrf.mxu0
        %3297 = vdwg.mxu0
        %v3298 = vadd.f32 %v3295, %v3143
        %v3299 = vsel %vm363, %v3298, 0.0
        %3300 = vadd.xlane.f32.xlu0 %v3299
        %v3301 = vpop.xlane.xlu0 %3300
        %v3302 = vmul.f32 %v3301, %v1622
        %v3303 = vsub.f32 %v3298, %v3302
        %v3304 = vmul.f32 %v3303, %v3303
        %v3305 = vsel %vm363, %v3304, 0.0
        %3306 = vadd.xlane.f32.xlu0 %v3305
        %v3307 = vpop.xlane.xlu0 %3306
        %v3308 = vmul.f32 %v3307, %v1622
        %v3309 = vadd.f32 %v3308, 1e-05
        %v3310 = vrsqrt.pop %v3309
        %v3311 = vmul.f32 %v3303, %v3310
        %v3312 = vlaneseq
        %v3313 = vshrl.u32 %v3312, 7
        %v3314 = vsub.s32 4, %v3313
        %v3315 = vrot.slane %v1868, %v3314
        %v3316 = vmul.f32 %v3311, %v3315
        %v3317 = vlaneseq
        %v3318 = vshrl.u32 %v3317, 7
        %v3319 = vsub.s32 5, %v3318
        %v3320 = vrot.slane %v1868, %v3319
        %v3321 = vadd.f32 %v3316, %v3320
        %3322 = vst.msk [vmem:[%s309] sm:$0xff] %vm363, %v3321
        %s3323 = sand.u32 %s208, 1
        %s3324 = scalar_lea.sflag [#allocation3], %s3323
        %s3325 = sand.u32 %s208, 1
        %s3326 = smul.addr %s3325, 8
        %s3327 = scalar_lea.vmem [#allocation2], %s3326
        // Predicated region
        $region53: #{tpu_custom_call.1} parent=51 // pred_check
          %p3328 = pneg %p218
        $region54: #{tpu_custom_call.1} parent=51 // pred_check_branch
          %3330 = sbr.rel (%p3328) target = $region56
        $region55: #{tpu_custom_call.1} parent=51 // pred_region
          %s3332 = ssub.s32 128, 128
          %3333 = vsyncadd %s3324, %s3332
          %s3334 = smul.addr %s22, 128
          %s3335 = scalar_lea.hbm %s8, %s3334
          %s3337 = sshll.u32 %s3327, 4
          %s3338 = int_to_ptr.vmem [resolvable:$true] %s3337
          %3340 = dma.vmem_to_hbm [thread:$0]  %s3338, 128, %s3335, %s3324
        $region56: #{tpu_custom_call.1} parent=51 // pred_fallthru
          _
      $region52: #{tpu_custom_call.1} parent=5 // pred_fallthru
        _
      %p3341 = scmp.le.s32.totalorder 2, %s17
      // Predicated region
      $region57: #{tpu_custom_call.1} parent=5 // pred_check
        %p3342 = pneg %p3341
      $region58: #{tpu_custom_call.1} parent=5 // pred_check_branch
        %3344 = sbr.rel (%p3342) target = $region60
      $region59: #{tpu_custom_call.1} parent=5 // pred_region
        %s3345 = ssub.s32 %s17, 2
        // Predicated region
        $region61: #{tpu_custom_call.1} parent=59 // pred_check
          %p3346 = pneg %p224
        $region62: #{tpu_custom_call.1} parent=59 // pred_check_branch
          %3348 = sbr.rel (%p3346) target = $region64
        $region63: #{tpu_custom_call.1} parent=59 // pred_region
          %s3349 = sand.u32 %s209, 1
          %s3350 = scalar_lea.sflag [#allocation3], %s3349
          %s3351 = sand.u32 %s209, 1
          %s3352 = smul.addr %s3351, 8
          %s3353 = scalar_lea.vmem [#allocation2], %s3352
          %3354 = dma.done %s3350, 128
        $region64: #{tpu_custom_call.1} parent=59 // pred_fallthru
          _
      $region60: #{tpu_custom_call.1} parent=5 // pred_fallthru
        _
    $region6: #{tpu_custom_call.1} parent=1 // loop_footer
      %s21 = sadd.s32 1, %s17
    $region7: #{tpu_custom_call.1} parent=1 // loop_footer_branch
      %16 = sbr.rel target = $region3
    $region8: #{tpu_custom_call.1} parent=1 // loop_exit
      _
    %3355 = vsyncpa [#allocation3], 1
    %s3356 = scalar_lea.sflag [#allocation3], 1
    %3357 = vsyncpa %s3356, 1

</llo_original>
